<compile_context>
chip_gen: v6e
topology: v6e:2x2x1
jax: 0.10.0
libtpu: 0.0.40
codegen_flags: <defaults>
</compile_context>

<pallas_src>
import functools

import jax
import jax.numpy as jnp
from jax.experimental import pallas as pl
from jax.experimental.pallas import tpu as pltpu

# ----------------------------- model config (small) -------------------------
IMG = 16          # image size
PATCH = 4         # patch size
IN_CH = 3         # input channels (NCHW)
DIM = 32          # embed dim
DEPTH = 2         # number of transformer blocks
HEADS = 4
HEAD_DIM = DIM // HEADS
MLP = 4 * DIM
NUM_CLASSES = 10
R = 4             # LoRA rank
N_PATCH = (IMG // PATCH) ** 2
N_TOK = N_PATCH + 1          # + cls token
CPP = IN_CH * PATCH * PATCH  # flattened patch size

HEAD_PAD = 128               # lane-dense classifier output width
MXU_BF16 = True              # bf16 MXU operands, f32 accumulation

_BLK_NP = 14                 # refs per transformer block


# ----------------------------- kernel helpers --------------------------------
def _mm(a, b):
    """Weight matmul on the MXU (optional bf16 operands, f32 accumulate)."""
    if MXU_BF16:
        a = a.astype(jnp.bfloat16)
        b = b.astype(jnp.bfloat16)
    return jnp.dot(a, b, preferred_element_type=jnp.float32)


def _layernorm(x, g_ref, b_ref, eps=1e-6):
    x = x.astype(jnp.float32)
    mu = jnp.mean(x, axis=-1, keepdims=True)
    var = jnp.mean((x - mu) ** 2, axis=-1, keepdims=True)
    return (x - mu) * jax.lax.rsqrt(var + eps) * g_ref[...] + b_ref[...]


# ----------------------------- fused kernel ----------------------------------
def _fused_lora_vit_kernel(*refs):
    """One batch element per grid step; everything stays in VMEM."""
    o_ref = refs[-1]
    patches_ref, cls_ref, pos_ref, pw_ref, pb_ref = refs[:5]
    body = refs[5:-1]
    blk_refs = body[: DEPTH * _BLK_NP]
    norm_g_ref, norm_b_ref, head_w_ref, head_b_ref = body[DEPTH * _BLK_NP:]

    scale = HEAD_DIM ** -0.5

    # ---- patch embed (Conv2d k=s=PATCH as matmul) + cls + pos --------------
    tok = _mm(patches_ref[0], pw_ref[...]) + pb_ref[...]          # (N_PATCH, D)
    x = jnp.concatenate([cls_ref[...], tok], axis=0) + pos_ref[...]  # (N_TOK, D)

    # ---- transformer blocks (unrolled over DEPTH) --------------------------
    for d in range(DEPTH):
        (ln1_g, ln1_b, qkv_w, qkv_b, lora_a, lora_b,
         proj_w, proj_b, ln2_g, ln2_b,
         fc1_w, fc1_b, fc2_w, fc2_b) = blk_refs[d * _BLK_NP:(d + 1) * _BLK_NP]

        # -- attention branch --
        h = _layernorm(x, ln1_g, ln1_b)
        # Fused timm qkv + merged LoRA delta: B matrix already maps the rank-R
        # products into qkv layout (q cols [0:D], v cols [2D:3D]).
        qkv = (_mm(h, qkv_w[...]) + qkv_b[...]
               + _mm(_mm(h, lora_a[...]), lora_b[...]))           # (N_TOK, 3D)

        q = qkv[:, :DIM] * scale
        k = qkv[:, DIM:2 * DIM]
        v = qkv[:, 2 * DIM:]

        head_outs = []
        for hh in range(HEADS):                                   # unrolled
            lo = hh * HEAD_DIM
            qh = q[:, lo:lo + HEAD_DIM]
            kh = k[:, lo:lo + HEAD_DIM]
            vh = v[:, lo:lo + HEAD_DIM]
            # scores = q @ k^T (contract last dims, f32)
            s = jax.lax.dot_general(qh, kh, (((1,), (1,)), ((), ())),
                                    preferred_element_type=jnp.float32)
            s = s - jnp.max(s, axis=-1, keepdims=True)
            p = jnp.exp(s)
            p = p * pl.reciprocal(jnp.sum(p, axis=-1, keepdims=True),
                                  approx=True)
            head_outs.append(jnp.dot(p, vh,
                                     preferred_element_type=jnp.float32))
        attn = jnp.concatenate(head_outs, axis=-1)                # (N_TOK, D)

        x = x + _mm(attn, proj_w[...]) + proj_b[...]

        # -- MLP branch --
        h = _layernorm(x, ln2_g, ln2_b)
        # TODO(synk): timm uses exact (erf) GELU; tanh approximation used here.
        h = jax.nn.gelu(_mm(h, fc1_w[...]) + fc1_b[...], approximate=True)
        x = x + _mm(h, fc2_w[...]) + fc2_b[...]

    # ---- final norm + classifier head (global_pool='token') ----------------
    xn = _layernorm(x, norm_g_ref, norm_b_ref)
    cls_out = xn[0:1, :]                                          # (1, D)
    logits = _mm(cls_out, head_w_ref[...]) + head_b_ref[...]      # (1, HEAD_PAD)
    o_ref[0] = logits.astype(o_ref.dtype)


# ----------------------------- parameter init --------------------------------
def init_params(key):
    keys = iter(jax.random.split(key, 128))

    def nrm(shape, std=0.02):
        return std * jax.random.normal(next(keys), shape, jnp.float32)

    params = {
        # Conv2d(IN_CH, DIM, PATCH, stride=PATCH) weight reshaped (DIM, CPP)
        # and transposed to (CPP, DIM) for the matmul kernel.
        "patch_w": nrm((CPP, DIM)),
        "patch_b": jnp.zeros((DIM,), jnp.float32),
        "cls_token": nrm((1, 1, DIM)),
        "pos_embed": nrm((1, N_TOK, DIM)),
        "norm_g": jnp.ones((DIM,), jnp.float32),
        "norm_b": jnp.zeros((DIM,), jnp.float32),
        "head_w": nrm((DIM, NUM_CLASSES)),
        "head_b": jnp.zeros((NUM_CLASSES,), jnp.float32),
        "blocks": [],
    }

    # kaiming_uniform_(a=sqrt(5)) on nn.Linear(DIM, r).weight -> bound = 1/sqrt(DIM)
    bound = 1.0 / (DIM ** 0.5)

    for _ in range(DEPTH):
        blk = {
            "ln1_g": jnp.ones((DIM,), jnp.float32),
            "ln1_b": jnp.zeros((DIM,), jnp.float32),
            "qkv_w": nrm((DIM, 3 * DIM)),
            "qkv_b": jnp.zeros((3 * DIM,), jnp.float32),
            "proj_w": nrm((DIM, DIM)),
            "proj_b": jnp.zeros((DIM,), jnp.float32),
            "ln2_g": jnp.ones((DIM,), jnp.float32),
            "ln2_b": jnp.zeros((DIM,), jnp.float32),
            "fc1_w": nrm((DIM, MLP)),
            "fc1_b": jnp.zeros((MLP,), jnp.float32),
            "fc2_w": nrm((MLP, DIM)),
            "fc2_b": jnp.zeros((DIM,), jnp.float32),
            # LoRA params (reset_parameters semantics)
            "a_q": jnp.zeros((DIM, R), jnp.float32),
            "b_q": jnp.zeros((R, DIM), jnp.float32),
            "a_v": jnp.zeros((DIM, R), jnp.float32),
            "b_v": jnp.zeros((R, DIM), jnp.float32),
            "na_q": jax.random.uniform(next(keys), (DIM, R), jnp.float32, -bound, bound),
            "nb_q": jnp.zeros((R, DIM), jnp.float32),
            "na_v": jax.random.uniform(next(keys), (DIM, R), jnp.float32, -bound, bound),
            "nb_v": jnp.zeros((R, DIM), jnp.float32),
        }
        params["blocks"].append(blk)
    return params


# ----------------------------- wrapper ----------------------------------------
def _merge_lora(blk, use_new):
    """Merge the 4 (or 8) rank-R LoRA linears into one (DIM,kR) A and (kR,3D) B.

    The B matrix is laid out so x @ A @ B lands directly in qkv layout:
    q delta in columns [0:DIM], v delta in columns [2*DIM:3*DIM].
    """
    if use_new:
        a_parts = [blk["a_q"], blk["na_q"], blk["a_v"], blk["na_v"]]
        b_parts = [(blk["b_q"], 0), (blk["nb_q"], 0),
                   (blk["b_v"], 2 * DIM), (blk["nb_v"], 2 * DIM)]
    else:
        a_parts = [blk["a_q"], blk["a_v"]]
        b_parts = [(blk["b_q"], 0), (blk["b_v"], 2 * DIM)]
    lora_a = jnp.concatenate(a_parts, axis=1)
    rows = [jnp.pad(m, ((0, 0), (off, 3 * DIM - DIM - off))) for m, off in b_parts]
    lora_b = jnp.concatenate(rows, axis=0)
    return lora_a, lora_b


def lora_vit_timm_forward(params, x_nchw, use_new=True):
    """LoRA_ViT_timm.forward: if use_new: return self.lora_vit(x)."""
    B, C, H, W = x_nchw.shape
    p = PATCH

    # Patch extraction (Conv2d k=s=PATCH) as a single host-side reshape/transpose;
    # the matmul itself happens inside the fused kernel.
    xp = x_nchw.reshape(B, C, H // p, p, W // p, p)
    xp = xp.transpose(0, 2, 4, 1, 3, 5).reshape(B, N_PATCH, C * p * p)

    def row(v):
        return v.reshape(1, -1)

    args = [xp,
            params["cls_token"].reshape(1, DIM),
            params["pos_embed"].reshape(N_TOK, DIM),
            params["patch_w"], row(params["patch_b"])]

    for bp in params["blocks"]:
        lora_a, lora_b = _merge_lora(bp, use_new)
        args += [row(bp["ln1_g"]), row(bp["ln1_b"]),
                 bp["qkv_w"], row(bp["qkv_b"]),
                 lora_a, lora_b,
                 bp["proj_w"], row(bp["proj_b"]),
                 row(bp["ln2_g"]), row(bp["ln2_b"]),
                 bp["fc1_w"], row(bp["fc1_b"]),
                 bp["fc2_w"], row(bp["fc2_b"])]

    # Lane-dense classifier: pad head weight/bias to 128 output lanes.
    head_w_pad = jnp.pad(params["head_w"], ((0, 0), (0, HEAD_PAD - NUM_CLASSES)))
    head_b_pad = jnp.pad(params["head_b"], (0, HEAD_PAD - NUM_CLASSES)).reshape(1, HEAD_PAD)
    args += [row(params["norm_g"]), row(params["norm_b"]), head_w_pad, head_b_pad]

    in_specs = [pl.BlockSpec((1, N_PATCH, C * p * p), lambda b: (b, 0, 0))]
    in_specs += [pl.BlockSpec(a.shape, lambda b: (0, 0)) for a in args[1:]]

    out = pl.pallas_call(
        _fused_lora_vit_kernel,
        out_shape=jax.ShapeDtypeStruct((B, 1, HEAD_PAD), jnp.float32),
        grid=(B,),
        in_specs=in_specs,
        out_specs=pl.BlockSpec((1, 1, HEAD_PAD), lambda b: (b, 0, 0)),
        compiler_params=pltpu.CompilerParams(
            dimension_semantics=("parallel",)),  # 2 TCs on v7x
    )(*args)

    return out[:, 0, :NUM_CLASSES]


# ----------------------------- main -------------------------------------------
if __name__ == "__main__":
    key = jax.random.PRNGKey(0)
    k_param, k_x = jax.random.split(key)
    params = init_params(k_param)
    x = jax.random.normal(k_x, (2, IN_CH, IMG, IMG), jnp.float32)  # NCHW

    fwd = jax.jit(functools.partial(lora_vit_timm_forward, use_new=True))
    out = fwd(params, x)
    jax.block_until_ready(out)
    assert out.shape == (2, NUM_CLASSES), out.shape
    print("KERNEL_OK")
</pallas_src>

<mosaic_0001>
module attributes {stable_mosaic.version = 11 : i64} {
  func.func @_fused_lora_vit_kernel(%arg0: i32, %arg1: memref<1x16x48xf32, #tpu.memory_space<vmem>>, %arg2: memref<1x32xf32, #tpu.memory_space<vmem>>, %arg3: memref<17x32xf32, #tpu.memory_space<vmem>>, %arg4: memref<48x32xf32, #tpu.memory_space<vmem>>, %arg5: memref<1x32xf32, #tpu.memory_space<vmem>>, %arg6: memref<1x32xf32, #tpu.memory_space<vmem>>, %arg7: memref<1x32xf32, #tpu.memory_space<vmem>>, %arg8: memref<32x96xf32, #tpu.memory_space<vmem>>, %arg9: memref<1x96xf32, #tpu.memory_space<vmem>>, %arg10: memref<32x16xf32, #tpu.memory_space<vmem>>, %arg11: memref<16x96xf32, #tpu.memory_space<vmem>>, %arg12: memref<32x32xf32, #tpu.memory_space<vmem>>, %arg13: memref<1x32xf32, #tpu.memory_space<vmem>>, %arg14: memref<1x32xf32, #tpu.memory_space<vmem>>, %arg15: memref<1x32xf32, #tpu.memory_space<vmem>>, %arg16: memref<32x128xf32, #tpu.memory_space<vmem>>, %arg17: memref<1x128xf32, #tpu.memory_space<vmem>>, %arg18: memref<128x32xf32, #tpu.memory_space<vmem>>, %arg19: memref<1x32xf32, #tpu.memory_space<vmem>>, %arg20: memref<1x32xf32, #tpu.memory_space<vmem>>, %arg21: memref<1x32xf32, #tpu.memory_space<vmem>>, %arg22: memref<32x96xf32, #tpu.memory_space<vmem>>, %arg23: memref<1x96xf32, #tpu.memory_space<vmem>>, %arg24: memref<32x16xf32, #tpu.memory_space<vmem>>, %arg25: memref<16x96xf32, #tpu.memory_space<vmem>>, %arg26: memref<32x32xf32, #tpu.memory_space<vmem>>, %arg27: memref<1x32xf32, #tpu.memory_space<vmem>>, %arg28: memref<1x32xf32, #tpu.memory_space<vmem>>, %arg29: memref<1x32xf32, #tpu.memory_space<vmem>>, %arg30: memref<32x128xf32, #tpu.memory_space<vmem>>, %arg31: memref<1x128xf32, #tpu.memory_space<vmem>>, %arg32: memref<128x32xf32, #tpu.memory_space<vmem>>, %arg33: memref<1x32xf32, #tpu.memory_space<vmem>>, %arg34: memref<1x32xf32, #tpu.memory_space<vmem>>, %arg35: memref<1x32xf32, #tpu.memory_space<vmem>>, %arg36: memref<32x128xf32, #tpu.memory_space<vmem>>, %arg37: memref<1x128xf32, #tpu.memory_space<vmem>>, %arg38: memref<1x1x128xf32, #tpu.memory_space<vmem>>) attributes {dimension_semantics = [#tpu.dimension_semantics<parallel>], iteration_bounds = array<i64: 2>, scalar_prefetch = 0 : i64, scratch_operands = 0 : i64, tpu.core_type = #tpu.core_type<tc>, window_params = [{transform_indices = @transform_0, window_bounds = array<i64: 1, 16, 48>}, {pipeline_mode = #tpu.pipeline_mode<synchronous>, transform_indices = @transform_1, window_bounds = array<i64: 1, 32>}, {pipeline_mode = #tpu.pipeline_mode<synchronous>, transform_indices = @transform_2, window_bounds = array<i64: 17, 32>}, {pipeline_mode = #tpu.pipeline_mode<synchronous>, transform_indices = @transform_3, window_bounds = array<i64: 48, 32>}, {pipeline_mode = #tpu.pipeline_mode<synchronous>, transform_indices = @transform_4, window_bounds = array<i64: 1, 32>}, {pipeline_mode = #tpu.pipeline_mode<synchronous>, transform_indices = @transform_5, window_bounds = array<i64: 1, 32>}, {pipeline_mode = #tpu.pipeline_mode<synchronous>, transform_indices = @transform_6, window_bounds = array<i64: 1, 32>}, {pipeline_mode = #tpu.pipeline_mode<synchronous>, transform_indices = @transform_7, window_bounds = array<i64: 32, 96>}, {pipeline_mode = #tpu.pipeline_mode<synchronous>, transform_indices = @transform_8, window_bounds = array<i64: 1, 96>}, {pipeline_mode = #tpu.pipeline_mode<synchronous>, transform_indices = @transform_9, window_bounds = array<i64: 32, 16>}, {pipeline_mode = #tpu.pipeline_mode<synchronous>, transform_indices = @transform_10, window_bounds = array<i64: 16, 96>}, {pipeline_mode = #tpu.pipeline_mode<synchronous>, transform_indices = @transform_11, window_bounds = array<i64: 32, 32>}, {pipeline_mode = #tpu.pipeline_mode<synchronous>, transform_indices = @transform_12, window_bounds = array<i64: 1, 32>}, {pipeline_mode = #tpu.pipeline_mode<synchronous>, transform_indices = @transform_13, window_bounds = array<i64: 1, 32>}, {pipeline_mode = #tpu.pipeline_mode<synchronous>, transform_indices = @transform_14, window_bounds = array<i64: 1, 32>}, {pipeline_mode = #tpu.pipeline_mode<synchronous>, transform_indices = @transform_15, window_bounds = array<i64: 32, 128>}, {pipeline_mode = #tpu.pipeline_mode<synchronous>, transform_indices = @transform_16, window_bounds = array<i64: 1, 128>}, {pipeline_mode = #tpu.pipeline_mode<synchronous>, transform_indices = @transform_17, window_bounds = array<i64: 128, 32>}, {pipeline_mode = #tpu.pipeline_mode<synchronous>, transform_indices = @transform_18, window_bounds = array<i64: 1, 32>}, {pipeline_mode = #tpu.pipeline_mode<synchronous>, transform_indices = @transform_19, window_bounds = array<i64: 1, 32>}, {pipeline_mode = #tpu.pipeline_mode<synchronous>, transform_indices = @transform_20, window_bounds = array<i64: 1, 32>}, {pipeline_mode = #tpu.pipeline_mode<synchronous>, transform_indices = @transform_21, window_bounds = array<i64: 32, 96>}, {pipeline_mode = #tpu.pipeline_mode<synchronous>, transform_indices = @transform_22, window_bounds = array<i64: 1, 96>}, {pipeline_mode = #tpu.pipeline_mode<synchronous>, transform_indices = @transform_23, window_bounds = array<i64: 32, 16>}, {pipeline_mode = #tpu.pipeline_mode<synchronous>, transform_indices = @transform_24, window_bounds = array<i64: 16, 96>}, {pipeline_mode = #tpu.pipeline_mode<synchronous>, transform_indices = @transform_25, window_bounds = array<i64: 32, 32>}, {pipeline_mode = #tpu.pipeline_mode<synchronous>, transform_indices = @transform_26, window_bounds = array<i64: 1, 32>}, {pipeline_mode = #tpu.pipeline_mode<synchronous>, transform_indices = @transform_27, window_bounds = array<i64: 1, 32>}, {pipeline_mode = #tpu.pipeline_mode<synchronous>, transform_indices = @transform_28, window_bounds = array<i64: 1, 32>}, {pipeline_mode = #tpu.pipeline_mode<synchronous>, transform_indices = @transform_29, window_bounds = array<i64: 32, 128>}, {pipeline_mode = #tpu.pipeline_mode<synchronous>, transform_indices = @transform_30, window_bounds = array<i64: 1, 128>}, {pipeline_mode = #tpu.pipeline_mode<synchronous>, transform_indices = @transform_31, window_bounds = array<i64: 128, 32>}, {pipeline_mode = #tpu.pipeline_mode<synchronous>, transform_indices = @transform_32, window_bounds = array<i64: 1, 32>}, {pipeline_mode = #tpu.pipeline_mode<synchronous>, transform_indices = @transform_33, window_bounds = array<i64: 1, 32>}, {pipeline_mode = #tpu.pipeline_mode<synchronous>, transform_indices = @transform_34, window_bounds = array<i64: 1, 32>}, {pipeline_mode = #tpu.pipeline_mode<synchronous>, transform_indices = @transform_35, window_bounds = array<i64: 32, 128>}, {pipeline_mode = #tpu.pipeline_mode<synchronous>, transform_indices = @transform_36, window_bounds = array<i64: 1, 128>}, {transform_indices = @transform_37, window_bounds = array<i64: 1, 1, 128>}]} {
    %c0 = arith.constant 0 : index
    %c0_0 = arith.constant 0 : index
    %c0_1 = arith.constant 0 : index
    %0 = vector.load %arg1[%c0, %c0_0, %c0_1] : memref<1x16x48xf32, #tpu.memory_space<vmem>>, vector<1x16x48xf32>
    %1 = vector.shape_cast %0 : vector<1x16x48xf32> to vector<16x48xf32>
    %c0_2 = arith.constant 0 : index
    %c0_3 = arith.constant 0 : index
    %2 = vector.load %arg4[%c0_2, %c0_3] : memref<48x32xf32, #tpu.memory_space<vmem>>, vector<48x32xf32>
    %3 = arith.truncf %1 : vector<16x48xf32> to vector<16x48xbf16>
    %4 = arith.truncf %2 : vector<48x32xf32> to vector<48x32xbf16>
    %cst = arith.constant dense<0.000000e+00> : vector<16x32xf32>
    %5 = tpu.matmul %3, %4, %cst {dimension_numbers = #tpu.dot_dimension_numbers<[1], [0], [0], [1], [0, 0, 1, 1], [], []>} : vector<16x48xbf16>, vector<48x32xbf16>, vector<16x32xf32> -> vector<16x32xf32>
    %c0_4 = arith.constant 0 : index
    %c0_5 = arith.constant 0 : index
    %6 = vector.load %arg5[%c0_4, %c0_5] : memref<1x32xf32, #tpu.memory_space<vmem>>, vector<1x32xf32>
    %7 = vector.broadcast %6 : vector<1x32xf32> to vector<16x32xf32>
    %8 = arith.addf %5, %7 : vector<16x32xf32>
    %c0_6 = arith.constant 0 : index
    %c0_7 = arith.constant 0 : index
    %9 = vector.load %arg2[%c0_6, %c0_7] : memref<1x32xf32, #tpu.memory_space<vmem>>, vector<1x32xf32>
    %10 = tpu.concatenate %9, %8 in 0 : vector<1x32xf32>, vector<16x32xf32> -> vector<17x32xf32>
    %c0_8 = arith.constant 0 : index
    %c0_9 = arith.constant 0 : index
    %11 = vector.load %arg3[%c0_8, %c0_9] : memref<17x32xf32, #tpu.memory_space<vmem>>, vector<17x32xf32>
    %12 = arith.addf %10, %11 : vector<17x32xf32>
    %cst_10 = arith.constant dense<0.000000e+00> : vector<17xf32>
    %13 = vector.multi_reduction <add>, %12, %cst_10 [1] : vector<17x32xf32> to vector<17xf32>
    %14 = vector.shape_cast %13 : vector<17xf32> to vector<17x1xf32>
    %cst_11 = arith.constant 3.200000e+01 : f32
    %15 = vector.broadcast %cst_11 : f32 to vector<17x1xf32>
    %16 = arith.divf %14, %15 : vector<17x1xf32>
    %17 = vector.broadcast %16 : vector<17x1xf32> to vector<17x32xf32>
    %18 = arith.subf %12, %17 : vector<17x32xf32>
    %19 = arith.mulf %18, %18 : vector<17x32xf32>
    %cst_12 = arith.constant dense<0.000000e+00> : vector<17xf32>
    %20 = vector.multi_reduction <add>, %19, %cst_12 [1] : vector<17x32xf32> to vector<17xf32>
    %21 = vector.shape_cast %20 : vector<17xf32> to vector<17x1xf32>
    %cst_13 = arith.constant 3.200000e+01 : f32
    %22 = vector.broadcast %cst_13 : f32 to vector<17x1xf32>
    %23 = arith.divf %21, %22 : vector<17x1xf32>
    %24 = vector.broadcast %16 : vector<17x1xf32> to vector<17x32xf32>
    %25 = arith.subf %12, %24 : vector<17x32xf32>
    %cst_14 = arith.constant 9.99999997E-7 : f32
    %26 = vector.broadcast %cst_14 : f32 to vector<17x1xf32>
    %27 = arith.addf %23, %26 : vector<17x1xf32>
    %28 = math.rsqrt %27 : vector<17x1xf32>
    %29 = vector.broadcast %28 : vector<17x1xf32> to vector<17x32xf32>
    %30 = arith.mulf %25, %29 : vector<17x32xf32>
    %c0_15 = arith.constant 0 : index
    %c0_16 = arith.constant 0 : index
    %31 = vector.load %arg6[%c0_15, %c0_16] : memref<1x32xf32, #tpu.memory_space<vmem>>, vector<1x32xf32>
    %32 = vector.broadcast %31 : vector<1x32xf32> to vector<17x32xf32>
    %33 = arith.mulf %30, %32 : vector<17x32xf32>
    %c0_17 = arith.constant 0 : index
    %c0_18 = arith.constant 0 : index
    %34 = vector.load %arg7[%c0_17, %c0_18] : memref<1x32xf32, #tpu.memory_space<vmem>>, vector<1x32xf32>
    %35 = vector.broadcast %34 : vector<1x32xf32> to vector<17x32xf32>
    %36 = arith.addf %33, %35 : vector<17x32xf32>
    %c0_19 = arith.constant 0 : index
    %c0_20 = arith.constant 0 : index
    %37 = vector.load %arg8[%c0_19, %c0_20] : memref<32x96xf32, #tpu.memory_space<vmem>>, vector<32x96xf32>
    %38 = arith.truncf %36 : vector<17x32xf32> to vector<17x32xbf16>
    %39 = arith.truncf %37 : vector<32x96xf32> to vector<32x96xbf16>
    %cst_21 = arith.constant dense<0.000000e+00> : vector<17x96xf32>
    %40 = tpu.matmul %38, %39, %cst_21 {dimension_numbers = #tpu.dot_dimension_numbers<[1], [0], [0], [1], [0, 0, 1, 1], [], []>} : vector<17x32xbf16>, vector<32x96xbf16>, vector<17x96xf32> -> vector<17x96xf32>
    %c0_22 = arith.constant 0 : index
    %c0_23 = arith.constant 0 : index
    %41 = vector.load %arg9[%c0_22, %c0_23] : memref<1x96xf32, #tpu.memory_space<vmem>>, vector<1x96xf32>
    %42 = vector.broadcast %41 : vector<1x96xf32> to vector<17x96xf32>
    %43 = arith.addf %40, %42 : vector<17x96xf32>
    %c0_24 = arith.constant 0 : index
    %c0_25 = arith.constant 0 : index
    %44 = vector.load %arg10[%c0_24, %c0_25] : memref<32x16xf32, #tpu.memory_space<vmem>>, vector<32x16xf32>
    %45 = arith.truncf %36 : vector<17x32xf32> to vector<17x32xbf16>
    %46 = arith.truncf %44 : vector<32x16xf32> to vector<32x16xbf16>
    %cst_26 = arith.constant dense<0.000000e+00> : vector<17x16xf32>
    %47 = tpu.matmul %45, %46, %cst_26 {dimension_numbers = #tpu.dot_dimension_numbers<[1], [0], [0], [1], [0, 0, 1, 1], [], []>} : vector<17x32xbf16>, vector<32x16xbf16>, vector<17x16xf32> -> vector<17x16xf32>
    %c0_27 = arith.constant 0 : index
    %c0_28 = arith.constant 0 : index
    %48 = vector.load %arg11[%c0_27, %c0_28] : memref<16x96xf32, #tpu.memory_space<vmem>>, vector<16x96xf32>
    %49 = arith.truncf %47 : vector<17x16xf32> to vector<17x16xbf16>
    %50 = arith.truncf %48 : vector<16x96xf32> to vector<16x96xbf16>
    %cst_29 = arith.constant dense<0.000000e+00> : vector<17x96xf32>
    %51 = tpu.matmul %49, %50, %cst_29 {dimension_numbers = #tpu.dot_dimension_numbers<[1], [0], [0], [1], [0, 0, 1, 1], [], []>} : vector<17x16xbf16>, vector<16x96xbf16>, vector<17x96xf32> -> vector<17x96xf32>
    %52 = arith.addf %43, %51 : vector<17x96xf32>
    %53 = vector.extract_strided_slice %52 {offsets = [0, 0], sizes = [17, 32], strides = [1, 1]} : vector<17x96xf32> to vector<17x32xf32>
    %cst_30 = arith.constant 0.353553385 : f32
    %54 = vector.broadcast %cst_30 : f32 to vector<17x32xf32>
    %55 = arith.mulf %53, %54 : vector<17x32xf32>
    %56 = vector.extract_strided_slice %52 {offsets = [0, 32], sizes = [17, 32], strides = [1, 1]} : vector<17x96xf32> to vector<17x32xf32>
    %57 = vector.extract_strided_slice %52 {offsets = [0, 64], sizes = [17, 32], strides = [1, 1]} : vector<17x96xf32> to vector<17x32xf32>
    %58 = vector.extract_strided_slice %55 {offsets = [0, 0], sizes = [17, 8], strides = [1, 1]} : vector<17x32xf32> to vector<17x8xf32>
    %59 = vector.extract_strided_slice %56 {offsets = [0, 0], sizes = [17, 8], strides = [1, 1]} : vector<17x32xf32> to vector<17x8xf32>
    %60 = vector.extract_strided_slice %57 {offsets = [0, 0], sizes = [17, 8], strides = [1, 1]} : vector<17x32xf32> to vector<17x8xf32>
    %cst_31 = arith.constant dense<0.000000e+00> : vector<17x17xf32>
    %61 = tpu.matmul %58, %59, %cst_31 {dimension_numbers = #tpu.dot_dimension_numbers<[1], [1], [0], [0], [0, 0, 1, 0], [], []>} : vector<17x8xf32>, vector<17x8xf32>, vector<17x17xf32> -> vector<17x17xf32>
    %cst_32 = arith.constant dense<0xFF800000> : vector<17xf32>
    %62 = vector.multi_reduction <maximumf>, %61, %cst_32 [1] : vector<17x17xf32> to vector<17xf32>
    %63 = vector.shape_cast %62 : vector<17xf32> to vector<17x1xf32>
    %64 = vector.broadcast %63 : vector<17x1xf32> to vector<17x17xf32>
    %65 = arith.subf %61, %64 : vector<17x17xf32>
    %66 = math.exp %65 : vector<17x17xf32>
    %cst_33 = arith.constant dense<0.000000e+00> : vector<17xf32>
    %67 = vector.multi_reduction <add>, %66, %cst_33 [1] : vector<17x17xf32> to vector<17xf32>
    %68 = vector.shape_cast %67 : vector<17xf32> to vector<17x1xf32>
    %69 = tpu.reciprocal %68 {approx = true} : vector<17x1xf32> -> vector<17x1xf32>
    %70 = vector.broadcast %69 : vector<17x1xf32> to vector<17x17xf32>
    %71 = arith.mulf %66, %70 : vector<17x17xf32>
    %cst_34 = arith.constant dense<0.000000e+00> : vector<17x8xf32>
    %72 = tpu.matmul %71, %60, %cst_34 {dimension_numbers = #tpu.dot_dimension_numbers<[1], [0], [0], [1], [0, 0, 1, 1], [], []>} : vector<17x17xf32>, vector<17x8xf32>, vector<17x8xf32> -> vector<17x8xf32>
    %73 = vector.extract_strided_slice %55 {offsets = [0, 8], sizes = [17, 8], strides = [1, 1]} : vector<17x32xf32> to vector<17x8xf32>
    %74 = vector.extract_strided_slice %56 {offsets = [0, 8], sizes = [17, 8], strides = [1, 1]} : vector<17x32xf32> to vector<17x8xf32>
    %75 = vector.extract_strided_slice %57 {offsets = [0, 8], sizes = [17, 8], strides = [1, 1]} : vector<17x32xf32> to vector<17x8xf32>
    %cst_35 = arith.constant dense<0.000000e+00> : vector<17x17xf32>
    %76 = tpu.matmul %73, %74, %cst_35 {dimension_numbers = #tpu.dot_dimension_numbers<[1], [1], [0], [0], [0, 0, 1, 0], [], []>} : vector<17x8xf32>, vector<17x8xf32>, vector<17x17xf32> -> vector<17x17xf32>
    %cst_36 = arith.constant dense<0xFF800000> : vector<17xf32>
    %77 = vector.multi_reduction <maximumf>, %76, %cst_36 [1] : vector<17x17xf32> to vector<17xf32>
    %78 = vector.shape_cast %77 : vector<17xf32> to vector<17x1xf32>
    %79 = vector.broadcast %78 : vector<17x1xf32> to vector<17x17xf32>
    %80 = arith.subf %76, %79 : vector<17x17xf32>
    %81 = math.exp %80 : vector<17x17xf32>
    %cst_37 = arith.constant dense<0.000000e+00> : vector<17xf32>
    %82 = vector.multi_reduction <add>, %81, %cst_37 [1] : vector<17x17xf32> to vector<17xf32>
    %83 = vector.shape_cast %82 : vector<17xf32> to vector<17x1xf32>
    %84 = tpu.reciprocal %83 {approx = true} : vector<17x1xf32> -> vector<17x1xf32>
    %85 = vector.broadcast %84 : vector<17x1xf32> to vector<17x17xf32>
    %86 = arith.mulf %81, %85 : vector<17x17xf32>
    %cst_38 = arith.constant dense<0.000000e+00> : vector<17x8xf32>
    %87 = tpu.matmul %86, %75, %cst_38 {dimension_numbers = #tpu.dot_dimension_numbers<[1], [0], [0], [1], [0, 0, 1, 1], [], []>} : vector<17x17xf32>, vector<17x8xf32>, vector<17x8xf32> -> vector<17x8xf32>
    %88 = vector.extract_strided_slice %55 {offsets = [0, 16], sizes = [17, 8], strides = [1, 1]} : vector<17x32xf32> to vector<17x8xf32>
    %89 = vector.extract_strided_slice %56 {offsets = [0, 16], sizes = [17, 8], strides = [1, 1]} : vector<17x32xf32> to vector<17x8xf32>
    %90 = vector.extract_strided_slice %57 {offsets = [0, 16], sizes = [17, 8], strides = [1, 1]} : vector<17x32xf32> to vector<17x8xf32>
    %cst_39 = arith.constant dense<0.000000e+00> : vector<17x17xf32>
    %91 = tpu.matmul %88, %89, %cst_39 {dimension_numbers = #tpu.dot_dimension_numbers<[1], [1], [0], [0], [0, 0, 1, 0], [], []>} : vector<17x8xf32>, vector<17x8xf32>, vector<17x17xf32> -> vector<17x17xf32>
    %cst_40 = arith.constant dense<0xFF800000> : vector<17xf32>
    %92 = vector.multi_reduction <maximumf>, %91, %cst_40 [1] : vector<17x17xf32> to vector<17xf32>
    %93 = vector.shape_cast %92 : vector<17xf32> to vector<17x1xf32>
    %94 = vector.broadcast %93 : vector<17x1xf32> to vector<17x17xf32>
    %95 = arith.subf %91, %94 : vector<17x17xf32>
    %96 = math.exp %95 : vector<17x17xf32>
    %cst_41 = arith.constant dense<0.000000e+00> : vector<17xf32>
    %97 = vector.multi_reduction <add>, %96, %cst_41 [1] : vector<17x17xf32> to vector<17xf32>
    %98 = vector.shape_cast %97 : vector<17xf32> to vector<17x1xf32>
    %99 = tpu.reciprocal %98 {approx = true} : vector<17x1xf32> -> vector<17x1xf32>
    %100 = vector.broadcast %99 : vector<17x1xf32> to vector<17x17xf32>
    %101 = arith.mulf %96, %100 : vector<17x17xf32>
    %cst_42 = arith.constant dense<0.000000e+00> : vector<17x8xf32>
    %102 = tpu.matmul %101, %90, %cst_42 {dimension_numbers = #tpu.dot_dimension_numbers<[1], [0], [0], [1], [0, 0, 1, 1], [], []>} : vector<17x17xf32>, vector<17x8xf32>, vector<17x8xf32> -> vector<17x8xf32>
    %103 = vector.extract_strided_slice %55 {offsets = [0, 24], sizes = [17, 8], strides = [1, 1]} : vector<17x32xf32> to vector<17x8xf32>
    %104 = vector.extract_strided_slice %56 {offsets = [0, 24], sizes = [17, 8], strides = [1, 1]} : vector<17x32xf32> to vector<17x8xf32>
    %105 = vector.extract_strided_slice %57 {offsets = [0, 24], sizes = [17, 8], strides = [1, 1]} : vector<17x32xf32> to vector<17x8xf32>
    %cst_43 = arith.constant dense<0.000000e+00> : vector<17x17xf32>
    %106 = tpu.matmul %103, %104, %cst_43 {dimension_numbers = #tpu.dot_dimension_numbers<[1], [1], [0], [0], [0, 0, 1, 0], [], []>} : vector<17x8xf32>, vector<17x8xf32>, vector<17x17xf32> -> vector<17x17xf32>
    %cst_44 = arith.constant dense<0xFF800000> : vector<17xf32>
    %107 = vector.multi_reduction <maximumf>, %106, %cst_44 [1] : vector<17x17xf32> to vector<17xf32>
    %108 = vector.shape_cast %107 : vector<17xf32> to vector<17x1xf32>
    %109 = vector.broadcast %108 : vector<17x1xf32> to vector<17x17xf32>
    %110 = arith.subf %106, %109 : vector<17x17xf32>
    %111 = math.exp %110 : vector<17x17xf32>
    %cst_45 = arith.constant dense<0.000000e+00> : vector<17xf32>
    %112 = vector.multi_reduction <add>, %111, %cst_45 [1] : vector<17x17xf32> to vector<17xf32>
    %113 = vector.shape_cast %112 : vector<17xf32> to vector<17x1xf32>
    %114 = tpu.reciprocal %113 {approx = true} : vector<17x1xf32> -> vector<17x1xf32>
    %115 = vector.broadcast %114 : vector<17x1xf32> to vector<17x17xf32>
    %116 = arith.mulf %111, %115 : vector<17x17xf32>
    %cst_46 = arith.constant dense<0.000000e+00> : vector<17x8xf32>
    %117 = tpu.matmul %116, %105, %cst_46 {dimension_numbers = #tpu.dot_dimension_numbers<[1], [0], [0], [1], [0, 0, 1, 1], [], []>} : vector<17x17xf32>, vector<17x8xf32>, vector<17x8xf32> -> vector<17x8xf32>
    %118 = tpu.concatenate %72, %87, %102, %117 in 1 : vector<17x8xf32>, vector<17x8xf32>, vector<17x8xf32>, vector<17x8xf32> -> vector<17x32xf32>
    %c0_47 = arith.constant 0 : index
    %c0_48 = arith.constant 0 : index
    %119 = vector.load %arg12[%c0_47, %c0_48] : memref<32x32xf32, #tpu.memory_space<vmem>>, vector<32x32xf32>
    %120 = arith.truncf %118 : vector<17x32xf32> to vector<17x32xbf16>
    %121 = arith.truncf %119 : vector<32x32xf32> to vector<32x32xbf16>
    %cst_49 = arith.constant dense<0.000000e+00> : vector<17x32xf32>
    %122 = tpu.matmul %120, %121, %cst_49 {dimension_numbers = #tpu.dot_dimension_numbers<[1], [0], [0], [1], [0, 0, 1, 1], [], []>} : vector<17x32xbf16>, vector<32x32xbf16>, vector<17x32xf32> -> vector<17x32xf32>
    %123 = arith.addf %12, %122 : vector<17x32xf32>
    %c0_50 = arith.constant 0 : index
    %c0_51 = arith.constant 0 : index
    %124 = vector.load %arg13[%c0_50, %c0_51] : memref<1x32xf32, #tpu.memory_space<vmem>>, vector<1x32xf32>
    %125 = vector.broadcast %124 : vector<1x32xf32> to vector<17x32xf32>
    %126 = arith.addf %123, %125 : vector<17x32xf32>
    %cst_52 = arith.constant dense<0.000000e+00> : vector<17xf32>
    %127 = vector.multi_reduction <add>, %126, %cst_52 [1] : vector<17x32xf32> to vector<17xf32>
    %128 = vector.shape_cast %127 : vector<17xf32> to vector<17x1xf32>
    %cst_53 = arith.constant 3.200000e+01 : f32
    %129 = vector.broadcast %cst_53 : f32 to vector<17x1xf32>
    %130 = arith.divf %128, %129 : vector<17x1xf32>
    %131 = vector.broadcast %130 : vector<17x1xf32> to vector<17x32xf32>
    %132 = arith.subf %126, %131 : vector<17x32xf32>
    %133 = arith.mulf %132, %132 : vector<17x32xf32>
    %cst_54 = arith.constant dense<0.000000e+00> : vector<17xf32>
    %134 = vector.multi_reduction <add>, %133, %cst_54 [1] : vector<17x32xf32> to vector<17xf32>
    %135 = vector.shape_cast %134 : vector<17xf32> to vector<17x1xf32>
    %cst_55 = arith.constant 3.200000e+01 : f32
    %136 = vector.broadcast %cst_55 : f32 to vector<17x1xf32>
    %137 = arith.divf %135, %136 : vector<17x1xf32>
    %138 = vector.broadcast %130 : vector<17x1xf32> to vector<17x32xf32>
    %139 = arith.subf %126, %138 : vector<17x32xf32>
    %cst_56 = arith.constant 9.99999997E-7 : f32
    %140 = vector.broadcast %cst_56 : f32 to vector<17x1xf32>
    %141 = arith.addf %137, %140 : vector<17x1xf32>
    %142 = math.rsqrt %141 : vector<17x1xf32>
    %143 = vector.broadcast %142 : vector<17x1xf32> to vector<17x32xf32>
    %144 = arith.mulf %139, %143 : vector<17x32xf32>
    %c0_57 = arith.constant 0 : index
    %c0_58 = arith.constant 0 : index
    %145 = vector.load %arg14[%c0_57, %c0_58] : memref<1x32xf32, #tpu.memory_space<vmem>>, vector<1x32xf32>
    %146 = vector.broadcast %145 : vector<1x32xf32> to vector<17x32xf32>
    %147 = arith.mulf %144, %146 : vector<17x32xf32>
    %c0_59 = arith.constant 0 : index
    %c0_60 = arith.constant 0 : index
    %148 = vector.load %arg15[%c0_59, %c0_60] : memref<1x32xf32, #tpu.memory_space<vmem>>, vector<1x32xf32>
    %149 = vector.broadcast %148 : vector<1x32xf32> to vector<17x32xf32>
    %150 = arith.addf %147, %149 : vector<17x32xf32>
    %c0_61 = arith.constant 0 : index
    %c0_62 = arith.constant 0 : index
    %151 = vector.load %arg16[%c0_61, %c0_62] : memref<32x128xf32, #tpu.memory_space<vmem>>, vector<32x128xf32>
    %152 = arith.truncf %150 : vector<17x32xf32> to vector<17x32xbf16>
    %153 = arith.truncf %151 : vector<32x128xf32> to vector<32x128xbf16>
    %cst_63 = arith.constant dense<0.000000e+00> : vector<17x128xf32>
    %154 = tpu.matmul %152, %153, %cst_63 {dimension_numbers = #tpu.dot_dimension_numbers<[1], [0], [0], [1], [0, 0, 1, 1], [], []>} : vector<17x32xbf16>, vector<32x128xbf16>, vector<17x128xf32> -> vector<17x128xf32>
    %c0_64 = arith.constant 0 : index
    %c0_65 = arith.constant 0 : index
    %155 = vector.load %arg17[%c0_64, %c0_65] : memref<1x128xf32, #tpu.memory_space<vmem>>, vector<1x128xf32>
    %156 = vector.broadcast %155 : vector<1x128xf32> to vector<17x128xf32>
    %157 = arith.addf %154, %156 : vector<17x128xf32>
    %158 = arith.mulf %157, %157 : vector<17x128xf32>
    %159 = arith.mulf %157, %158 : vector<17x128xf32>
    %cst_66 = arith.constant 4.471500e-02 : f32
    %160 = vector.broadcast %cst_66 : f32 to vector<17x128xf32>
    %161 = arith.mulf %160, %159 : vector<17x128xf32>
    %162 = arith.addf %157, %161 : vector<17x128xf32>
    %cst_67 = arith.constant 0.797884583 : f32
    %163 = vector.broadcast %cst_67 : f32 to vector<17x128xf32>
    %164 = arith.mulf %163, %162 : vector<17x128xf32>
    %165 = math.tanh %164 : vector<17x128xf32>
    %cst_68 = arith.constant 1.000000e+00 : f32
    %166 = vector.broadcast %cst_68 : f32 to vector<17x128xf32>
    %167 = arith.addf %166, %165 : vector<17x128xf32>
    %cst_69 = arith.constant 5.000000e-01 : f32
    %168 = vector.broadcast %cst_69 : f32 to vector<17x128xf32>
    %169 = arith.mulf %168, %167 : vector<17x128xf32>
    %170 = arith.mulf %157, %169 : vector<17x128xf32>
    %c0_70 = arith.constant 0 : index
    %c0_71 = arith.constant 0 : index
    %171 = vector.load %arg18[%c0_70, %c0_71] : memref<128x32xf32, #tpu.memory_space<vmem>>, vector<128x32xf32>
    %172 = arith.truncf %170 : vector<17x128xf32> to vector<17x128xbf16>
    %173 = arith.truncf %171 : vector<128x32xf32> to vector<128x32xbf16>
    %cst_72 = arith.constant dense<0.000000e+00> : vector<17x32xf32>
    %174 = tpu.matmul %172, %173, %cst_72 {dimension_numbers = #tpu.dot_dimension_numbers<[1], [0], [0], [1], [0, 0, 1, 1], [], []>} : vector<17x128xbf16>, vector<128x32xbf16>, vector<17x32xf32> -> vector<17x32xf32>
    %175 = arith.addf %126, %174 : vector<17x32xf32>
    %c0_73 = arith.constant 0 : index
    %c0_74 = arith.constant 0 : index
    %176 = vector.load %arg19[%c0_73, %c0_74] : memref<1x32xf32, #tpu.memory_space<vmem>>, vector<1x32xf32>
    %177 = vector.broadcast %176 : vector<1x32xf32> to vector<17x32xf32>
    %178 = arith.addf %175, %177 : vector<17x32xf32>
    %cst_75 = arith.constant dense<0.000000e+00> : vector<17xf32>
    %179 = vector.multi_reduction <add>, %178, %cst_75 [1] : vector<17x32xf32> to vector<17xf32>
    %180 = vector.shape_cast %179 : vector<17xf32> to vector<17x1xf32>
    %cst_76 = arith.constant 3.200000e+01 : f32
    %181 = vector.broadcast %cst_76 : f32 to vector<17x1xf32>
    %182 = arith.divf %180, %181 : vector<17x1xf32>
    %183 = vector.broadcast %182 : vector<17x1xf32> to vector<17x32xf32>
    %184 = arith.subf %178, %183 : vector<17x32xf32>
    %185 = arith.mulf %184, %184 : vector<17x32xf32>
    %cst_77 = arith.constant dense<0.000000e+00> : vector<17xf32>
    %186 = vector.multi_reduction <add>, %185, %cst_77 [1] : vector<17x32xf32> to vector<17xf32>
    %187 = vector.shape_cast %186 : vector<17xf32> to vector<17x1xf32>
    %cst_78 = arith.constant 3.200000e+01 : f32
    %188 = vector.broadcast %cst_78 : f32 to vector<17x1xf32>
    %189 = arith.divf %187, %188 : vector<17x1xf32>
    %190 = vector.broadcast %182 : vector<17x1xf32> to vector<17x32xf32>
    %191 = arith.subf %178, %190 : vector<17x32xf32>
    %cst_79 = arith.constant 9.99999997E-7 : f32
    %192 = vector.broadcast %cst_79 : f32 to vector<17x1xf32>
    %193 = arith.addf %189, %192 : vector<17x1xf32>
    %194 = math.rsqrt %193 : vector<17x1xf32>
    %195 = vector.broadcast %194 : vector<17x1xf32> to vector<17x32xf32>
    %196 = arith.mulf %191, %195 : vector<17x32xf32>
    %c0_80 = arith.constant 0 : index
    %c0_81 = arith.constant 0 : index
    %197 = vector.load %arg20[%c0_80, %c0_81] : memref<1x32xf32, #tpu.memory_space<vmem>>, vector<1x32xf32>
    %198 = vector.broadcast %197 : vector<1x32xf32> to vector<17x32xf32>
    %199 = arith.mulf %196, %198 : vector<17x32xf32>
    %c0_82 = arith.constant 0 : index
    %c0_83 = arith.constant 0 : index
    %200 = vector.load %arg21[%c0_82, %c0_83] : memref<1x32xf32, #tpu.memory_space<vmem>>, vector<1x32xf32>
    %201 = vector.broadcast %200 : vector<1x32xf32> to vector<17x32xf32>
    %202 = arith.addf %199, %201 : vector<17x32xf32>
    %c0_84 = arith.constant 0 : index
    %c0_85 = arith.constant 0 : index
    %203 = vector.load %arg22[%c0_84, %c0_85] : memref<32x96xf32, #tpu.memory_space<vmem>>, vector<32x96xf32>
    %204 = arith.truncf %202 : vector<17x32xf32> to vector<17x32xbf16>
    %205 = arith.truncf %203 : vector<32x96xf32> to vector<32x96xbf16>
    %cst_86 = arith.constant dense<0.000000e+00> : vector<17x96xf32>
    %206 = tpu.matmul %204, %205, %cst_86 {dimension_numbers = #tpu.dot_dimension_numbers<[1], [0], [0], [1], [0, 0, 1, 1], [], []>} : vector<17x32xbf16>, vector<32x96xbf16>, vector<17x96xf32> -> vector<17x96xf32>
    %c0_87 = arith.constant 0 : index
    %c0_88 = arith.constant 0 : index
    %207 = vector.load %arg23[%c0_87, %c0_88] : memref<1x96xf32, #tpu.memory_space<vmem>>, vector<1x96xf32>
    %208 = vector.broadcast %207 : vector<1x96xf32> to vector<17x96xf32>
    %209 = arith.addf %206, %208 : vector<17x96xf32>
    %c0_89 = arith.constant 0 : index
    %c0_90 = arith.constant 0 : index
    %210 = vector.load %arg24[%c0_89, %c0_90] : memref<32x16xf32, #tpu.memory_space<vmem>>, vector<32x16xf32>
    %211 = arith.truncf %202 : vector<17x32xf32> to vector<17x32xbf16>
    %212 = arith.truncf %210 : vector<32x16xf32> to vector<32x16xbf16>
    %cst_91 = arith.constant dense<0.000000e+00> : vector<17x16xf32>
    %213 = tpu.matmul %211, %212, %cst_91 {dimension_numbers = #tpu.dot_dimension_numbers<[1], [0], [0], [1], [0, 0, 1, 1], [], []>} : vector<17x32xbf16>, vector<32x16xbf16>, vector<17x16xf32> -> vector<17x16xf32>
    %c0_92 = arith.constant 0 : index
    %c0_93 = arith.constant 0 : index
    %214 = vector.load %arg25[%c0_92, %c0_93] : memref<16x96xf32, #tpu.memory_space<vmem>>, vector<16x96xf32>
    %215 = arith.truncf %213 : vector<17x16xf32> to vector<17x16xbf16>
    %216 = arith.truncf %214 : vector<16x96xf32> to vector<16x96xbf16>
    %cst_94 = arith.constant dense<0.000000e+00> : vector<17x96xf32>
    %217 = tpu.matmul %215, %216, %cst_94 {dimension_numbers = #tpu.dot_dimension_numbers<[1], [0], [0], [1], [0, 0, 1, 1], [], []>} : vector<17x16xbf16>, vector<16x96xbf16>, vector<17x96xf32> -> vector<17x96xf32>
    %218 = arith.addf %209, %217 : vector<17x96xf32>
    %219 = vector.extract_strided_slice %218 {offsets = [0, 0], sizes = [17, 32], strides = [1, 1]} : vector<17x96xf32> to vector<17x32xf32>
    %cst_95 = arith.constant 0.353553385 : f32
    %220 = vector.broadcast %cst_95 : f32 to vector<17x32xf32>
    %221 = arith.mulf %219, %220 : vector<17x32xf32>
    %222 = vector.extract_strided_slice %218 {offsets = [0, 32], sizes = [17, 32], strides = [1, 1]} : vector<17x96xf32> to vector<17x32xf32>
    %223 = vector.extract_strided_slice %218 {offsets = [0, 64], sizes = [17, 32], strides = [1, 1]} : vector<17x96xf32> to vector<17x32xf32>
    %224 = vector.extract_strided_slice %221 {offsets = [0, 0], sizes = [17, 8], strides = [1, 1]} : vector<17x32xf32> to vector<17x8xf32>
    %225 = vector.extract_strided_slice %222 {offsets = [0, 0], sizes = [17, 8], strides = [1, 1]} : vector<17x32xf32> to vector<17x8xf32>
    %226 = vector.extract_strided_slice %223 {offsets = [0, 0], sizes = [17, 8], strides = [1, 1]} : vector<17x32xf32> to vector<17x8xf32>
    %cst_96 = arith.constant dense<0.000000e+00> : vector<17x17xf32>
    %227 = tpu.matmul %224, %225, %cst_96 {dimension_numbers = #tpu.dot_dimension_numbers<[1], [1], [0], [0], [0, 0, 1, 0], [], []>} : vector<17x8xf32>, vector<17x8xf32>, vector<17x17xf32> -> vector<17x17xf32>
    %cst_97 = arith.constant dense<0xFF800000> : vector<17xf32>
    %228 = vector.multi_reduction <maximumf>, %227, %cst_97 [1] : vector<17x17xf32> to vector<17xf32>
    %229 = vector.shape_cast %228 : vector<17xf32> to vector<17x1xf32>
    %230 = vector.broadcast %229 : vector<17x1xf32> to vector<17x17xf32>
    %231 = arith.subf %227, %230 : vector<17x17xf32>
    %232 = math.exp %231 : vector<17x17xf32>
    %cst_98 = arith.constant dense<0.000000e+00> : vector<17xf32>
    %233 = vector.multi_reduction <add>, %232, %cst_98 [1] : vector<17x17xf32> to vector<17xf32>
    %234 = vector.shape_cast %233 : vector<17xf32> to vector<17x1xf32>
    %235 = tpu.reciprocal %234 {approx = true} : vector<17x1xf32> -> vector<17x1xf32>
    %236 = vector.broadcast %235 : vector<17x1xf32> to vector<17x17xf32>
    %237 = arith.mulf %232, %236 : vector<17x17xf32>
    %cst_99 = arith.constant dense<0.000000e+00> : vector<17x8xf32>
    %238 = tpu.matmul %237, %226, %cst_99 {dimension_numbers = #tpu.dot_dimension_numbers<[1], [0], [0], [1], [0, 0, 1, 1], [], []>} : vector<17x17xf32>, vector<17x8xf32>, vector<17x8xf32> -> vector<17x8xf32>
    %239 = vector.extract_strided_slice %221 {offsets = [0, 8], sizes = [17, 8], strides = [1, 1]} : vector<17x32xf32> to vector<17x8xf32>
    %240 = vector.extract_strided_slice %222 {offsets = [0, 8], sizes = [17, 8], strides = [1, 1]} : vector<17x32xf32> to vector<17x8xf32>
    %241 = vector.extract_strided_slice %223 {offsets = [0, 8], sizes = [17, 8], strides = [1, 1]} : vector<17x32xf32> to vector<17x8xf32>
    %cst_100 = arith.constant dense<0.000000e+00> : vector<17x17xf32>
    %242 = tpu.matmul %239, %240, %cst_100 {dimension_numbers = #tpu.dot_dimension_numbers<[1], [1], [0], [0], [0, 0, 1, 0], [], []>} : vector<17x8xf32>, vector<17x8xf32>, vector<17x17xf32> -> vector<17x17xf32>
    %cst_101 = arith.constant dense<0xFF800000> : vector<17xf32>
    %243 = vector.multi_reduction <maximumf>, %242, %cst_101 [1] : vector<17x17xf32> to vector<17xf32>
    %244 = vector.shape_cast %243 : vector<17xf32> to vector<17x1xf32>
    %245 = vector.broadcast %244 : vector<17x1xf32> to vector<17x17xf32>
    %246 = arith.subf %242, %245 : vector<17x17xf32>
    %247 = math.exp %246 : vector<17x17xf32>
    %cst_102 = arith.constant dense<0.000000e+00> : vector<17xf32>
    %248 = vector.multi_reduction <add>, %247, %cst_102 [1] : vector<17x17xf32> to vector<17xf32>
    %249 = vector.shape_cast %248 : vector<17xf32> to vector<17x1xf32>
    %250 = tpu.reciprocal %249 {approx = true} : vector<17x1xf32> -> vector<17x1xf32>
    %251 = vector.broadcast %250 : vector<17x1xf32> to vector<17x17xf32>
    %252 = arith.mulf %247, %251 : vector<17x17xf32>
    %cst_103 = arith.constant dense<0.000000e+00> : vector<17x8xf32>
    %253 = tpu.matmul %252, %241, %cst_103 {dimension_numbers = #tpu.dot_dimension_numbers<[1], [0], [0], [1], [0, 0, 1, 1], [], []>} : vector<17x17xf32>, vector<17x8xf32>, vector<17x8xf32> -> vector<17x8xf32>
    %254 = vector.extract_strided_slice %221 {offsets = [0, 16], sizes = [17, 8], strides = [1, 1]} : vector<17x32xf32> to vector<17x8xf32>
    %255 = vector.extract_strided_slice %222 {offsets = [0, 16], sizes = [17, 8], strides = [1, 1]} : vector<17x32xf32> to vector<17x8xf32>
    %256 = vector.extract_strided_slice %223 {offsets = [0, 16], sizes = [17, 8], strides = [1, 1]} : vector<17x32xf32> to vector<17x8xf32>
    %cst_104 = arith.constant dense<0.000000e+00> : vector<17x17xf32>
    %257 = tpu.matmul %254, %255, %cst_104 {dimension_numbers = #tpu.dot_dimension_numbers<[1], [1], [0], [0], [0, 0, 1, 0], [], []>} : vector<17x8xf32>, vector<17x8xf32>, vector<17x17xf32> -> vector<17x17xf32>
    %cst_105 = arith.constant dense<0xFF800000> : vector<17xf32>
    %258 = vector.multi_reduction <maximumf>, %257, %cst_105 [1] : vector<17x17xf32> to vector<17xf32>
    %259 = vector.shape_cast %258 : vector<17xf32> to vector<17x1xf32>
    %260 = vector.broadcast %259 : vector<17x1xf32> to vector<17x17xf32>
    %261 = arith.subf %257, %260 : vector<17x17xf32>
    %262 = math.exp %261 : vector<17x17xf32>
    %cst_106 = arith.constant dense<0.000000e+00> : vector<17xf32>
    %263 = vector.multi_reduction <add>, %262, %cst_106 [1] : vector<17x17xf32> to vector<17xf32>
    %264 = vector.shape_cast %263 : vector<17xf32> to vector<17x1xf32>
    %265 = tpu.reciprocal %264 {approx = true} : vector<17x1xf32> -> vector<17x1xf32>
    %266 = vector.broadcast %265 : vector<17x1xf32> to vector<17x17xf32>
    %267 = arith.mulf %262, %266 : vector<17x17xf32>
    %cst_107 = arith.constant dense<0.000000e+00> : vector<17x8xf32>
    %268 = tpu.matmul %267, %256, %cst_107 {dimension_numbers = #tpu.dot_dimension_numbers<[1], [0], [0], [1], [0, 0, 1, 1], [], []>} : vector<17x17xf32>, vector<17x8xf32>, vector<17x8xf32> -> vector<17x8xf32>
    %269 = vector.extract_strided_slice %221 {offsets = [0, 24], sizes = [17, 8], strides = [1, 1]} : vector<17x32xf32> to vector<17x8xf32>
    %270 = vector.extract_strided_slice %222 {offsets = [0, 24], sizes = [17, 8], strides = [1, 1]} : vector<17x32xf32> to vector<17x8xf32>
    %271 = vector.extract_strided_slice %223 {offsets = [0, 24], sizes = [17, 8], strides = [1, 1]} : vector<17x32xf32> to vector<17x8xf32>
    %cst_108 = arith.constant dense<0.000000e+00> : vector<17x17xf32>
    %272 = tpu.matmul %269, %270, %cst_108 {dimension_numbers = #tpu.dot_dimension_numbers<[1], [1], [0], [0], [0, 0, 1, 0], [], []>} : vector<17x8xf32>, vector<17x8xf32>, vector<17x17xf32> -> vector<17x17xf32>
    %cst_109 = arith.constant dense<0xFF800000> : vector<17xf32>
    %273 = vector.multi_reduction <maximumf>, %272, %cst_109 [1] : vector<17x17xf32> to vector<17xf32>
    %274 = vector.shape_cast %273 : vector<17xf32> to vector<17x1xf32>
    %275 = vector.broadcast %274 : vector<17x1xf32> to vector<17x17xf32>
    %276 = arith.subf %272, %275 : vector<17x17xf32>
    %277 = math.exp %276 : vector<17x17xf32>
    %cst_110 = arith.constant dense<0.000000e+00> : vector<17xf32>
    %278 = vector.multi_reduction <add>, %277, %cst_110 [1] : vector<17x17xf32> to vector<17xf32>
    %279 = vector.shape_cast %278 : vector<17xf32> to vector<17x1xf32>
    %280 = tpu.reciprocal %279 {approx = true} : vector<17x1xf32> -> vector<17x1xf32>
    %281 = vector.broadcast %280 : vector<17x1xf32> to vector<17x17xf32>
    %282 = arith.mulf %277, %281 : vector<17x17xf32>
    %cst_111 = arith.constant dense<0.000000e+00> : vector<17x8xf32>
    %283 = tpu.matmul %282, %271, %cst_111 {dimension_numbers = #tpu.dot_dimension_numbers<[1], [0], [0], [1], [0, 0, 1, 1], [], []>} : vector<17x17xf32>, vector<17x8xf32>, vector<17x8xf32> -> vector<17x8xf32>
    %284 = tpu.concatenate %238, %253, %268, %283 in 1 : vector<17x8xf32>, vector<17x8xf32>, vector<17x8xf32>, vector<17x8xf32> -> vector<17x32xf32>
    %c0_112 = arith.constant 0 : index
    %c0_113 = arith.constant 0 : index
    %285 = vector.load %arg26[%c0_112, %c0_113] : memref<32x32xf32, #tpu.memory_space<vmem>>, vector<32x32xf32>
    %286 = arith.truncf %284 : vector<17x32xf32> to vector<17x32xbf16>
    %287 = arith.truncf %285 : vector<32x32xf32> to vector<32x32xbf16>
    %cst_114 = arith.constant dense<0.000000e+00> : vector<17x32xf32>
    %288 = tpu.matmul %286, %287, %cst_114 {dimension_numbers = #tpu.dot_dimension_numbers<[1], [0], [0], [1], [0, 0, 1, 1], [], []>} : vector<17x32xbf16>, vector<32x32xbf16>, vector<17x32xf32> -> vector<17x32xf32>
    %289 = arith.addf %178, %288 : vector<17x32xf32>
    %c0_115 = arith.constant 0 : index
    %c0_116 = arith.constant 0 : index
    %290 = vector.load %arg27[%c0_115, %c0_116] : memref<1x32xf32, #tpu.memory_space<vmem>>, vector<1x32xf32>
    %291 = vector.broadcast %290 : vector<1x32xf32> to vector<17x32xf32>
    %292 = arith.addf %289, %291 : vector<17x32xf32>
    %cst_117 = arith.constant dense<0.000000e+00> : vector<17xf32>
    %293 = vector.multi_reduction <add>, %292, %cst_117 [1] : vector<17x32xf32> to vector<17xf32>
    %294 = vector.shape_cast %293 : vector<17xf32> to vector<17x1xf32>
    %cst_118 = arith.constant 3.200000e+01 : f32
    %295 = vector.broadcast %cst_118 : f32 to vector<17x1xf32>
    %296 = arith.divf %294, %295 : vector<17x1xf32>
    %297 = vector.broadcast %296 : vector<17x1xf32> to vector<17x32xf32>
    %298 = arith.subf %292, %297 : vector<17x32xf32>
    %299 = arith.mulf %298, %298 : vector<17x32xf32>
    %cst_119 = arith.constant dense<0.000000e+00> : vector<17xf32>
    %300 = vector.multi_reduction <add>, %299, %cst_119 [1] : vector<17x32xf32> to vector<17xf32>
    %301 = vector.shape_cast %300 : vector<17xf32> to vector<17x1xf32>
    %cst_120 = arith.constant 3.200000e+01 : f32
    %302 = vector.broadcast %cst_120 : f32 to vector<17x1xf32>
    %303 = arith.divf %301, %302 : vector<17x1xf32>
    %304 = vector.broadcast %296 : vector<17x1xf32> to vector<17x32xf32>
    %305 = arith.subf %292, %304 : vector<17x32xf32>
    %cst_121 = arith.constant 9.99999997E-7 : f32
    %306 = vector.broadcast %cst_121 : f32 to vector<17x1xf32>
    %307 = arith.addf %303, %306 : vector<17x1xf32>
    %308 = math.rsqrt %307 : vector<17x1xf32>
    %309 = vector.broadcast %308 : vector<17x1xf32> to vector<17x32xf32>
    %310 = arith.mulf %305, %309 : vector<17x32xf32>
    %c0_122 = arith.constant 0 : index
    %c0_123 = arith.constant 0 : index
    %311 = vector.load %arg28[%c0_122, %c0_123] : memref<1x32xf32, #tpu.memory_space<vmem>>, vector<1x32xf32>
    %312 = vector.broadcast %311 : vector<1x32xf32> to vector<17x32xf32>
    %313 = arith.mulf %310, %312 : vector<17x32xf32>
    %c0_124 = arith.constant 0 : index
    %c0_125 = arith.constant 0 : index
    %314 = vector.load %arg29[%c0_124, %c0_125] : memref<1x32xf32, #tpu.memory_space<vmem>>, vector<1x32xf32>
    %315 = vector.broadcast %314 : vector<1x32xf32> to vector<17x32xf32>
    %316 = arith.addf %313, %315 : vector<17x32xf32>
    %c0_126 = arith.constant 0 : index
    %c0_127 = arith.constant 0 : index
    %317 = vector.load %arg30[%c0_126, %c0_127] : memref<32x128xf32, #tpu.memory_space<vmem>>, vector<32x128xf32>
    %318 = arith.truncf %316 : vector<17x32xf32> to vector<17x32xbf16>
    %319 = arith.truncf %317 : vector<32x128xf32> to vector<32x128xbf16>
    %cst_128 = arith.constant dense<0.000000e+00> : vector<17x128xf32>
    %320 = tpu.matmul %318, %319, %cst_128 {dimension_numbers = #tpu.dot_dimension_numbers<[1], [0], [0], [1], [0, 0, 1, 1], [], []>} : vector<17x32xbf16>, vector<32x128xbf16>, vector<17x128xf32> -> vector<17x128xf32>
    %c0_129 = arith.constant 0 : index
    %c0_130 = arith.constant 0 : index
    %321 = vector.load %arg31[%c0_129, %c0_130] : memref<1x128xf32, #tpu.memory_space<vmem>>, vector<1x128xf32>
    %322 = vector.broadcast %321 : vector<1x128xf32> to vector<17x128xf32>
    %323 = arith.addf %320, %322 : vector<17x128xf32>
    %324 = arith.mulf %323, %323 : vector<17x128xf32>
    %325 = arith.mulf %323, %324 : vector<17x128xf32>
    %cst_131 = arith.constant 4.471500e-02 : f32
    %326 = vector.broadcast %cst_131 : f32 to vector<17x128xf32>
    %327 = arith.mulf %326, %325 : vector<17x128xf32>
    %328 = arith.addf %323, %327 : vector<17x128xf32>
    %cst_132 = arith.constant 0.797884583 : f32
    %329 = vector.broadcast %cst_132 : f32 to vector<17x128xf32>
    %330 = arith.mulf %329, %328 : vector<17x128xf32>
    %331 = math.tanh %330 : vector<17x128xf32>
    %cst_133 = arith.constant 1.000000e+00 : f32
    %332 = vector.broadcast %cst_133 : f32 to vector<17x128xf32>
    %333 = arith.addf %332, %331 : vector<17x128xf32>
    %cst_134 = arith.constant 5.000000e-01 : f32
    %334 = vector.broadcast %cst_134 : f32 to vector<17x128xf32>
    %335 = arith.mulf %334, %333 : vector<17x128xf32>
    %336 = arith.mulf %323, %335 : vector<17x128xf32>
    %c0_135 = arith.constant 0 : index
    %c0_136 = arith.constant 0 : index
    %337 = vector.load %arg32[%c0_135, %c0_136] : memref<128x32xf32, #tpu.memory_space<vmem>>, vector<128x32xf32>
    %338 = arith.truncf %336 : vector<17x128xf32> to vector<17x128xbf16>
    %339 = arith.truncf %337 : vector<128x32xf32> to vector<128x32xbf16>
    %cst_137 = arith.constant dense<0.000000e+00> : vector<17x32xf32>
    %340 = tpu.matmul %338, %339, %cst_137 {dimension_numbers = #tpu.dot_dimension_numbers<[1], [0], [0], [1], [0, 0, 1, 1], [], []>} : vector<17x128xbf16>, vector<128x32xbf16>, vector<17x32xf32> -> vector<17x32xf32>
    %341 = arith.addf %292, %340 : vector<17x32xf32>
    %c0_138 = arith.constant 0 : index
    %c0_139 = arith.constant 0 : index
    %342 = vector.load %arg33[%c0_138, %c0_139] : memref<1x32xf32, #tpu.memory_space<vmem>>, vector<1x32xf32>
    %343 = vector.broadcast %342 : vector<1x32xf32> to vector<17x32xf32>
    %344 = arith.addf %341, %343 : vector<17x32xf32>
    %cst_140 = arith.constant dense<0.000000e+00> : vector<17xf32>
    %345 = vector.multi_reduction <add>, %344, %cst_140 [1] : vector<17x32xf32> to vector<17xf32>
    %346 = vector.shape_cast %345 : vector<17xf32> to vector<17x1xf32>
    %cst_141 = arith.constant 3.200000e+01 : f32
    %347 = vector.broadcast %cst_141 : f32 to vector<17x1xf32>
    %348 = arith.divf %346, %347 : vector<17x1xf32>
    %349 = vector.broadcast %348 : vector<17x1xf32> to vector<17x32xf32>
    %350 = arith.subf %344, %349 : vector<17x32xf32>
    %351 = arith.mulf %350, %350 : vector<17x32xf32>
    %cst_142 = arith.constant dense<0.000000e+00> : vector<17xf32>
    %352 = vector.multi_reduction <add>, %351, %cst_142 [1] : vector<17x32xf32> to vector<17xf32>
    %353 = vector.shape_cast %352 : vector<17xf32> to vector<17x1xf32>
    %cst_143 = arith.constant 3.200000e+01 : f32
    %354 = vector.broadcast %cst_143 : f32 to vector<17x1xf32>
    %355 = arith.divf %353, %354 : vector<17x1xf32>
    %356 = vector.broadcast %348 : vector<17x1xf32> to vector<17x32xf32>
    %357 = arith.subf %344, %356 : vector<17x32xf32>
    %cst_144 = arith.constant 9.99999997E-7 : f32
    %358 = vector.broadcast %cst_144 : f32 to vector<17x1xf32>
    %359 = arith.addf %355, %358 : vector<17x1xf32>
    %360 = math.rsqrt %359 : vector<17x1xf32>
    %361 = vector.broadcast %360 : vector<17x1xf32> to vector<17x32xf32>
    %362 = arith.mulf %357, %361 : vector<17x32xf32>
    %c0_145 = arith.constant 0 : index
    %c0_146 = arith.constant 0 : index
    %363 = vector.load %arg34[%c0_145, %c0_146] : memref<1x32xf32, #tpu.memory_space<vmem>>, vector<1x32xf32>
    %364 = vector.broadcast %363 : vector<1x32xf32> to vector<17x32xf32>
    %365 = arith.mulf %362, %364 : vector<17x32xf32>
    %c0_147 = arith.constant 0 : index
    %c0_148 = arith.constant 0 : index
    %366 = vector.load %arg35[%c0_147, %c0_148] : memref<1x32xf32, #tpu.memory_space<vmem>>, vector<1x32xf32>
    %367 = vector.broadcast %366 : vector<1x32xf32> to vector<17x32xf32>
    %368 = arith.addf %365, %367 : vector<17x32xf32>
    %369 = vector.extract_strided_slice %368 {offsets = [0, 0], sizes = [1, 32], strides = [1, 1]} : vector<17x32xf32> to vector<1x32xf32>
    %c0_149 = arith.constant 0 : index
    %c0_150 = arith.constant 0 : index
    %370 = vector.load %arg36[%c0_149, %c0_150] : memref<32x128xf32, #tpu.memory_space<vmem>>, vector<32x128xf32>
    %371 = arith.truncf %369 : vector<1x32xf32> to vector<1x32xbf16>
    %372 = arith.truncf %370 : vector<32x128xf32> to vector<32x128xbf16>
    %cst_151 = arith.constant dense<0.000000e+00> : vector<1x128xf32>
    %373 = tpu.matmul %371, %372, %cst_151 {dimension_numbers = #tpu.dot_dimension_numbers<[1], [0], [0], [1], [0, 0, 1, 1], [], []>} : vector<1x32xbf16>, vector<32x128xbf16>, vector<1x128xf32> -> vector<1x128xf32>
    %c0_152 = arith.constant 0 : index
    %c0_153 = arith.constant 0 : index
    %374 = vector.load %arg37[%c0_152, %c0_153] : memref<1x128xf32, #tpu.memory_space<vmem>>, vector<1x128xf32>
    %375 = arith.addf %373, %374 : vector<1x128xf32>
    %c0_154 = arith.constant 0 : index
    %c0_155 = arith.constant 0 : index
    %c0_156 = arith.constant 0 : index
    %376 = vector.load %arg38[%c0_154, %c0_155, %c0_156] : memref<1x1x128xf32, #tpu.memory_space<vmem>>, vector<1x1x128xf32>
    %377 = vector.shape_cast %376 : vector<1x1x128xf32> to vector<1x128xf32>
    %378 = vector.shape_cast %375 : vector<1x128xf32> to vector<1x1x128xf32>
    tpu.vector_store %arg38[%c0_154, %c0_155, %c0_156], %378 {strides = array<i32>} : memref<1x1x128xf32, #tpu.memory_space<vmem>>, vector<1x1x128xf32>,
    return
  }
  func.func @transform_0(%arg0: i32) -> (i32, i32, i32) {
    %c0_i32 = arith.constant 0 : i32
    %c0_i32_0 = arith.constant 0 : i32
    %c0_i32_1 = arith.constant 0 : i32
    return %arg0, %c0_i32, %c0_i32_0 : i32, i32, i32
  }
  func.func @transform_1(%arg0: i32) -> (i32, i32) {
    %c0_i32 = arith.constant 0 : i32
    %c0_i32_0 = arith.constant 0 : i32
    %c0_i32_1 = arith.constant 0 : i32
    return %c0_i32, %c0_i32_0 : i32, i32
  }
  func.func @transform_2(%arg0: i32) -> (i32, i32) {
    %c0_i32 = arith.constant 0 : i32
    %c0_i32_0 = arith.constant 0 : i32
    %c0_i32_1 = arith.constant 0 : i32
    return %c0_i32, %c0_i32_0 : i32, i32
  }
  func.func @transform_3(%arg0: i32) -> (i32, i32) {
    %c0_i32 = arith.constant 0 : i32
    %c0_i32_0 = arith.constant 0 : i32
    %c0_i32_1 = arith.constant 0 : i32
    return %c0_i32, %c0_i32_0 : i32, i32
  }
  func.func @transform_4(%arg0: i32) -> (i32, i32) {
    %c0_i32 = arith.constant 0 : i32
    %c0_i32_0 = arith.constant 0 : i32
    %c0_i32_1 = arith.constant 0 : i32
    return %c0_i32, %c0_i32_0 : i32, i32
  }
  func.func @transform_5(%arg0: i32) -> (i32, i32) {
    %c0_i32 = arith.constant 0 : i32
    %c0_i32_0 = arith.constant 0 : i32
    %c0_i32_1 = arith.constant 0 : i32
    return %c0_i32, %c0_i32_0 : i32, i32
  }
  func.func @transform_6(%arg0: i32) -> (i32, i32) {
    %c0_i32 = arith.constant 0 : i32
    %c0_i32_0 = arith.constant 0 : i32
    %c0_i32_1 = arith.constant 0 : i32
    return %c0_i32, %c0_i32_0 : i32, i32
  }
  func.func @transform_7(%arg0: i32) -> (i32, i32) {
    %c0_i32 = arith.constant 0 : i32
    %c0_i32_0 = arith.constant 0 : i32
    %c0_i32_1 = arith.constant 0 : i32
    return %c0_i32, %c0_i32_0 : i32, i32
  }
  func.func @transform_8(%arg0: i32) -> (i32, i32) {
    %c0_i32 = arith.constant 0 : i32
    %c0_i32_0 = arith.constant 0 : i32
    %c0_i32_1 = arith.constant 0 : i32
    return %c0_i32, %c0_i32_0 : i32, i32
  }
  func.func @transform_9(%arg0: i32) -> (i32, i32) {
    %c0_i32 = arith.constant 0 : i32
    %c0_i32_0 = arith.constant 0 : i32
    %c0_i32_1 = arith.constant 0 : i32
    return %c0_i32, %c0_i32_0 : i32, i32
  }
  func.func @transform_10(%arg0: i32) -> (i32, i32) {
    %c0_i32 = arith.constant 0 : i32
    %c0_i32_0 = arith.constant 0 : i32
    %c0_i32_1 = arith.constant 0 : i32
    return %c0_i32, %c0_i32_0 : i32, i32
  }
  func.func @transform_11(%arg0: i32) -> (i32, i32) {
    %c0_i32 = arith.constant 0 : i32
    %c0_i32_0 = arith.constant 0 : i32
    %c0_i32_1 = arith.constant 0 : i32
    return %c0_i32, %c0_i32_0 : i32, i32
  }
  func.func @transform_12(%arg0: i32) -> (i32, i32) {
    %c0_i32 = arith.constant 0 : i32
    %c0_i32_0 = arith.constant 0 : i32
    %c0_i32_1 = arith.constant 0 : i32
    return %c0_i32, %c0_i32_0 : i32, i32
  }
  func.func @transform_13(%arg0: i32) -> (i32, i32) {
    %c0_i32 = arith.constant 0 : i32
    %c0_i32_0 = arith.constant 0 : i32
    %c0_i32_1 = arith.constant 0 : i32
    return %c0_i32, %c0_i32_0 : i32, i32
  }
  func.func @transform_14(%arg0: i32) -> (i32, i32) {
    %c0_i32 = arith.constant 0 : i32
    %c0_i32_0 = arith.constant 0 : i32
    %c0_i32_1 = arith.constant 0 : i32
    return %c0_i32, %c0_i32_0 : i32, i32
  }
  func.func @transform_15(%arg0: i32) -> (i32, i32) {
    %c0_i32 = arith.constant 0 : i32
    %c0_i32_0 = arith.constant 0 : i32
    %c0_i32_1 = arith.constant 0 : i32
    return %c0_i32, %c0_i32_0 : i32, i32
  }
  func.func @transform_16(%arg0: i32) -> (i32, i32) {
    %c0_i32 = arith.constant 0 : i32
    %c0_i32_0 = arith.constant 0 : i32
    %c0_i32_1 = arith.constant 0 : i32
    return %c0_i32, %c0_i32_0 : i32, i32
  }
  func.func @transform_17(%arg0: i32) -> (i32, i32) {
    %c0_i32 = arith.constant 0 : i32
    %c0_i32_0 = arith.constant 0 : i32
    %c0_i32_1 = arith.constant 0 : i32
    return %c0_i32, %c0_i32_0 : i32, i32
  }
  func.func @transform_18(%arg0: i32) -> (i32, i32) {
    %c0_i32 = arith.constant 0 : i32
    %c0_i32_0 = arith.constant 0 : i32
    %c0_i32_1 = arith.constant 0 : i32
    return %c0_i32, %c0_i32_0 : i32, i32
  }
  func.func @transform_19(%arg0: i32) -> (i32, i32) {
    %c0_i32 = arith.constant 0 : i32
    %c0_i32_0 = arith.constant 0 : i32
    %c0_i32_1 = arith.constant 0 : i32
    return %c0_i32, %c0_i32_0 : i32, i32
  }
  func.func @transform_20(%arg0: i32) -> (i32, i32) {
    %c0_i32 = arith.constant 0 : i32
    %c0_i32_0 = arith.constant 0 : i32
    %c0_i32_1 = arith.constant 0 : i32
    return %c0_i32, %c0_i32_0 : i32, i32
  }
  func.func @transform_21(%arg0: i32) -> (i32, i32) {
    %c0_i32 = arith.constant 0 : i32
    %c0_i32_0 = arith.constant 0 : i32
    %c0_i32_1 = arith.constant 0 : i32
    return %c0_i32, %c0_i32_0 : i32, i32
  }
  func.func @transform_22(%arg0: i32) -> (i32, i32) {
    %c0_i32 = arith.constant 0 : i32
    %c0_i32_0 = arith.constant 0 : i32
    %c0_i32_1 = arith.constant 0 : i32
    return %c0_i32, %c0_i32_0 : i32, i32
  }
  func.func @transform_23(%arg0: i32) -> (i32, i32) {
    %c0_i32 = arith.constant 0 : i32
    %c0_i32_0 = arith.constant 0 : i32
    %c0_i32_1 = arith.constant 0 : i32
    return %c0_i32, %c0_i32_0 : i32, i32
  }
  func.func @transform_24(%arg0: i32) -> (i32, i32) {
    %c0_i32 = arith.constant 0 : i32
    %c0_i32_0 = arith.constant 0 : i32
    %c0_i32_1 = arith.constant 0 : i32
    return %c0_i32, %c0_i32_0 : i32, i32
  }
  func.func @transform_25(%arg0: i32) -> (i32, i32) {
    %c0_i32 = arith.constant 0 : i32
    %c0_i32_0 = arith.constant 0 : i32
    %c0_i32_1 = arith.constant 0 : i32
    return %c0_i32, %c0_i32_0 : i32, i32
  }
  func.func @transform_26(%arg0: i32) -> (i32, i32) {
    %c0_i32 = arith.constant 0 : i32
    %c0_i32_0 = arith.constant 0 : i32
    %c0_i32_1 = arith.constant 0 : i32
    return %c0_i32, %c0_i32_0 : i32, i32
  }
  func.func @transform_27(%arg0: i32) -> (i32, i32) {
    %c0_i32 = arith.constant 0 : i32
    %c0_i32_0 = arith.constant 0 : i32
    %c0_i32_1 = arith.constant 0 : i32
    return %c0_i32, %c0_i32_0 : i32, i32
  }
  func.func @transform_28(%arg0: i32) -> (i32, i32) {
    %c0_i32 = arith.constant 0 : i32
    %c0_i32_0 = arith.constant 0 : i32
    %c0_i32_1 = arith.constant 0 : i32
    return %c0_i32, %c0_i32_0 : i32, i32
  }
  func.func @transform_29(%arg0: i32) -> (i32, i32) {
    %c0_i32 = arith.constant 0 : i32
    %c0_i32_0 = arith.constant 0 : i32
    %c0_i32_1 = arith.constant 0 : i32
    return %c0_i32, %c0_i32_0 : i32, i32
  }
  func.func @transform_30(%arg0: i32) -> (i32, i32) {
    %c0_i32 = arith.constant 0 : i32
    %c0_i32_0 = arith.constant 0 : i32
    %c0_i32_1 = arith.constant 0 : i32
    return %c0_i32, %c0_i32_0 : i32, i32
  }
  func.func @transform_31(%arg0: i32) -> (i32, i32) {
    %c0_i32 = arith.constant 0 : i32
    %c0_i32_0 = arith.constant 0 : i32
    %c0_i32_1 = arith.constant 0 : i32
    return %c0_i32, %c0_i32_0 : i32, i32
  }
  func.func @transform_32(%arg0: i32) -> (i32, i32) {
    %c0_i32 = arith.constant 0 : i32
    %c0_i32_0 = arith.constant 0 : i32
    %c0_i32_1 = arith.constant 0 : i32
    return %c0_i32, %c0_i32_0 : i32, i32
  }
  func.func @transform_33(%arg0: i32) -> (i32, i32) {
    %c0_i32 = arith.constant 0 : i32
    %c0_i32_0 = arith.constant 0 : i32
    %c0_i32_1 = arith.constant 0 : i32
    return %c0_i32, %c0_i32_0 : i32, i32
  }
  func.func @transform_34(%arg0: i32) -> (i32, i32) {
    %c0_i32 = arith.constant 0 : i32
    %c0_i32_0 = arith.constant 0 : i32
    %c0_i32_1 = arith.constant 0 : i32
    return %c0_i32, %c0_i32_0 : i32, i32
  }
  func.func @transform_35(%arg0: i32) -> (i32, i32) {
    %c0_i32 = arith.constant 0 : i32
    %c0_i32_0 = arith.constant 0 : i32
    %c0_i32_1 = arith.constant 0 : i32
    return %c0_i32, %c0_i32_0 : i32, i32
  }
  func.func @transform_36(%arg0: i32) -> (i32, i32) {
    %c0_i32 = arith.constant 0 : i32
    %c0_i32_0 = arith.constant 0 : i32
    %c0_i32_1 = arith.constant 0 : i32
    return %c0_i32, %c0_i32_0 : i32, i32
  }
  func.func @transform_37(%arg0: i32) -> (i32, i32, i32) {
    %c0_i32 = arith.constant 0 : i32
    %c0_i32_0 = arith.constant 0 : i32
    %c0_i32_1 = arith.constant 0 : i32
    return %arg0, %c0_i32, %c0_i32_0 : i32, i32, i32
  }
}

</mosaic_0001>

<llo_original>
// kernel: lora_vit_timm_forward.1
$region0: #{lora_vit_timm_forward.1}
  #allocation0 [shape = 'u32[]', space=smem, size = 0x4, offset = 0x4, fixed_abs, tag = 'smem constant byte address 0x4 - core index']
  #allocation1 [shape = 'u32[144,128]{1,0:T(1,128)}', space=vmem, size = 0x12000, scoped, tag = 'internal scratch']
  %s0 = inlined_call_operand.smem [shape: u32[38], index: -1, kind: input, shape index: {}]
  %s1 = sld [smem:[%s0]]
  %s2 = scalar_lea.smem %s0, 1
  %s3 = sld [smem:[%s2]]
  %s4 = scalar_lea.smem %s0, 2
  %s5 = sld [smem:[%s4]]
  %s6 = scalar_lea.smem %s0, 3
  %s7 = sld [smem:[%s6]]
  %s8 = scalar_lea.smem %s0, 4
  %s9 = sld [smem:[%s8]]
  %s10 = scalar_lea.smem %s0, 5
  %s11 = sld [smem:[%s10]]
  %s12 = scalar_lea.smem %s0, 6
  %s13 = sld [smem:[%s12]]
  %s14 = scalar_lea.smem %s0, 7
  %s15 = sld [smem:[%s14]]
  %s16 = scalar_lea.smem %s0, 8
  %s17 = sld [smem:[%s16]]
  %s18 = scalar_lea.smem %s0, 9
  %s19 = sld [smem:[%s18]]
  %s20 = scalar_lea.smem %s0, 10
  %s21 = sld [smem:[%s20]]
  %s22 = scalar_lea.smem %s0, 11
  %s23 = sld [smem:[%s22]]
  %s24 = scalar_lea.smem %s0, 12
  %s25 = sld [smem:[%s24]]
  %s26 = scalar_lea.smem %s0, 13
  %s27 = sld [smem:[%s26]]
  %s28 = scalar_lea.smem %s0, 14
  %s29 = sld [smem:[%s28]]
  %s30 = scalar_lea.smem %s0, 15
  %s31 = sld [smem:[%s30]]
  %s32 = scalar_lea.smem %s0, 16
  %s33 = sld [smem:[%s32]]
  %s34 = scalar_lea.smem %s0, 17
  %s35 = sld [smem:[%s34]]
  %s36 = scalar_lea.smem %s0, 18
  %s37 = sld [smem:[%s36]]
  %s38 = scalar_lea.smem %s0, 19
  %s39 = sld [smem:[%s38]]
  %s40 = scalar_lea.smem %s0, 20
  %s41 = sld [smem:[%s40]]
  %s42 = scalar_lea.smem %s0, 21
  %s43 = sld [smem:[%s42]]
  %s44 = scalar_lea.smem %s0, 22
  %s45 = sld [smem:[%s44]]
  %s46 = scalar_lea.smem %s0, 23
  %s47 = sld [smem:[%s46]]
  %s48 = scalar_lea.smem %s0, 24
  %s49 = sld [smem:[%s48]]
  %s50 = scalar_lea.smem %s0, 25
  %s51 = sld [smem:[%s50]]
  %s52 = scalar_lea.smem %s0, 26
  %s53 = sld [smem:[%s52]]
  %s54 = scalar_lea.smem %s0, 27
  %s55 = sld [smem:[%s54]]
  %s56 = scalar_lea.smem %s0, 28
  %s57 = sld [smem:[%s56]]
  %s58 = scalar_lea.smem %s0, 29
  %s59 = sld [smem:[%s58]]
  %s60 = scalar_lea.smem %s0, 30
  %s61 = sld [smem:[%s60]]
  %s62 = scalar_lea.smem %s0, 31
  %s63 = sld [smem:[%s62]]
  %s64 = scalar_lea.smem %s0, 32
  %s65 = sld [smem:[%s64]]
  %s66 = scalar_lea.smem %s0, 33
  %s67 = sld [smem:[%s66]]
  %s68 = scalar_lea.smem %s0, 34
  %s69 = sld [smem:[%s68]]
  %s70 = scalar_lea.smem %s0, 35
  %s71 = sld [smem:[%s70]]
  %s72 = scalar_lea.smem %s0, 36
  %s73 = sld [smem:[%s72]]
  %s74 = scalar_lea.smem %s0, 37
  %s75 = sld [smem:[%s74]]
  %s76 = sld [smem:[#allocation0]]
  $region181: #{lora_vit_timm_forward.1} parent=0
    _
  %s78 = ssub.s32 1, %s76
  %s79 = scalar_select 0, %s78, %s76
  $region1: #{lora_vit_timm_forward.1} parent=0
    #allocation2 [shape = 'u8[1024]{0}', space=vmem, size = 0x400, scoped, tag = 'output window, operand 0']
    #allocation3 [shape = 's32[2]{0}', space=sflag, size = 0x8, scoped, tag = 'scoped memory for lora_vit_timm_forward.1']
    %80 = vsyncpa [#allocation3], 0
    %s81 = scalar_lea.sflag [#allocation3], 1
    %82 = vsyncpa %s81, 0
    loop: start=0, step=1, limit=4
    $region2: #{lora_vit_timm_forward.1} parent=1 // loop_pre_header
      _
    $region3: #{lora_vit_timm_forward.1} parent=1 // loop_header
      %s84 = sphi 0, %s88
      %p85 = scmp.ge.s32.totalorder %s84, 4
      %s94 = sphi 0, %s96
      %s97 = sphi 0, %s94
      %s98 = sphi 0, %s97
      %s114 = sphi 0, %s98
      %s118 = sphi 0, %s118
      %s120 = sphi 0, %s118
      %s121 = sphi 0, %s120
      %s135 = sphi 0, %s121
      %s139 = sphi 0, %s139
      %s141 = sphi 0, %s139
      %s142 = sphi 0, %s141
      %s156 = sphi 0, %s142
      %s160 = sphi 0, %s160
      %s162 = sphi 0, %s160
      %s163 = sphi 0, %s162
      %s177 = sphi 0, %s163
      %s181 = sphi 0, %s181
      %s183 = sphi 0, %s181
      %s184 = sphi 0, %s183
      %s198 = sphi 0, %s184
      %s202 = sphi 0, %s202
      %s204 = sphi 0, %s202
      %s205 = sphi 0, %s204
      %s219 = sphi 0, %s205
      %s223 = sphi 0, %s223
      %s225 = sphi 0, %s223
      %s226 = sphi 0, %s225
      %s240 = sphi 0, %s226
      %s244 = sphi 0, %s244
      %s246 = sphi 0, %s244
      %s247 = sphi 0, %s246
      %s261 = sphi 0, %s247
      %s265 = sphi 0, %s265
      %s267 = sphi 0, %s265
      %s268 = sphi 0, %s267
      %s282 = sphi 0, %s268
      %s286 = sphi 0, %s286
      %s288 = sphi 0, %s286
      %s289 = sphi 0, %s288
      %s303 = sphi 0, %s289
      %s307 = sphi 0, %s307
      %s309 = sphi 0, %s307
      %s310 = sphi 0, %s309
      %s324 = sphi 0, %s310
      %s328 = sphi 0, %s328
      %s330 = sphi 0, %s328
      %s331 = sphi 0, %s330
      %s345 = sphi 0, %s331
      %s349 = sphi 0, %s349
      %s351 = sphi 0, %s349
      %s352 = sphi 0, %s351
      %s366 = sphi 0, %s352
      %s370 = sphi 0, %s370
      %s372 = sphi 0, %s370
      %s373 = sphi 0, %s372
      %s387 = sphi 0, %s373
      %s391 = sphi 0, %s391
      %s393 = sphi 0, %s391
      %s394 = sphi 0, %s393
      %s408 = sphi 0, %s394
      %s412 = sphi 0, %s412
      %s414 = sphi 0, %s412
      %s415 = sphi 0, %s414
      %s429 = sphi 0, %s415
      %s433 = sphi 0, %s433
      %s435 = sphi 0, %s433
      %s436 = sphi 0, %s435
      %s450 = sphi 0, %s436
      %s454 = sphi 0, %s454
      %s456 = sphi 0, %s454
      %s457 = sphi 0, %s456
      %s471 = sphi 0, %s457
      %s475 = sphi 0, %s475
      %s477 = sphi 0, %s475
      %s478 = sphi 0, %s477
      %s492 = sphi 0, %s478
      %s496 = sphi 0, %s496
      %s498 = sphi 0, %s496
      %s499 = sphi 0, %s498
      %s513 = sphi 0, %s499
      %s517 = sphi 0, %s517
      %s519 = sphi 0, %s517
      %s520 = sphi 0, %s519
      %s534 = sphi 0, %s520
      %s538 = sphi 0, %s538
      %s540 = sphi 0, %s538
      %s541 = sphi 0, %s540
      %s555 = sphi 0, %s541
      %s559 = sphi 0, %s559
      %s561 = sphi 0, %s559
      %s562 = sphi 0, %s561
      %s576 = sphi 0, %s562
      %s580 = sphi 0, %s580
      %s582 = sphi 0, %s580
      %s583 = sphi 0, %s582
      %s597 = sphi 0, %s583
      %s601 = sphi 0, %s601
      %s603 = sphi 0, %s601
      %s604 = sphi 0, %s603
      %s618 = sphi 0, %s604
      %s622 = sphi 0, %s622
      %s624 = sphi 0, %s622
      %s625 = sphi 0, %s624
      %s639 = sphi 0, %s625
      %s643 = sphi 0, %s643
      %s645 = sphi 0, %s643
      %s646 = sphi 0, %s645
      %s660 = sphi 0, %s646
      %s664 = sphi 0, %s664
      %s666 = sphi 0, %s664
      %s667 = sphi 0, %s666
      %s681 = sphi 0, %s667
      %s685 = sphi 0, %s685
      %s687 = sphi 0, %s685
      %s688 = sphi 0, %s687
      %s702 = sphi 0, %s688
      %s706 = sphi 0, %s706
      %s708 = sphi 0, %s706
      %s709 = sphi 0, %s708
      %s723 = sphi 0, %s709
      %s727 = sphi 0, %s727
      %s729 = sphi 0, %s727
      %s730 = sphi 0, %s729
      %s744 = sphi 0, %s730
      %s748 = sphi 0, %s748
      %s750 = sphi 0, %s748
      %s751 = sphi 0, %s750
      %s765 = sphi 0, %s751
      %s769 = sphi 0, %s769
      %s771 = sphi 0, %s769
      %s772 = sphi 0, %s771
      %s786 = sphi 0, %s772
      %s790 = sphi 0, %s790
      %s792 = sphi 0, %s790
      %s793 = sphi 0, %s792
      %s807 = sphi 0, %s793
      %s811 = sphi 0, %s811
      %s813 = sphi 0, %s811
      %s814 = sphi 0, %s813
      %s828 = sphi 0, %s814
      %s832 = sphi 0, %s832
      %s834 = sphi 0, %s832
      %s835 = sphi 0, %s834
      %s849 = sphi 0, %s835
      %s853 = sphi 0, %s853
      %s855 = sphi 0, %s853
      %s856 = sphi 0, %s855
      %s870 = sphi 0, %s856
      %s876 = sphi 0, %s878
      %s879 = sphi 0, %s876
      %s880 = sphi 0, %s879
      %s896 = sphi 0, %s880
    $region4: #{lora_vit_timm_forward.1} parent=1 // loop_header_branch
      %87 = sbr.rel (%p85) target = $region8
    $region5: #{lora_vit_timm_forward.1} parent=1 // loop_body
      %s89 = ssub.s32 %s84, 1
      %s90 = ssub.s32 %s84, 2
      %s91 = sadd.s32 %s84, 1
      %s92 = ssub.s32 %s84, %s91
      %p93 = scmp.eq.s32.totalorder %s92, 0
      %s95 = sadd.s32 %s94, 1
      %s96 = scalar_select %p93, %s94, %s95
      %p99 = pneg %p93
      %p100 = scmp.eq.s32.totalorder %s84, 1
      %p101 = por %p99, %p100
      %p102 = scmp.ne.s32.totalorder %s94, %s97
      %p103 = scmp.eq.s32.totalorder %s84, 0
      %p104 = por %p102, %p103
      %p105 = scmp.ne.s32.totalorder %s94, %s97
      %p106 = scmp.eq.s32.totalorder %s89, 1
      %p107 = por %p105, %p106
      %p108 = scmp.ne.s32.totalorder %s97, %s98
      %p109 = scmp.eq.s32.totalorder %s89, 0
      %p110 = por %p108, %p109
      %p111 = scmp.ne.s32.totalorder %s97, %s98
      %p112 = scmp.eq.s32.totalorder %s90, 1
      %p113 = por %p111, %p112
      %p115 = scmp.ne.s32.totalorder %s98, %s114
      %p116 = scmp.eq.s32.totalorder %s90, 0
      %p117 = por %p115, %p116
      %s119 = sadd.s32 %s118, 1
      %p122 = scmp.eq.s32.totalorder %s84, 1
      %p123 = scmp.ne.s32.totalorder %s118, %s120
      %p124 = scmp.eq.s32.totalorder %s84, 0
      %p125 = por %p123, %p124
      %p126 = scmp.ne.s32.totalorder %s118, %s120
      %p127 = scmp.eq.s32.totalorder %s89, 1
      %p128 = por %p126, %p127
      %p129 = scmp.ne.s32.totalorder %s120, %s121
      %p130 = scmp.eq.s32.totalorder %s89, 0
      %p131 = por %p129, %p130
      %p132 = scmp.ne.s32.totalorder %s120, %s121
      %p133 = scmp.eq.s32.totalorder %s90, 1
      %p134 = por %p132, %p133
      %p136 = scmp.ne.s32.totalorder %s121, %s135
      %p137 = scmp.eq.s32.totalorder %s90, 0
      %p138 = por %p136, %p137
      %s140 = sadd.s32 %s139, 1
      %p143 = scmp.eq.s32.totalorder %s84, 1
      %p144 = scmp.ne.s32.totalorder %s139, %s141
      %p145 = scmp.eq.s32.totalorder %s84, 0
      %p146 = por %p144, %p145
      %p147 = scmp.ne.s32.totalorder %s139, %s141
      %p148 = scmp.eq.s32.totalorder %s89, 1
      %p149 = por %p147, %p148
      %p150 = scmp.ne.s32.totalorder %s141, %s142
      %p151 = scmp.eq.s32.totalorder %s89, 0
      %p152 = por %p150, %p151
      %p153 = scmp.ne.s32.totalorder %s141, %s142
      %p154 = scmp.eq.s32.totalorder %s90, 1
      %p155 = por %p153, %p154
      %p157 = scmp.ne.s32.totalorder %s142, %s156
      %p158 = scmp.eq.s32.totalorder %s90, 0
      %p159 = por %p157, %p158
      %s161 = sadd.s32 %s160, 1
      %p164 = scmp.eq.s32.totalorder %s84, 1
      %p165 = scmp.ne.s32.totalorder %s160, %s162
      %p166 = scmp.eq.s32.totalorder %s84, 0
      %p167 = por %p165, %p166
      %p168 = scmp.ne.s32.totalorder %s160, %s162
      %p169 = scmp.eq.s32.totalorder %s89, 1
      %p170 = por %p168, %p169
      %p171 = scmp.ne.s32.totalorder %s162, %s163
      %p172 = scmp.eq.s32.totalorder %s89, 0
      %p173 = por %p171, %p172
      %p174 = scmp.ne.s32.totalorder %s162, %s163
      %p175 = scmp.eq.s32.totalorder %s90, 1
      %p176 = por %p174, %p175
      %p178 = scmp.ne.s32.totalorder %s163, %s177
      %p179 = scmp.eq.s32.totalorder %s90, 0
      %p180 = por %p178, %p179
      %s182 = sadd.s32 %s181, 1
      %p185 = scmp.eq.s32.totalorder %s84, 1
      %p186 = scmp.ne.s32.totalorder %s181, %s183
      %p187 = scmp.eq.s32.totalorder %s84, 0
      %p188 = por %p186, %p187
      %p189 = scmp.ne.s32.totalorder %s181, %s183
      %p190 = scmp.eq.s32.totalorder %s89, 1
      %p191 = por %p189, %p190
      %p192 = scmp.ne.s32.totalorder %s183, %s184
      %p193 = scmp.eq.s32.totalorder %s89, 0
      %p194 = por %p192, %p193
      %p195 = scmp.ne.s32.totalorder %s183, %s184
      %p196 = scmp.eq.s32.totalorder %s90, 1
      %p197 = por %p195, %p196
      %p199 = scmp.ne.s32.totalorder %s184, %s198
      %p200 = scmp.eq.s32.totalorder %s90, 0
      %p201 = por %p199, %p200
      %s203 = sadd.s32 %s202, 1
      %p206 = scmp.eq.s32.totalorder %s84, 1
      %p207 = scmp.ne.s32.totalorder %s202, %s204
      %p208 = scmp.eq.s32.totalorder %s84, 0
      %p209 = por %p207, %p208
      %p210 = scmp.ne.s32.totalorder %s202, %s204
      %p211 = scmp.eq.s32.totalorder %s89, 1
      %p212 = por %p210, %p211
      %p213 = scmp.ne.s32.totalorder %s204, %s205
      %p214 = scmp.eq.s32.totalorder %s89, 0
      %p215 = por %p213, %p214
      %p216 = scmp.ne.s32.totalorder %s204, %s205
      %p217 = scmp.eq.s32.totalorder %s90, 1
      %p218 = por %p216, %p217
      %p220 = scmp.ne.s32.totalorder %s205, %s219
      %p221 = scmp.eq.s32.totalorder %s90, 0
      %p222 = por %p220, %p221
      %s224 = sadd.s32 %s223, 1
      %p227 = scmp.eq.s32.totalorder %s84, 1
      %p228 = scmp.ne.s32.totalorder %s223, %s225
      %p229 = scmp.eq.s32.totalorder %s84, 0
      %p230 = por %p228, %p229
      %p231 = scmp.ne.s32.totalorder %s223, %s225
      %p232 = scmp.eq.s32.totalorder %s89, 1
      %p233 = por %p231, %p232
      %p234 = scmp.ne.s32.totalorder %s225, %s226
      %p235 = scmp.eq.s32.totalorder %s89, 0
      %p236 = por %p234, %p235
      %p237 = scmp.ne.s32.totalorder %s225, %s226
      %p238 = scmp.eq.s32.totalorder %s90, 1
      %p239 = por %p237, %p238
      %p241 = scmp.ne.s32.totalorder %s226, %s240
      %p242 = scmp.eq.s32.totalorder %s90, 0
      %p243 = por %p241, %p242
      %s245 = sadd.s32 %s244, 1
      %p248 = scmp.eq.s32.totalorder %s84, 1
      %p249 = scmp.ne.s32.totalorder %s244, %s246
      %p250 = scmp.eq.s32.totalorder %s84, 0
      %p251 = por %p249, %p250
      %p252 = scmp.ne.s32.totalorder %s244, %s246
      %p253 = scmp.eq.s32.totalorder %s89, 1
      %p254 = por %p252, %p253
      %p255 = scmp.ne.s32.totalorder %s246, %s247
      %p256 = scmp.eq.s32.totalorder %s89, 0
      %p257 = por %p255, %p256
      %p258 = scmp.ne.s32.totalorder %s246, %s247
      %p259 = scmp.eq.s32.totalorder %s90, 1
      %p260 = por %p258, %p259
      %p262 = scmp.ne.s32.totalorder %s247, %s261
      %p263 = scmp.eq.s32.totalorder %s90, 0
      %p264 = por %p262, %p263
      %s266 = sadd.s32 %s265, 1
      %p269 = scmp.eq.s32.totalorder %s84, 1
      %p270 = scmp.ne.s32.totalorder %s265, %s267
      %p271 = scmp.eq.s32.totalorder %s84, 0
      %p272 = por %p270, %p271
      %p273 = scmp.ne.s32.totalorder %s265, %s267
      %p274 = scmp.eq.s32.totalorder %s89, 1
      %p275 = por %p273, %p274
      %p276 = scmp.ne.s32.totalorder %s267, %s268
      %p277 = scmp.eq.s32.totalorder %s89, 0
      %p278 = por %p276, %p277
      %p279 = scmp.ne.s32.totalorder %s267, %s268
      %p280 = scmp.eq.s32.totalorder %s90, 1
      %p281 = por %p279, %p280
      %p283 = scmp.ne.s32.totalorder %s268, %s282
      %p284 = scmp.eq.s32.totalorder %s90, 0
      %p285 = por %p283, %p284
      %s287 = sadd.s32 %s286, 1
      %p290 = scmp.eq.s32.totalorder %s84, 1
      %p291 = scmp.ne.s32.totalorder %s286, %s288
      %p292 = scmp.eq.s32.totalorder %s84, 0
      %p293 = por %p291, %p292
      %p294 = scmp.ne.s32.totalorder %s286, %s288
      %p295 = scmp.eq.s32.totalorder %s89, 1
      %p296 = por %p294, %p295
      %p297 = scmp.ne.s32.totalorder %s288, %s289
      %p298 = scmp.eq.s32.totalorder %s89, 0
      %p299 = por %p297, %p298
      %p300 = scmp.ne.s32.totalorder %s288, %s289
      %p301 = scmp.eq.s32.totalorder %s90, 1
      %p302 = por %p300, %p301
      %p304 = scmp.ne.s32.totalorder %s289, %s303
      %p305 = scmp.eq.s32.totalorder %s90, 0
      %p306 = por %p304, %p305
      %s308 = sadd.s32 %s307, 1
      %p311 = scmp.eq.s32.totalorder %s84, 1
      %p312 = scmp.ne.s32.totalorder %s307, %s309
      %p313 = scmp.eq.s32.totalorder %s84, 0
      %p314 = por %p312, %p313
      %p315 = scmp.ne.s32.totalorder %s307, %s309
      %p316 = scmp.eq.s32.totalorder %s89, 1
      %p317 = por %p315, %p316
      %p318 = scmp.ne.s32.totalorder %s309, %s310
      %p319 = scmp.eq.s32.totalorder %s89, 0
      %p320 = por %p318, %p319
      %p321 = scmp.ne.s32.totalorder %s309, %s310
      %p322 = scmp.eq.s32.totalorder %s90, 1
      %p323 = por %p321, %p322
      %p325 = scmp.ne.s32.totalorder %s310, %s324
      %p326 = scmp.eq.s32.totalorder %s90, 0
      %p327 = por %p325, %p326
      %s329 = sadd.s32 %s328, 1
      %p332 = scmp.eq.s32.totalorder %s84, 1
      %p333 = scmp.ne.s32.totalorder %s328, %s330
      %p334 = scmp.eq.s32.totalorder %s84, 0
      %p335 = por %p333, %p334
      %p336 = scmp.ne.s32.totalorder %s328, %s330
      %p337 = scmp.eq.s32.totalorder %s89, 1
      %p338 = por %p336, %p337
      %p339 = scmp.ne.s32.totalorder %s330, %s331
      %p340 = scmp.eq.s32.totalorder %s89, 0
      %p341 = por %p339, %p340
      %p342 = scmp.ne.s32.totalorder %s330, %s331
      %p343 = scmp.eq.s32.totalorder %s90, 1
      %p344 = por %p342, %p343
      %p346 = scmp.ne.s32.totalorder %s331, %s345
      %p347 = scmp.eq.s32.totalorder %s90, 0
      %p348 = por %p346, %p347
      %s350 = sadd.s32 %s349, 1
      %p353 = scmp.eq.s32.totalorder %s84, 1
      %p354 = scmp.ne.s32.totalorder %s349, %s351
      %p355 = scmp.eq.s32.totalorder %s84, 0
      %p356 = por %p354, %p355
      %p357 = scmp.ne.s32.totalorder %s349, %s351
      %p358 = scmp.eq.s32.totalorder %s89, 1
      %p359 = por %p357, %p358
      %p360 = scmp.ne.s32.totalorder %s351, %s352
      %p361 = scmp.eq.s32.totalorder %s89, 0
      %p362 = por %p360, %p361
      %p363 = scmp.ne.s32.totalorder %s351, %s352
      %p364 = scmp.eq.s32.totalorder %s90, 1
      %p365 = por %p363, %p364
      %p367 = scmp.ne.s32.totalorder %s352, %s366
      %p368 = scmp.eq.s32.totalorder %s90, 0
      %p369 = por %p367, %p368
      %s371 = sadd.s32 %s370, 1
      %p374 = scmp.eq.s32.totalorder %s84, 1
      %p375 = scmp.ne.s32.totalorder %s370, %s372
      %p376 = scmp.eq.s32.totalorder %s84, 0
      %p377 = por %p375, %p376
      %p378 = scmp.ne.s32.totalorder %s370, %s372
      %p379 = scmp.eq.s32.totalorder %s89, 1
      %p380 = por %p378, %p379
      %p381 = scmp.ne.s32.totalorder %s372, %s373
      %p382 = scmp.eq.s32.totalorder %s89, 0
      %p383 = por %p381, %p382
      %p384 = scmp.ne.s32.totalorder %s372, %s373
      %p385 = scmp.eq.s32.totalorder %s90, 1
      %p386 = por %p384, %p385
      %p388 = scmp.ne.s32.totalorder %s373, %s387
      %p389 = scmp.eq.s32.totalorder %s90, 0
      %p390 = por %p388, %p389
      %s392 = sadd.s32 %s391, 1
      %p395 = scmp.eq.s32.totalorder %s84, 1
      %p396 = scmp.ne.s32.totalorder %s391, %s393
      %p397 = scmp.eq.s32.totalorder %s84, 0
      %p398 = por %p396, %p397
      %p399 = scmp.ne.s32.totalorder %s391, %s393
      %p400 = scmp.eq.s32.totalorder %s89, 1
      %p401 = por %p399, %p400
      %p402 = scmp.ne.s32.totalorder %s393, %s394
      %p403 = scmp.eq.s32.totalorder %s89, 0
      %p404 = por %p402, %p403
      %p405 = scmp.ne.s32.totalorder %s393, %s394
      %p406 = scmp.eq.s32.totalorder %s90, 1
      %p407 = por %p405, %p406
      %p409 = scmp.ne.s32.totalorder %s394, %s408
      %p410 = scmp.eq.s32.totalorder %s90, 0
      %p411 = por %p409, %p410
      %s413 = sadd.s32 %s412, 1
      %p416 = scmp.eq.s32.totalorder %s84, 1
      %p417 = scmp.ne.s32.totalorder %s412, %s414
      %p418 = scmp.eq.s32.totalorder %s84, 0
      %p419 = por %p417, %p418
      %p420 = scmp.ne.s32.totalorder %s412, %s414
      %p421 = scmp.eq.s32.totalorder %s89, 1
      %p422 = por %p420, %p421
      %p423 = scmp.ne.s32.totalorder %s414, %s415
      %p424 = scmp.eq.s32.totalorder %s89, 0
      %p425 = por %p423, %p424
      %p426 = scmp.ne.s32.totalorder %s414, %s415
      %p427 = scmp.eq.s32.totalorder %s90, 1
      %p428 = por %p426, %p427
      %p430 = scmp.ne.s32.totalorder %s415, %s429
      %p431 = scmp.eq.s32.totalorder %s90, 0
      %p432 = por %p430, %p431
      %s434 = sadd.s32 %s433, 1
      %p437 = scmp.eq.s32.totalorder %s84, 1
      %p438 = scmp.ne.s32.totalorder %s433, %s435
      %p439 = scmp.eq.s32.totalorder %s84, 0
      %p440 = por %p438, %p439
      %p441 = scmp.ne.s32.totalorder %s433, %s435
      %p442 = scmp.eq.s32.totalorder %s89, 1
      %p443 = por %p441, %p442
      %p444 = scmp.ne.s32.totalorder %s435, %s436
      %p445 = scmp.eq.s32.totalorder %s89, 0
      %p446 = por %p444, %p445
      %p447 = scmp.ne.s32.totalorder %s435, %s436
      %p448 = scmp.eq.s32.totalorder %s90, 1
      %p449 = por %p447, %p448
      %p451 = scmp.ne.s32.totalorder %s436, %s450
      %p452 = scmp.eq.s32.totalorder %s90, 0
      %p453 = por %p451, %p452
      %s455 = sadd.s32 %s454, 1
      %p458 = scmp.eq.s32.totalorder %s84, 1
      %p459 = scmp.ne.s32.totalorder %s454, %s456
      %p460 = scmp.eq.s32.totalorder %s84, 0
      %p461 = por %p459, %p460
      %p462 = scmp.ne.s32.totalorder %s454, %s456
      %p463 = scmp.eq.s32.totalorder %s89, 1
      %p464 = por %p462, %p463
      %p465 = scmp.ne.s32.totalorder %s456, %s457
      %p466 = scmp.eq.s32.totalorder %s89, 0
      %p467 = por %p465, %p466
      %p468 = scmp.ne.s32.totalorder %s456, %s457
      %p469 = scmp.eq.s32.totalorder %s90, 1
      %p470 = por %p468, %p469
      %p472 = scmp.ne.s32.totalorder %s457, %s471
      %p473 = scmp.eq.s32.totalorder %s90, 0
      %p474 = por %p472, %p473
      %s476 = sadd.s32 %s475, 1
      %p479 = scmp.eq.s32.totalorder %s84, 1
      %p480 = scmp.ne.s32.totalorder %s475, %s477
      %p481 = scmp.eq.s32.totalorder %s84, 0
      %p482 = por %p480, %p481
      %p483 = scmp.ne.s32.totalorder %s475, %s477
      %p484 = scmp.eq.s32.totalorder %s89, 1
      %p485 = por %p483, %p484
      %p486 = scmp.ne.s32.totalorder %s477, %s478
      %p487 = scmp.eq.s32.totalorder %s89, 0
      %p488 = por %p486, %p487
      %p489 = scmp.ne.s32.totalorder %s477, %s478
      %p490 = scmp.eq.s32.totalorder %s90, 1
      %p491 = por %p489, %p490
      %p493 = scmp.ne.s32.totalorder %s478, %s492
      %p494 = scmp.eq.s32.totalorder %s90, 0
      %p495 = por %p493, %p494
      %s497 = sadd.s32 %s496, 1
      %p500 = scmp.eq.s32.totalorder %s84, 1
      %p501 = scmp.ne.s32.totalorder %s496, %s498
      %p502 = scmp.eq.s32.totalorder %s84, 0
      %p503 = por %p501, %p502
      %p504 = scmp.ne.s32.totalorder %s496, %s498
      %p505 = scmp.eq.s32.totalorder %s89, 1
      %p506 = por %p504, %p505
      %p507 = scmp.ne.s32.totalorder %s498, %s499
      %p508 = scmp.eq.s32.totalorder %s89, 0
      %p509 = por %p507, %p508
      %p510 = scmp.ne.s32.totalorder %s498, %s499
      %p511 = scmp.eq.s32.totalorder %s90, 1
      %p512 = por %p510, %p511
      %p514 = scmp.ne.s32.totalorder %s499, %s513
      %p515 = scmp.eq.s32.totalorder %s90, 0
      %p516 = por %p514, %p515
      %s518 = sadd.s32 %s517, 1
      %p521 = scmp.eq.s32.totalorder %s84, 1
      %p522 = scmp.ne.s32.totalorder %s517, %s519
      %p523 = scmp.eq.s32.totalorder %s84, 0
      %p524 = por %p522, %p523
      %p525 = scmp.ne.s32.totalorder %s517, %s519
      %p526 = scmp.eq.s32.totalorder %s89, 1
      %p527 = por %p525, %p526
      %p528 = scmp.ne.s32.totalorder %s519, %s520
      %p529 = scmp.eq.s32.totalorder %s89, 0
      %p530 = por %p528, %p529
      %p531 = scmp.ne.s32.totalorder %s519, %s520
      %p532 = scmp.eq.s32.totalorder %s90, 1
      %p533 = por %p531, %p532
      %p535 = scmp.ne.s32.totalorder %s520, %s534
      %p536 = scmp.eq.s32.totalorder %s90, 0
      %p537 = por %p535, %p536
      %s539 = sadd.s32 %s538, 1
      %p542 = scmp.eq.s32.totalorder %s84, 1
      %p543 = scmp.ne.s32.totalorder %s538, %s540
      %p544 = scmp.eq.s32.totalorder %s84, 0
      %p545 = por %p543, %p544
      %p546 = scmp.ne.s32.totalorder %s538, %s540
      %p547 = scmp.eq.s32.totalorder %s89, 1
      %p548 = por %p546, %p547
      %p549 = scmp.ne.s32.totalorder %s540, %s541
      %p550 = scmp.eq.s32.totalorder %s89, 0
      %p551 = por %p549, %p550
      %p552 = scmp.ne.s32.totalorder %s540, %s541
      %p553 = scmp.eq.s32.totalorder %s90, 1
      %p554 = por %p552, %p553
      %p556 = scmp.ne.s32.totalorder %s541, %s555
      %p557 = scmp.eq.s32.totalorder %s90, 0
      %p558 = por %p556, %p557
      %s560 = sadd.s32 %s559, 1
      %p563 = scmp.eq.s32.totalorder %s84, 1
      %p564 = scmp.ne.s32.totalorder %s559, %s561
      %p565 = scmp.eq.s32.totalorder %s84, 0
      %p566 = por %p564, %p565
      %p567 = scmp.ne.s32.totalorder %s559, %s561
      %p568 = scmp.eq.s32.totalorder %s89, 1
      %p569 = por %p567, %p568
      %p570 = scmp.ne.s32.totalorder %s561, %s562
      %p571 = scmp.eq.s32.totalorder %s89, 0
      %p572 = por %p570, %p571
      %p573 = scmp.ne.s32.totalorder %s561, %s562
      %p574 = scmp.eq.s32.totalorder %s90, 1
      %p575 = por %p573, %p574
      %p577 = scmp.ne.s32.totalorder %s562, %s576
      %p578 = scmp.eq.s32.totalorder %s90, 0
      %p579 = por %p577, %p578
      %s581 = sadd.s32 %s580, 1
      %p584 = scmp.eq.s32.totalorder %s84, 1
      %p585 = scmp.ne.s32.totalorder %s580, %s582
      %p586 = scmp.eq.s32.totalorder %s84, 0
      %p587 = por %p585, %p586
      %p588 = scmp.ne.s32.totalorder %s580, %s582
      %p589 = scmp.eq.s32.totalorder %s89, 1
      %p590 = por %p588, %p589
      %p591 = scmp.ne.s32.totalorder %s582, %s583
      %p592 = scmp.eq.s32.totalorder %s89, 0
      %p593 = por %p591, %p592
      %p594 = scmp.ne.s32.totalorder %s582, %s583
      %p595 = scmp.eq.s32.totalorder %s90, 1
      %p596 = por %p594, %p595
      %p598 = scmp.ne.s32.totalorder %s583, %s597
      %p599 = scmp.eq.s32.totalorder %s90, 0
      %p600 = por %p598, %p599
      %s602 = sadd.s32 %s601, 1
      %p605 = scmp.eq.s32.totalorder %s84, 1
      %p606 = scmp.ne.s32.totalorder %s601, %s603
      %p607 = scmp.eq.s32.totalorder %s84, 0
      %p608 = por %p606, %p607
      %p609 = scmp.ne.s32.totalorder %s601, %s603
      %p610 = scmp.eq.s32.totalorder %s89, 1
      %p611 = por %p609, %p610
      %p612 = scmp.ne.s32.totalorder %s603, %s604
      %p613 = scmp.eq.s32.totalorder %s89, 0
      %p614 = por %p612, %p613
      %p615 = scmp.ne.s32.totalorder %s603, %s604
      %p616 = scmp.eq.s32.totalorder %s90, 1
      %p617 = por %p615, %p616
      %p619 = scmp.ne.s32.totalorder %s604, %s618
      %p620 = scmp.eq.s32.totalorder %s90, 0
      %p621 = por %p619, %p620
      %s623 = sadd.s32 %s622, 1
      %p626 = scmp.eq.s32.totalorder %s84, 1
      %p627 = scmp.ne.s32.totalorder %s622, %s624
      %p628 = scmp.eq.s32.totalorder %s84, 0
      %p629 = por %p627, %p628
      %p630 = scmp.ne.s32.totalorder %s622, %s624
      %p631 = scmp.eq.s32.totalorder %s89, 1
      %p632 = por %p630, %p631
      %p633 = scmp.ne.s32.totalorder %s624, %s625
      %p634 = scmp.eq.s32.totalorder %s89, 0
      %p635 = por %p633, %p634
      %p636 = scmp.ne.s32.totalorder %s624, %s625
      %p637 = scmp.eq.s32.totalorder %s90, 1
      %p638 = por %p636, %p637
      %p640 = scmp.ne.s32.totalorder %s625, %s639
      %p641 = scmp.eq.s32.totalorder %s90, 0
      %p642 = por %p640, %p641
      %s644 = sadd.s32 %s643, 1
      %p647 = scmp.eq.s32.totalorder %s84, 1
      %p648 = scmp.ne.s32.totalorder %s643, %s645
      %p649 = scmp.eq.s32.totalorder %s84, 0
      %p650 = por %p648, %p649
      %p651 = scmp.ne.s32.totalorder %s643, %s645
      %p652 = scmp.eq.s32.totalorder %s89, 1
      %p653 = por %p651, %p652
      %p654 = scmp.ne.s32.totalorder %s645, %s646
      %p655 = scmp.eq.s32.totalorder %s89, 0
      %p656 = por %p654, %p655
      %p657 = scmp.ne.s32.totalorder %s645, %s646
      %p658 = scmp.eq.s32.totalorder %s90, 1
      %p659 = por %p657, %p658
      %p661 = scmp.ne.s32.totalorder %s646, %s660
      %p662 = scmp.eq.s32.totalorder %s90, 0
      %p663 = por %p661, %p662
      %s665 = sadd.s32 %s664, 1
      %p668 = scmp.eq.s32.totalorder %s84, 1
      %p669 = scmp.ne.s32.totalorder %s664, %s666
      %p670 = scmp.eq.s32.totalorder %s84, 0
      %p671 = por %p669, %p670
      %p672 = scmp.ne.s32.totalorder %s664, %s666
      %p673 = scmp.eq.s32.totalorder %s89, 1
      %p674 = por %p672, %p673
      %p675 = scmp.ne.s32.totalorder %s666, %s667
      %p676 = scmp.eq.s32.totalorder %s89, 0
      %p677 = por %p675, %p676
      %p678 = scmp.ne.s32.totalorder %s666, %s667
      %p679 = scmp.eq.s32.totalorder %s90, 1
      %p680 = por %p678, %p679
      %p682 = scmp.ne.s32.totalorder %s667, %s681
      %p683 = scmp.eq.s32.totalorder %s90, 0
      %p684 = por %p682, %p683
      %s686 = sadd.s32 %s685, 1
      %p689 = scmp.eq.s32.totalorder %s84, 1
      %p690 = scmp.ne.s32.totalorder %s685, %s687
      %p691 = scmp.eq.s32.totalorder %s84, 0
      %p692 = por %p690, %p691
      %p693 = scmp.ne.s32.totalorder %s685, %s687
      %p694 = scmp.eq.s32.totalorder %s89, 1
      %p695 = por %p693, %p694
      %p696 = scmp.ne.s32.totalorder %s687, %s688
      %p697 = scmp.eq.s32.totalorder %s89, 0
      %p698 = por %p696, %p697
      %p699 = scmp.ne.s32.totalorder %s687, %s688
      %p700 = scmp.eq.s32.totalorder %s90, 1
      %p701 = por %p699, %p700
      %p703 = scmp.ne.s32.totalorder %s688, %s702
      %p704 = scmp.eq.s32.totalorder %s90, 0
      %p705 = por %p703, %p704
      %s707 = sadd.s32 %s706, 1
      %p710 = scmp.eq.s32.totalorder %s84, 1
      %p711 = scmp.ne.s32.totalorder %s706, %s708
      %p712 = scmp.eq.s32.totalorder %s84, 0
      %p713 = por %p711, %p712
      %p714 = scmp.ne.s32.totalorder %s706, %s708
      %p715 = scmp.eq.s32.totalorder %s89, 1
      %p716 = por %p714, %p715
      %p717 = scmp.ne.s32.totalorder %s708, %s709
      %p718 = scmp.eq.s32.totalorder %s89, 0
      %p719 = por %p717, %p718
      %p720 = scmp.ne.s32.totalorder %s708, %s709
      %p721 = scmp.eq.s32.totalorder %s90, 1
      %p722 = por %p720, %p721
      %p724 = scmp.ne.s32.totalorder %s709, %s723
      %p725 = scmp.eq.s32.totalorder %s90, 0
      %p726 = por %p724, %p725
      %s728 = sadd.s32 %s727, 1
      %p731 = scmp.eq.s32.totalorder %s84, 1
      %p732 = scmp.ne.s32.totalorder %s727, %s729
      %p733 = scmp.eq.s32.totalorder %s84, 0
      %p734 = por %p732, %p733
      %p735 = scmp.ne.s32.totalorder %s727, %s729
      %p736 = scmp.eq.s32.totalorder %s89, 1
      %p737 = por %p735, %p736
      %p738 = scmp.ne.s32.totalorder %s729, %s730
      %p739 = scmp.eq.s32.totalorder %s89, 0
      %p740 = por %p738, %p739
      %p741 = scmp.ne.s32.totalorder %s729, %s730
      %p742 = scmp.eq.s32.totalorder %s90, 1
      %p743 = por %p741, %p742
      %p745 = scmp.ne.s32.totalorder %s730, %s744
      %p746 = scmp.eq.s32.totalorder %s90, 0
      %p747 = por %p745, %p746
      %s749 = sadd.s32 %s748, 1
      %p752 = scmp.eq.s32.totalorder %s84, 1
      %p753 = scmp.ne.s32.totalorder %s748, %s750
      %p754 = scmp.eq.s32.totalorder %s84, 0
      %p755 = por %p753, %p754
      %p756 = scmp.ne.s32.totalorder %s748, %s750
      %p757 = scmp.eq.s32.totalorder %s89, 1
      %p758 = por %p756, %p757
      %p759 = scmp.ne.s32.totalorder %s750, %s751
      %p760 = scmp.eq.s32.totalorder %s89, 0
      %p761 = por %p759, %p760
      %p762 = scmp.ne.s32.totalorder %s750, %s751
      %p763 = scmp.eq.s32.totalorder %s90, 1
      %p764 = por %p762, %p763
      %p766 = scmp.ne.s32.totalorder %s751, %s765
      %p767 = scmp.eq.s32.totalorder %s90, 0
      %p768 = por %p766, %p767
      %s770 = sadd.s32 %s769, 1
      %p773 = scmp.eq.s32.totalorder %s84, 1
      %p774 = scmp.ne.s32.totalorder %s769, %s771
      %p775 = scmp.eq.s32.totalorder %s84, 0
      %p776 = por %p774, %p775
      %p777 = scmp.ne.s32.totalorder %s769, %s771
      %p778 = scmp.eq.s32.totalorder %s89, 1
      %p779 = por %p777, %p778
      %p780 = scmp.ne.s32.totalorder %s771, %s772
      %p781 = scmp.eq.s32.totalorder %s89, 0
      %p782 = por %p780, %p781
      %p783 = scmp.ne.s32.totalorder %s771, %s772
      %p784 = scmp.eq.s32.totalorder %s90, 1
      %p785 = por %p783, %p784
      %p787 = scmp.ne.s32.totalorder %s772, %s786
      %p788 = scmp.eq.s32.totalorder %s90, 0
      %p789 = por %p787, %p788
      %s791 = sadd.s32 %s790, 1
      %p794 = scmp.eq.s32.totalorder %s84, 1
      %p795 = scmp.ne.s32.totalorder %s790, %s792
      %p796 = scmp.eq.s32.totalorder %s84, 0
      %p797 = por %p795, %p796
      %p798 = scmp.ne.s32.totalorder %s790, %s792
      %p799 = scmp.eq.s32.totalorder %s89, 1
      %p800 = por %p798, %p799
      %p801 = scmp.ne.s32.totalorder %s792, %s793
      %p802 = scmp.eq.s32.totalorder %s89, 0
      %p803 = por %p801, %p802
      %p804 = scmp.ne.s32.totalorder %s792, %s793
      %p805 = scmp.eq.s32.totalorder %s90, 1
      %p806 = por %p804, %p805
      %p808 = scmp.ne.s32.totalorder %s793, %s807
      %p809 = scmp.eq.s32.totalorder %s90, 0
      %p810 = por %p808, %p809
      %s812 = sadd.s32 %s811, 1
      %p815 = scmp.eq.s32.totalorder %s84, 1
      %p816 = scmp.ne.s32.totalorder %s811, %s813
      %p817 = scmp.eq.s32.totalorder %s84, 0
      %p818 = por %p816, %p817
      %p819 = scmp.ne.s32.totalorder %s811, %s813
      %p820 = scmp.eq.s32.totalorder %s89, 1
      %p821 = por %p819, %p820
      %p822 = scmp.ne.s32.totalorder %s813, %s814
      %p823 = scmp.eq.s32.totalorder %s89, 0
      %p824 = por %p822, %p823
      %p825 = scmp.ne.s32.totalorder %s813, %s814
      %p826 = scmp.eq.s32.totalorder %s90, 1
      %p827 = por %p825, %p826
      %p829 = scmp.ne.s32.totalorder %s814, %s828
      %p830 = scmp.eq.s32.totalorder %s90, 0
      %p831 = por %p829, %p830
      %s833 = sadd.s32 %s832, 1
      %p836 = scmp.eq.s32.totalorder %s84, 1
      %p837 = scmp.ne.s32.totalorder %s832, %s834
      %p838 = scmp.eq.s32.totalorder %s84, 0
      %p839 = por %p837, %p838
      %p840 = scmp.ne.s32.totalorder %s832, %s834
      %p841 = scmp.eq.s32.totalorder %s89, 1
      %p842 = por %p840, %p841
      %p843 = scmp.ne.s32.totalorder %s834, %s835
      %p844 = scmp.eq.s32.totalorder %s89, 0
      %p845 = por %p843, %p844
      %p846 = scmp.ne.s32.totalorder %s834, %s835
      %p847 = scmp.eq.s32.totalorder %s90, 1
      %p848 = por %p846, %p847
      %p850 = scmp.ne.s32.totalorder %s835, %s849
      %p851 = scmp.eq.s32.totalorder %s90, 0
      %p852 = por %p850, %p851
      %s854 = sadd.s32 %s853, 1
      %p857 = scmp.eq.s32.totalorder %s84, 1
      %p858 = scmp.ne.s32.totalorder %s853, %s855
      %p859 = scmp.eq.s32.totalorder %s84, 0
      %p860 = por %p858, %p859
      %p861 = scmp.ne.s32.totalorder %s853, %s855
      %p862 = scmp.eq.s32.totalorder %s89, 1
      %p863 = por %p861, %p862
      %p864 = scmp.ne.s32.totalorder %s855, %s856
      %p865 = scmp.eq.s32.totalorder %s89, 0
      %p866 = por %p864, %p865
      %p867 = scmp.ne.s32.totalorder %s855, %s856
      %p868 = scmp.eq.s32.totalorder %s90, 1
      %p869 = por %p867, %p868
      %p871 = scmp.ne.s32.totalorder %s856, %s870
      %p872 = scmp.eq.s32.totalorder %s90, 0
      %p873 = por %p871, %p872
      %s874 = ssub.s32 %s84, %s91
      %p875 = scmp.eq.s32.totalorder %s874, 0
      %s877 = sadd.s32 %s876, 1
      %s878 = scalar_select %p875, %s876, %s877
      %p881 = pneg %p875
      %p882 = scmp.eq.s32.totalorder %s84, 1
      %p883 = por %p881, %p882
      %p884 = scmp.ne.s32.totalorder %s876, %s879
      %p885 = scmp.eq.s32.totalorder %s84, 0
      %p886 = por %p884, %p885
      %p887 = scmp.ne.s32.totalorder %s876, %s879
      %p888 = scmp.eq.s32.totalorder %s89, 1
      %p889 = por %p887, %p888
      %p890 = scmp.ne.s32.totalorder %s879, %s880
      %p891 = scmp.eq.s32.totalorder %s89, 0
      %p892 = por %p890, %p891
      %p893 = scmp.ne.s32.totalorder %s879, %s880
      %p894 = scmp.eq.s32.totalorder %s90, 1
      %p895 = por %p893, %p894
      %p897 = scmp.ne.s32.totalorder %s880, %s896
      %p898 = scmp.eq.s32.totalorder %s90, 0
      %p899 = por %p897, %p898
      %p900 = scmp.le.s32.totalorder 1, %s84
      %p901 = scmp.lt.s32.totalorder %s84, 3
      %p902 = pnand %p900, %p901
      %p903 = pneg %p902
      // Predicated region
      $region9: #{lora_vit_timm_forward.1} parent=5 // pred_check
        _
      $region10: #{lora_vit_timm_forward.1} parent=5 // pred_check_branch
        %905 = sbr.rel (%p902) target = $region12
      $region11: #{lora_vit_timm_forward.1} parent=5 // pred_region
        %s906 = ssub.s32 %s84, 1
        // Predicated region
        $region13: #{lora_vit_timm_forward.1} parent=11 // pred_check
          %p907 = pneg %p131
        $region14: #{lora_vit_timm_forward.1} parent=11 // pred_check_branch
          %909 = sbr.rel (%p907) target = $region16
        $region15: #{lora_vit_timm_forward.1} parent=11 // pred_region
          _
        $region16: #{lora_vit_timm_forward.1} parent=11 // pred_fallthru
          _
        // Predicated region
        $region17: #{lora_vit_timm_forward.1} parent=11 // pred_check
          %p910 = pneg %p152
        $region18: #{lora_vit_timm_forward.1} parent=11 // pred_check_branch
          %912 = sbr.rel (%p910) target = $region20
        $region19: #{lora_vit_timm_forward.1} parent=11 // pred_region
          _
        $region20: #{lora_vit_timm_forward.1} parent=11 // pred_fallthru
          _
        // Predicated region
        $region21: #{lora_vit_timm_forward.1} parent=11 // pred_check
          %p913 = pneg %p173
        $region22: #{lora_vit_timm_forward.1} parent=11 // pred_check_branch
          %915 = sbr.rel (%p913) target = $region24
        $region23: #{lora_vit_timm_forward.1} parent=11 // pred_region
          _
        $region24: #{lora_vit_timm_forward.1} parent=11 // pred_fallthru
          _
        // Predicated region
        $region25: #{lora_vit_timm_forward.1} parent=11 // pred_check
          %p916 = pneg %p194
        $region26: #{lora_vit_timm_forward.1} parent=11 // pred_check_branch
          %918 = sbr.rel (%p916) target = $region28
        $region27: #{lora_vit_timm_forward.1} parent=11 // pred_region
          _
        $region28: #{lora_vit_timm_forward.1} parent=11 // pred_fallthru
          _
        // Predicated region
        $region29: #{lora_vit_timm_forward.1} parent=11 // pred_check
          %p919 = pneg %p215
        $region30: #{lora_vit_timm_forward.1} parent=11 // pred_check_branch
          %921 = sbr.rel (%p919) target = $region32
        $region31: #{lora_vit_timm_forward.1} parent=11 // pred_region
          _
        $region32: #{lora_vit_timm_forward.1} parent=11 // pred_fallthru
          _
        // Predicated region
        $region33: #{lora_vit_timm_forward.1} parent=11 // pred_check
          %p922 = pneg %p236
        $region34: #{lora_vit_timm_forward.1} parent=11 // pred_check_branch
          %924 = sbr.rel (%p922) target = $region36
        $region35: #{lora_vit_timm_forward.1} parent=11 // pred_region
          _
        $region36: #{lora_vit_timm_forward.1} parent=11 // pred_fallthru
          _
        // Predicated region
        $region37: #{lora_vit_timm_forward.1} parent=11 // pred_check
          %p925 = pneg %p257
        $region38: #{lora_vit_timm_forward.1} parent=11 // pred_check_branch
          %927 = sbr.rel (%p925) target = $region40
        $region39: #{lora_vit_timm_forward.1} parent=11 // pred_region
          _
        $region40: #{lora_vit_timm_forward.1} parent=11 // pred_fallthru
          _
        // Predicated region
        $region41: #{lora_vit_timm_forward.1} parent=11 // pred_check
          %p928 = pneg %p278
        $region42: #{lora_vit_timm_forward.1} parent=11 // pred_check_branch
          %930 = sbr.rel (%p928) target = $region44
        $region43: #{lora_vit_timm_forward.1} parent=11 // pred_region
          _
        $region44: #{lora_vit_timm_forward.1} parent=11 // pred_fallthru
          _
        // Predicated region
        $region45: #{lora_vit_timm_forward.1} parent=11 // pred_check
          %p931 = pneg %p299
        $region46: #{lora_vit_timm_forward.1} parent=11 // pred_check_branch
          %933 = sbr.rel (%p931) target = $region48
        $region47: #{lora_vit_timm_forward.1} parent=11 // pred_region
          _
        $region48: #{lora_vit_timm_forward.1} parent=11 // pred_fallthru
          _
        // Predicated region
        $region49: #{lora_vit_timm_forward.1} parent=11 // pred_check
          %p934 = pneg %p320
        $region50: #{lora_vit_timm_forward.1} parent=11 // pred_check_branch
          %936 = sbr.rel (%p934) target = $region52
        $region51: #{lora_vit_timm_forward.1} parent=11 // pred_region
          _
        $region52: #{lora_vit_timm_forward.1} parent=11 // pred_fallthru
          _
        // Predicated region
        $region53: #{lora_vit_timm_forward.1} parent=11 // pred_check
          %p937 = pneg %p341
        $region54: #{lora_vit_timm_forward.1} parent=11 // pred_check_branch
          %939 = sbr.rel (%p937) target = $region56
        $region55: #{lora_vit_timm_forward.1} parent=11 // pred_region
          _
        $region56: #{lora_vit_timm_forward.1} parent=11 // pred_fallthru
          _
        // Predicated region
        $region57: #{lora_vit_timm_forward.1} parent=11 // pred_check
          %p940 = pneg %p362
        $region58: #{lora_vit_timm_forward.1} parent=11 // pred_check_branch
          %942 = sbr.rel (%p940) target = $region60
        $region59: #{lora_vit_timm_forward.1} parent=11 // pred_region
          _
        $region60: #{lora_vit_timm_forward.1} parent=11 // pred_fallthru
          _
        // Predicated region
        $region61: #{lora_vit_timm_forward.1} parent=11 // pred_check
          %p943 = pneg %p383
        $region62: #{lora_vit_timm_forward.1} parent=11 // pred_check_branch
          %945 = sbr.rel (%p943) target = $region64
        $region63: #{lora_vit_timm_forward.1} parent=11 // pred_region
          _
        $region64: #{lora_vit_timm_forward.1} parent=11 // pred_fallthru
          _
        // Predicated region
        $region65: #{lora_vit_timm_forward.1} parent=11 // pred_check
          %p946 = pneg %p404
        $region66: #{lora_vit_timm_forward.1} parent=11 // pred_check_branch
          %948 = sbr.rel (%p946) target = $region68
        $region67: #{lora_vit_timm_forward.1} parent=11 // pred_region
          _
        $region68: #{lora_vit_timm_forward.1} parent=11 // pred_fallthru
          _
        // Predicated region
        $region69: #{lora_vit_timm_forward.1} parent=11 // pred_check
          %p949 = pneg %p425
        $region70: #{lora_vit_timm_forward.1} parent=11 // pred_check_branch
          %951 = sbr.rel (%p949) target = $region72
        $region71: #{lora_vit_timm_forward.1} parent=11 // pred_region
          _
        $region72: #{lora_vit_timm_forward.1} parent=11 // pred_fallthru
          _
        // Predicated region
        $region73: #{lora_vit_timm_forward.1} parent=11 // pred_check
          %p952 = pneg %p446
        $region74: #{lora_vit_timm_forward.1} parent=11 // pred_check_branch
          %954 = sbr.rel (%p952) target = $region76
        $region75: #{lora_vit_timm_forward.1} parent=11 // pred_region
          _
        $region76: #{lora_vit_timm_forward.1} parent=11 // pred_fallthru
          _
        // Predicated region
        $region77: #{lora_vit_timm_forward.1} parent=11 // pred_check
          %p955 = pneg %p467
        $region78: #{lora_vit_timm_forward.1} parent=11 // pred_check_branch
          %957 = sbr.rel (%p955) target = $region80
        $region79: #{lora_vit_timm_forward.1} parent=11 // pred_region
          _
        $region80: #{lora_vit_timm_forward.1} parent=11 // pred_fallthru
          _
        // Predicated region
        $region81: #{lora_vit_timm_forward.1} parent=11 // pred_check
          %p958 = pneg %p488
        $region82: #{lora_vit_timm_forward.1} parent=11 // pred_check_branch
          %960 = sbr.rel (%p958) target = $region84
        $region83: #{lora_vit_timm_forward.1} parent=11 // pred_region
          _
        $region84: #{lora_vit_timm_forward.1} parent=11 // pred_fallthru
          _
        // Predicated region
        $region85: #{lora_vit_timm_forward.1} parent=11 // pred_check
          %p961 = pneg %p509
        $region86: #{lora_vit_timm_forward.1} parent=11 // pred_check_branch
          %963 = sbr.rel (%p961) target = $region88
        $region87: #{lora_vit_timm_forward.1} parent=11 // pred_region
          _
        $region88: #{lora_vit_timm_forward.1} parent=11 // pred_fallthru
          _
        // Predicated region
        $region89: #{lora_vit_timm_forward.1} parent=11 // pred_check
          %p964 = pneg %p530
        $region90: #{lora_vit_timm_forward.1} parent=11 // pred_check_branch
          %966 = sbr.rel (%p964) target = $region92
        $region91: #{lora_vit_timm_forward.1} parent=11 // pred_region
          _
        $region92: #{lora_vit_timm_forward.1} parent=11 // pred_fallthru
          _
        // Predicated region
        $region93: #{lora_vit_timm_forward.1} parent=11 // pred_check
          %p967 = pneg %p551
        $region94: #{lora_vit_timm_forward.1} parent=11 // pred_check_branch
          %969 = sbr.rel (%p967) target = $region96
        $region95: #{lora_vit_timm_forward.1} parent=11 // pred_region
          _
        $region96: #{lora_vit_timm_forward.1} parent=11 // pred_fallthru
          _
        // Predicated region
        $region97: #{lora_vit_timm_forward.1} parent=11 // pred_check
          %p970 = pneg %p572
        $region98: #{lora_vit_timm_forward.1} parent=11 // pred_check_branch
          %972 = sbr.rel (%p970) target = $region100
        $region99: #{lora_vit_timm_forward.1} parent=11 // pred_region
          _
        $region100: #{lora_vit_timm_forward.1} parent=11 // pred_fallthru
          _
        // Predicated region
        $region101: #{lora_vit_timm_forward.1} parent=11 // pred_check
          %p973 = pneg %p593
        $region102: #{lora_vit_timm_forward.1} parent=11 // pred_check_branch
          %975 = sbr.rel (%p973) target = $region104
        $region103: #{lora_vit_timm_forward.1} parent=11 // pred_region
          _
        $region104: #{lora_vit_timm_forward.1} parent=11 // pred_fallthru
          _
        // Predicated region
        $region105: #{lora_vit_timm_forward.1} parent=11 // pred_check
          %p976 = pneg %p614
        $region106: #{lora_vit_timm_forward.1} parent=11 // pred_check_branch
          %978 = sbr.rel (%p976) target = $region108
        $region107: #{lora_vit_timm_forward.1} parent=11 // pred_region
          _
        $region108: #{lora_vit_timm_forward.1} parent=11 // pred_fallthru
          _
        // Predicated region
        $region109: #{lora_vit_timm_forward.1} parent=11 // pred_check
          %p979 = pneg %p635
        $region110: #{lora_vit_timm_forward.1} parent=11 // pred_check_branch
          %981 = sbr.rel (%p979) target = $region112
        $region111: #{lora_vit_timm_forward.1} parent=11 // pred_region
          _
        $region112: #{lora_vit_timm_forward.1} parent=11 // pred_fallthru
          _
        // Predicated region
        $region113: #{lora_vit_timm_forward.1} parent=11 // pred_check
          %p982 = pneg %p656
        $region114: #{lora_vit_timm_forward.1} parent=11 // pred_check_branch
          %984 = sbr.rel (%p982) target = $region116
        $region115: #{lora_vit_timm_forward.1} parent=11 // pred_region
          _
        $region116: #{lora_vit_timm_forward.1} parent=11 // pred_fallthru
          _
        // Predicated region
        $region117: #{lora_vit_timm_forward.1} parent=11 // pred_check
          %p985 = pneg %p677
        $region118: #{lora_vit_timm_forward.1} parent=11 // pred_check_branch
          %987 = sbr.rel (%p985) target = $region120
        $region119: #{lora_vit_timm_forward.1} parent=11 // pred_region
          _
        $region120: #{lora_vit_timm_forward.1} parent=11 // pred_fallthru
          _
        // Predicated region
        $region121: #{lora_vit_timm_forward.1} parent=11 // pred_check
          %p988 = pneg %p698
        $region122: #{lora_vit_timm_forward.1} parent=11 // pred_check_branch
          %990 = sbr.rel (%p988) target = $region124
        $region123: #{lora_vit_timm_forward.1} parent=11 // pred_region
          _
        $region124: #{lora_vit_timm_forward.1} parent=11 // pred_fallthru
          _
        // Predicated region
        $region125: #{lora_vit_timm_forward.1} parent=11 // pred_check
          %p991 = pneg %p719
        $region126: #{lora_vit_timm_forward.1} parent=11 // pred_check_branch
          %993 = sbr.rel (%p991) target = $region128
        $region127: #{lora_vit_timm_forward.1} parent=11 // pred_region
          _
        $region128: #{lora_vit_timm_forward.1} parent=11 // pred_fallthru
          _
        // Predicated region
        $region129: #{lora_vit_timm_forward.1} parent=11 // pred_check
          %p994 = pneg %p740
        $region130: #{lora_vit_timm_forward.1} parent=11 // pred_check_branch
          %996 = sbr.rel (%p994) target = $region132
        $region131: #{lora_vit_timm_forward.1} parent=11 // pred_region
          _
        $region132: #{lora_vit_timm_forward.1} parent=11 // pred_fallthru
          _
        // Predicated region
        $region133: #{lora_vit_timm_forward.1} parent=11 // pred_check
          %p997 = pneg %p761
        $region134: #{lora_vit_timm_forward.1} parent=11 // pred_check_branch
          %999 = sbr.rel (%p997) target = $region136
        $region135: #{lora_vit_timm_forward.1} parent=11 // pred_region
          _
        $region136: #{lora_vit_timm_forward.1} parent=11 // pred_fallthru
          _
        // Predicated region
        $region137: #{lora_vit_timm_forward.1} parent=11 // pred_check
          %p1000 = pneg %p782
        $region138: #{lora_vit_timm_forward.1} parent=11 // pred_check_branch
          %1002 = sbr.rel (%p1000) target = $region140
        $region139: #{lora_vit_timm_forward.1} parent=11 // pred_region
          _
        $region140: #{lora_vit_timm_forward.1} parent=11 // pred_fallthru
          _
        // Predicated region
        $region141: #{lora_vit_timm_forward.1} parent=11 // pred_check
          %p1003 = pneg %p803
        $region142: #{lora_vit_timm_forward.1} parent=11 // pred_check_branch
          %1005 = sbr.rel (%p1003) target = $region144
        $region143: #{lora_vit_timm_forward.1} parent=11 // pred_region
          _
        $region144: #{lora_vit_timm_forward.1} parent=11 // pred_fallthru
          _
        // Predicated region
        $region145: #{lora_vit_timm_forward.1} parent=11 // pred_check
          %p1006 = pneg %p824
        $region146: #{lora_vit_timm_forward.1} parent=11 // pred_check_branch
          %1008 = sbr.rel (%p1006) target = $region148
        $region147: #{lora_vit_timm_forward.1} parent=11 // pred_region
          _
        $region148: #{lora_vit_timm_forward.1} parent=11 // pred_fallthru
          _
        // Predicated region
        $region149: #{lora_vit_timm_forward.1} parent=11 // pred_check
          %p1009 = pneg %p845
        $region150: #{lora_vit_timm_forward.1} parent=11 // pred_check_branch
          %1011 = sbr.rel (%p1009) target = $region152
        $region151: #{lora_vit_timm_forward.1} parent=11 // pred_region
          _
        $region152: #{lora_vit_timm_forward.1} parent=11 // pred_fallthru
          _
        // Predicated region
        $region153: #{lora_vit_timm_forward.1} parent=11 // pred_check
          %p1012 = pneg %p866
        $region154: #{lora_vit_timm_forward.1} parent=11 // pred_check_branch
          %1014 = sbr.rel (%p1012) target = $region156
        $region155: #{lora_vit_timm_forward.1} parent=11 // pred_region
          _
        $region156: #{lora_vit_timm_forward.1} parent=11 // pred_fallthru
          _
      $region12: #{lora_vit_timm_forward.1} parent=5 // pred_fallthru
        _
      %p1015 = scmp.lt.s32.totalorder %s84, 2
      // Predicated region
      $region157: #{lora_vit_timm_forward.1} parent=5 // pred_check
        %p1016 = pneg %p1015
      $region158: #{lora_vit_timm_forward.1} parent=5 // pred_check_branch
        %1018 = sbr.rel (%p1016) target = $region160
      $region159: #{lora_vit_timm_forward.1} parent=5 // pred_region
        // Predicated region
        $region161: #{lora_vit_timm_forward.1} parent=159 // pred_check
          %p1019 = pneg %p104
        $region162: #{lora_vit_timm_forward.1} parent=159 // pred_check_branch
          %1021 = sbr.rel (%p1019) target = $region164
        $region163: #{lora_vit_timm_forward.1} parent=159 // pred_region
          %p1022 = scmp.lt.s32.totalorder %s84, 1
          %s1023 = scalar_select %p1022, %s84, 1
          %s1024 = smul.addr %s1023, 2
          %s1025 = smul.addr %s1024, 8
          %s1026 = scalar_lea.vmem %s1, %s1025
        $region164: #{lora_vit_timm_forward.1} parent=159 // pred_fallthru
          _
      $region160: #{lora_vit_timm_forward.1} parent=5 // pred_fallthru
        _
      %p1027 = scmp.le.s32.totalorder 1, %s84
      %p1028 = scmp.lt.s32.totalorder %s84, 3
      %p1029 = pnand %p1027, %p1028
      %p1030 = pneg %p1029
      // Predicated region
      $region165: #{lora_vit_timm_forward.1} parent=5 // pred_check
        _
      $region166: #{lora_vit_timm_forward.1} parent=5 // pred_check_branch
        %1032 = sbr.rel (%p1029) target = $region168
      $region167: #{lora_vit_timm_forward.1} parent=5 // pred_region
        %s1033 = ssub.s32 %s84, 1
        %p1034 = scmp.lt.s32.totalorder %s89, 1
        %s1035 = scalar_select %p1034, %s89, 1
        %s1036 = smul.addr %s1035, 2
        %s1037 = smul.addr %s1036, 8
        %s1038 = scalar_lea.vmem %s1, %s1037
        %p1039 = pneg %p110
        %p1040 = pneg %p107
        %p1041 = pneg %p131
        %p1042 = pneg %p128
        %p1043 = pneg %p152
        %p1044 = pneg %p149
        %p1045 = pneg %p173
        %p1046 = pneg %p170
        %p1047 = pneg %p194
        %p1048 = pneg %p191
        %p1049 = pneg %p215
        %p1050 = pneg %p212
        %p1051 = pneg %p236
        %p1052 = pneg %p233
        %p1053 = pneg %p257
        %p1054 = pneg %p254
        %p1055 = pneg %p278
        %p1056 = pneg %p275
        %p1057 = pneg %p299
        %p1058 = pneg %p296
        %p1059 = pneg %p320
        %p1060 = pneg %p317
        %p1061 = pneg %p341
        %p1062 = pneg %p338
        %p1063 = pneg %p362
        %p1064 = pneg %p359
        %p1065 = pneg %p383
        %p1066 = pneg %p380
        %p1067 = pneg %p404
        %p1068 = pneg %p401
        %p1069 = pneg %p425
        %p1070 = pneg %p422
        %p1071 = pneg %p446
        %p1072 = pneg %p443
        %p1073 = pneg %p467
        %p1074 = pneg %p464
        %p1075 = pneg %p488
        %p1076 = pneg %p485
        %p1077 = pneg %p509
        %p1078 = pneg %p506
        %p1079 = pneg %p530
        %p1080 = pneg %p527
        %p1081 = pneg %p551
        %p1082 = pneg %p548
        %p1083 = pneg %p572
        %p1084 = pneg %p569
        %p1085 = pneg %p593
        %p1086 = pneg %p590
        %p1087 = pneg %p614
        %p1088 = pneg %p611
        %p1089 = pneg %p635
        %p1090 = pneg %p632
        %p1091 = pneg %p656
        %p1092 = pneg %p653
        %p1093 = pneg %p677
        %p1094 = pneg %p674
        %p1095 = pneg %p698
        %p1096 = pneg %p695
        %p1097 = pneg %p719
        %p1098 = pneg %p716
        %p1099 = pneg %p740
        %p1100 = pneg %p737
        %p1101 = pneg %p761
        %p1102 = pneg %p758
        %p1103 = pneg %p782
        %p1104 = pneg %p779
        %p1105 = pneg %p803
        %p1106 = pneg %p800
        %p1107 = pneg %p824
        %p1108 = pneg %p821
        %p1109 = pneg %p845
        %p1110 = pneg %p842
        %p1111 = pneg %p866
        %p1112 = pneg %p863
        %p1113 = pneg %p892
        %p1114 = pneg %p889
        %s1115 = sand.u32 %s879, 1
        %s1116 = scalar_lea.sflag [#allocation3], %s1115
        %s1117 = sand.u32 %s879, 1
        %s1118 = scalar_lea.vmem [#allocation2], %s1117
        %p1119 = scmp.lt.s32.totalorder %s89, 1
        %s1120 = scalar_select %p1119, %s89, 1
        %s1121 = smul.addr %s1120, 2
        %s1122 = smul.addr %s1121, 8
        %s1123 = scalar_lea.vmem %s1, %s1122
        %v1125 = vld [vmem:[%s1123] sm:$0xff]
        %v1126 = vld [vmem:[%s1123 + $0x8] sm:$0xff]
        %v1127 = vld [vmem:[%s7] sm:$0xff]
        %v1128 = vld [vmem:[%s7 + $0x8] sm:$0xff]
        %v1129 = vld [vmem:[%s7 + $0x10] sm:$0xff]
        %v1130 = vld [vmem:[%s7 + $0x18] sm:$0xff]
        %v1131 = vld [vmem:[%s7 + $0x20] sm:$0xff]
        %v1132 = vld [vmem:[%s7 + $0x28] sm:$0xff]
        %v1133 = vpack.c.bf16 %v1126, %v1125
        %v1134 = vpack.c.bf16 %v1128, %v1127
        %v1135 = vpack.c.bf16 %v1130, %v1129
        %v1136 = vpack.c.bf16 %v1132, %v1131
        %v1137 = vld [vmem:[%s9] sm:$0x1]
        %v1139 = vlaneseq
        %v1140 = vshrl.u32 %v1139, 7
        %v1141 = vsub.s32 0, %v1140
        %v1142 = vrot.slane %v1137, %v1141
        %vm1144 = vcmask 392192
        %v1146 = vsel %vm1144, %v1133, 0
        %1148 = vmatprep.subr.bf16.mxu0 0
        %1149 = vmatpush1.bf16.msra.mxu0 0
        %1150 = vmatprep.subr.bf16.mxu0 0
        %1151 = vmatpush1.bf16.msra.mxu0 0
        %1152 = vmatprep.subr.bf16.mxu0 0
        %1153 = vmatpush1.bf16.msra.mxu0 0
        %1154 = vmatprep.subr.bf16.mxu0 0
        %1155 = vmatpush1.bf16.msra.mxu0 0
        %1156 = vmatprep.subr.bf16.mxu0 0
        %1157 = vmatpush1.bf16.msra.mxu0 0
        %1158 = vmatprep.subr.bf16.mxu0 0
        %1159 = vmatpush1.bf16.msra.mxu0 %v1136
        %1160 = vmatprep.subr.bf16.mxu0 0
        %1161 = vmatpush1.bf16.msra.mxu0 %v1135
        %1162 = vmatprep.subr.bf16.mxu0 0
        %1163 = vmatpush1.bf16.msra.mxu0 %v1134
        %1164 = vmatprep.subr.bf16.mxu0 0
        %1165 = vmatpush2.bf16.msra.mxu0 0
        %1166 = vmatprep.subr.bf16.mxu0 0
        %1167 = vmatpush2.bf16.msra.mxu0 0
        %1168 = vmatprep.subr.bf16.mxu0 0
        %1169 = vmatpush2.bf16.msra.mxu0 0
        %1170 = vmatprep.subr.bf16.mxu0 0
        %1171 = vmatpush2.bf16.msra.mxu0 0
        %1172 = vmatprep.subr.bf16.mxu0 0
        %1173 = vmatpush2.bf16.msra.mxu0 0
        %1174 = vmatprep.subr.bf16.mxu0 0
        %1175 = vmatpush2.bf16.msra.mxu0 0
        %1176 = vmatprep.subr.bf16.mxu0 0
        %1177 = vmatpush2.bf16.msra.mxu0 0
        %1178 = vmatprep.subr.bf16.mxu0 0
        %1179 = vmatpush2.bf16.msra.mxu0 0
        %1180 = vmatprep.mubr.bf16.mxu0 0
        %1181 = vmatmul.mubr.bf16.gmra.mxu0 %v1146
        %v1182 = vpop.f32.mrf.mxu0
        %v1183 = vadd.f32 %v1142, %v1182
        %v1184 = vpop.f32.mrf.mxu0
        %v1185 = vpop.f32.mrf.mxu0
        %v1186 = vadd.f32 %v1142, %v1185
        %v1187 = vpop.f32.mrf.mxu0
        %1188 = vdwg.mxu0
        %v1189 = vld [vmem:[%s3] sm:$0x1]
        %vm1192 = vcmask 1040384
        %v1193 = vrot.slane %v1183, 7
        %v1194 = vrot.slane %v1186, 7
        %v1195 = vsel %vm1192, %v1193, %v1194
        %v1199 = vsel %vm1192, %v1189, %v1193
        %v1200 = vld [vmem:[%s5] sm:$0xff]
        %v1201 = vld [vmem:[%s5 + $0x8] sm:$0xff]
        %v1202 = vld [vmem:[%s5 + $0x10] sm:$0x1]
        %v1203 = vadd.f32 %v1199, %v1200
        %v1204 = vadd.f32 %v1195, %v1201
        %v1205 = vadd.f32 %v1194, %v1202
        %vm1206 = vcmask 261120
        %v1207 = vsel %vm1206, %v1203, 0.0
        %1208 = vadd.xlane.f32.xlu0 %v1207
        %v1209 = vpop.xlane.xlu0 %1208
        %v1210 = vsel %vm1206, %v1204, 0.0
        %1211 = vadd.xlane.f32.xlu0 %v1210
        %v1212 = vpop.xlane.xlu0 %1211
        %vm1213 = vcmask 253952
        %v1214 = vsel %vm1213, %v1205, 0.0
        %1215 = vadd.xlane.f32.xlu0 %v1214
        %v1216 = vpop.xlane.xlu0 %1215
        %v1217 = vrcp.pop 32.0
        %v1218 = vmul.f32 %v1209, %v1217
        %v1219 = vmul.f32 %v1212, %v1217
        %v1220 = vmul.f32 %v1216, %v1217
        %v1221 = vsub.f32 %v1203, %v1218
        %v1222 = vsub.f32 %v1204, %v1219
        %v1223 = vsub.f32 %v1205, %v1220
        %v1224 = vmul.f32 %v1221, %v1221
        %v1225 = vmul.f32 %v1222, %v1222
        %v1226 = vmul.f32 %v1223, %v1223
        %v1227 = vsel %vm1206, %v1224, 0.0
        %1228 = vadd.xlane.f32.xlu0 %v1227
        %v1229 = vpop.xlane.xlu0 %1228
        %v1230 = vsel %vm1206, %v1225, 0.0
        %1231 = vadd.xlane.f32.xlu0 %v1230
        %v1232 = vpop.xlane.xlu0 %1231
        %v1233 = vsel %vm1213, %v1226, 0.0
        %1234 = vadd.xlane.f32.xlu0 %v1233
        %v1235 = vpop.xlane.xlu0 %1234
        %v1236 = vmul.f32 %v1229, %v1217
        %v1237 = vmul.f32 %v1232, %v1217
        %v1238 = vmul.f32 %v1235, %v1217
        %v1239 = vadd.f32 %v1236, 1e-06
        %v1240 = vadd.f32 %v1237, 1e-06
        %v1241 = vadd.f32 %v1238, 1e-06
        %v1242 = vrsqrt.pop %v1239
        %v1243 = vrsqrt.pop %v1240
        %v1244 = vrsqrt.pop %v1241
        %v1245 = vmul.f32 %v1221, %v1242
        %v1246 = vmul.f32 %v1222, %v1243
        %v1247 = vmul.f32 %v1223, %v1244
        %v1248 = vld [vmem:[%s11] sm:$0x1]
        %v1250 = vlaneseq
        %v1251 = vshrl.u32 %v1250, 7
        %v1252 = vsub.s32 0, %v1251
        %v1253 = vrot.slane %v1248, %v1252
        %v1255 = vmul.f32 %v1245, %v1253
        %v1256 = vmul.f32 %v1246, %v1253
        %v1257 = vmul.f32 %v1247, %v1253
        %v1258 = vld [vmem:[%s13] sm:$0x1]
        %v1260 = vlaneseq
        %v1261 = vshrl.u32 %v1260, 7
        %v1262 = vsub.s32 0, %v1261
        %v1263 = vrot.slane %v1258, %v1262
        %v1265 = vadd.f32 %v1255, %v1263
        %v1266 = vadd.f32 %v1256, %v1263
        %v1267 = vadd.f32 %v1257, %v1263
        %v1268 = vld [vmem:[%s15] sm:$0xff]
        %v1269 = vld [vmem:[%s15 + $0x8] sm:$0xff]
        %v1270 = vld [vmem:[%s15 + $0x10] sm:$0xff]
        %v1271 = vld [vmem:[%s15 + $0x18] sm:$0xff]
        %v1272 = vpack.c.bf16 %v1266, %v1265
        %v1273 = vpack.c.bf16 %v1267, %v1267
        %v1274 = vpack.c.bf16 %v1269, %v1268
        %v1275 = vpack.c.bf16 %v1271, %v1270
        %v1276 = vld [vmem:[%s17] sm:$0x1]
        %v1278 = vlaneseq
        %v1279 = vshrl.u32 %v1278, 7
        %v1280 = vsub.s32 0, %v1279
        %v1281 = vrot.slane %v1276, %v1280
        %v1284 = vsel %vm1206, %v1272, 0
        %v1287 = vsel %vm1206, %v1273, 0
        %1289 = vmatprep.subr.bf16.mxu0 0
        %1290 = vmatpush1.bf16.msra.mxu0 0
        %1291 = vmatprep.subr.bf16.mxu0 0
        %1292 = vmatpush1.bf16.msra.mxu0 0
        %1293 = vmatprep.subr.bf16.mxu0 0
        %1294 = vmatpush1.bf16.msra.mxu0 0
        %1295 = vmatprep.subr.bf16.mxu0 0
        %1296 = vmatpush1.bf16.msra.mxu0 0
        %1297 = vmatprep.subr.bf16.mxu0 0
        %1298 = vmatpush1.bf16.msra.mxu0 0
        %1299 = vmatprep.subr.bf16.mxu0 0
        %1300 = vmatpush1.bf16.msra.mxu0 0
        %1301 = vmatprep.subr.bf16.mxu0 0
        %1302 = vmatpush1.bf16.msra.mxu0 %v1275
        %1303 = vmatprep.subr.bf16.mxu0 0
        %1304 = vmatpush1.bf16.msra.mxu0 %v1274
        %1305 = vmatprep.subr.bf16.mxu0 0
        %1306 = vmatpush2.bf16.msra.mxu0 0
        %1307 = vmatprep.subr.bf16.mxu0 0
        %1308 = vmatpush2.bf16.msra.mxu0 0
        %1309 = vmatprep.subr.bf16.mxu0 0
        %1310 = vmatpush2.bf16.msra.mxu0 0
        %1311 = vmatprep.subr.bf16.mxu0 0
        %1312 = vmatpush2.bf16.msra.mxu0 0
        %1313 = vmatprep.subr.bf16.mxu0 0
        %1314 = vmatpush2.bf16.msra.mxu0 0
        %1315 = vmatprep.subr.bf16.mxu0 0
        %1316 = vmatpush2.bf16.msra.mxu0 0
        %1317 = vmatprep.subr.bf16.mxu0 0
        %1318 = vmatpush2.bf16.msra.mxu0 0
        %1319 = vmatprep.subr.bf16.mxu0 0
        %1320 = vmatpush2.bf16.msra.mxu0 0
        %1321 = vmatprep.mubr.bf16.mxu0 0
        %1322 = vmatmul.mubr.bf16.gmra.mxu0 %v1284
        %v1323 = vpop.f32.mrf.mxu0
        %v1324 = vadd.f32 %v1281, %v1323
        %v1325 = vpop.f32.mrf.mxu0
        %v1326 = vpop.f32.mrf.mxu0
        %v1327 = vadd.f32 %v1281, %v1326
        %v1328 = vpop.f32.mrf.mxu0
        %1329 = vmatprep.mubr.bf16.mxu0 0
        %1330 = vmatmul.mubr.bf16.gmra.mxu0 %v1287
        %v1331 = vpop.f32.mrf.mxu0
        %v1332 = vadd.f32 %v1281, %v1331
        %v1333 = vpop.f32.mrf.mxu0
        %v1334 = vpop.f32.mrf.mxu0
        %v1335 = vpop.f32.mrf.mxu0
        %1336 = vdwg.mxu0
        %v1337 = vld [vmem:[%s19] sm:$0xff]
        %v1338 = vld [vmem:[%s19 + $0x8] sm:$0xff]
        %v1339 = vld [vmem:[%s19 + $0x10] sm:$0xff]
        %v1340 = vld [vmem:[%s19 + $0x18] sm:$0xff]
        %v1341 = vpack.c.bf16 %v1338, %v1337
        %v1342 = vpack.c.bf16 %v1340, %v1339
        %1343 = vmatprep.subr.bf16.mxu0 0
        %1344 = vmatpush1.bf16.msra.mxu0 0
        %1345 = vmatprep.subr.bf16.mxu0 0
        %1346 = vmatpush1.bf16.msra.mxu0 0
        %1347 = vmatprep.subr.bf16.mxu0 0
        %1348 = vmatpush1.bf16.msra.mxu0 0
        %1349 = vmatprep.subr.bf16.mxu0 0
        %1350 = vmatpush1.bf16.msra.mxu0 0
        %1351 = vmatprep.subr.bf16.mxu0 0
        %1352 = vmatpush1.bf16.msra.mxu0 0
        %1353 = vmatprep.subr.bf16.mxu0 0
        %1354 = vmatpush1.bf16.msra.mxu0 0
        %1355 = vmatprep.subr.bf16.mxu0 0
        %1356 = vmatpush1.bf16.msra.mxu0 %v1342
        %1357 = vmatprep.subr.bf16.mxu0 0
        %1358 = vmatpush1.bf16.msra.mxu0 %v1341
        %1359 = vmatprep.subr.bf16.mxu0 0
        %1360 = vmatpush2.bf16.msra.mxu0 0
        %1361 = vmatprep.subr.bf16.mxu0 0
        %1362 = vmatpush2.bf16.msra.mxu0 0
        %1363 = vmatprep.subr.bf16.mxu0 0
        %1364 = vmatpush2.bf16.msra.mxu0 0
        %1365 = vmatprep.subr.bf16.mxu0 0
        %1366 = vmatpush2.bf16.msra.mxu0 0
        %1367 = vmatprep.subr.bf16.mxu0 0
        %1368 = vmatpush2.bf16.msra.mxu0 0
        %1369 = vmatprep.subr.bf16.mxu0 0
        %1370 = vmatpush2.bf16.msra.mxu0 0
        %1371 = vmatprep.subr.bf16.mxu0 0
        %1372 = vmatpush2.bf16.msra.mxu0 0
        %1373 = vmatprep.subr.bf16.mxu0 0
        %1374 = vmatpush2.bf16.msra.mxu0 0
        %1375 = vmatprep.mubr.bf16.mxu0 0
        %1376 = vmatmul.mubr.bf16.gmra.mxu0 %v1284
        %v1377 = vpop.f32.mrf.mxu0
        %v1378 = vadd.f32 0.0, %v1377
        %v1379 = vpop.f32.mrf.mxu0
        %v1380 = vpop.f32.mrf.mxu0
        %v1381 = vadd.f32 0.0, %v1380
        %v1382 = vpop.f32.mrf.mxu0
        %1383 = vmatprep.mubr.bf16.mxu0 0
        %1384 = vmatmul.mubr.bf16.gmra.mxu0 %v1287
        %v1385 = vpop.f32.mrf.mxu0
        %v1386 = vadd.f32 0.0, %v1385
        %v1387 = vpop.f32.mrf.mxu0
        %v1388 = vpop.f32.mrf.mxu0
        %v1389 = vpop.f32.mrf.mxu0
        %1390 = vdwg.mxu0
        %v1391 = vld [vmem:[%s21] sm:$0xff]
        %v1392 = vld [vmem:[%s21 + $0x8] sm:$0xff]
        %v1393 = vpack.c.bf16 %v1381, %v1378
        %v1394 = vpack.c.bf16 %v1386, %v1386
        %v1395 = vpack.c.bf16 %v1392, %v1391
        %vm1396 = vcmask 130048
        %v1398 = vsel %vm1396, %v1393, 0
        %v1401 = vsel %vm1396, %v1394, 0
        %1403 = vmatprep.subr.bf16.mxu0 0
        %1404 = vmatpush1.bf16.msra.mxu0 0
        %1405 = vmatprep.subr.bf16.mxu0 0
        %1406 = vmatpush1.bf16.msra.mxu0 0
        %1407 = vmatprep.subr.bf16.mxu0 0
        %1408 = vmatpush1.bf16.msra.mxu0 0
        %1409 = vmatprep.subr.bf16.mxu0 0
        %1410 = vmatpush1.bf16.msra.mxu0 0
        %1411 = vmatprep.subr.bf16.mxu0 0
        %1412 = vmatpush1.bf16.msra.mxu0 0
        %1413 = vmatprep.subr.bf16.mxu0 0
        %1414 = vmatpush1.bf16.msra.mxu0 0
        %1415 = vmatprep.subr.bf16.mxu0 0
        %1416 = vmatpush1.bf16.msra.mxu0 0
        %1417 = vmatprep.subr.bf16.mxu0 0
        %1418 = vmatpush1.bf16.msra.mxu0 %v1395
        %1419 = vmatprep.subr.bf16.mxu0 0
        %1420 = vmatpush2.bf16.msra.mxu0 0
        %1421 = vmatprep.subr.bf16.mxu0 0
        %1422 = vmatpush2.bf16.msra.mxu0 0
        %1423 = vmatprep.subr.bf16.mxu0 0
        %1424 = vmatpush2.bf16.msra.mxu0 0
        %1425 = vmatprep.subr.bf16.mxu0 0
        %1426 = vmatpush2.bf16.msra.mxu0 0
        %1427 = vmatprep.subr.bf16.mxu0 0
        %1428 = vmatpush2.bf16.msra.mxu0 0
        %1429 = vmatprep.subr.bf16.mxu0 0
        %1430 = vmatpush2.bf16.msra.mxu0 0
        %1431 = vmatprep.subr.bf16.mxu0 0
        %1432 = vmatpush2.bf16.msra.mxu0 0
        %1433 = vmatprep.subr.bf16.mxu0 0
        %1434 = vmatpush2.bf16.msra.mxu0 0
        %1435 = vmatprep.mubr.bf16.mxu0 0
        %1436 = vmatmul.mubr.bf16.gmra.mxu0 %v1398
        %v1437 = vpop.f32.mrf.mxu0
        %v1438 = vadd.f32 0.0, %v1437
        %v1439 = vpop.f32.mrf.mxu0
        %v1440 = vpop.f32.mrf.mxu0
        %v1441 = vadd.f32 0.0, %v1440
        %v1442 = vpop.f32.mrf.mxu0
        %1443 = vmatprep.mubr.bf16.mxu0 0
        %1444 = vmatmul.mubr.bf16.gmra.mxu0 %v1401
        %v1445 = vpop.f32.mrf.mxu0
        %v1446 = vadd.f32 0.0, %v1445
        %v1447 = vpop.f32.mrf.mxu0
        %v1448 = vpop.f32.mrf.mxu0
        %v1449 = vpop.f32.mrf.mxu0
        %1450 = vdwg.mxu0
        %v1451 = vadd.f32 %v1324, %v1438
        %v1452 = vadd.f32 %v1327, %v1441
        %v1453 = vadd.f32 %v1332, %v1446
        %v1454 = vmul.f32 %v1451, 0.35355338
        %v1455 = vmul.f32 %v1452, 0.35355338
        %v1456 = vmul.f32 %v1453, 0.35355338
        %1460 = vrot.lane.b32.xlu0 %v1451, 96
        %v1461 = vpop.permute.xlu0 %1460
        %1462 = vrot.lane.b32.xlu0 %v1452, 96
        %v1463 = vpop.permute.xlu0 %1462
        %1464 = vrot.lane.b32.xlu0 %v1453, 96
        %v1465 = vpop.permute.xlu0 %1464
        %vm1466 = vcmask 64512
        %v1468 = vsel %vm1466, %v1454, 0
        %v1471 = vsel %vm1466, %v1455, 0
        %v1474 = vsel %vm1466, %v1456, 0
        %v1476 = vsel %vm1466, %v1461, 0
        %v1478 = vsel %vm1466, %v1463, 0
        %v1480 = vsel %vm1466, %v1465, 0
        %1482 = vmatprep.subr.mxu0 0.0
        %1483 = vmatpush1.xpose.msra.mxu0 0.0
        %1484 = vmatprep.subr.mxu0 0.0
        %1485 = vmatpush1.xpose.msra.mxu0 0.0
        %1486 = vmatprep.subr.mxu0 0.0
        %1487 = vmatpush1.xpose.msra.mxu0 0.0
        %1488 = vmatprep.subr.mxu0 0.0
        %1489 = vmatpush1.xpose.msra.mxu0 0.0
        %1490 = vmatprep.subr.mxu0 0.0
        %1491 = vmatpush1.xpose.msra.mxu0 0.0
        %1492 = vmatprep.subr.mxu0 0.0
        %1493 = vmatpush1.xpose.msra.mxu0 0.0
        %1494 = vmatprep.subr.mxu0 0.0
        %1495 = vmatpush1.xpose.msra.mxu0 0.0
        %1496 = vmatprep.subr.mxu0 0.0
        %1497 = vmatpush1.xpose.msra.mxu0 0.0
        %1498 = vmatprep.subr.mxu0 0.0
        %1499 = vmatpush1.xpose.msra.mxu0 0.0
        %1500 = vmatprep.subr.mxu0 0.0
        %1501 = vmatpush1.xpose.msra.mxu0 0.0
        %1502 = vmatprep.subr.mxu0 0.0
        %1503 = vmatpush1.xpose.msra.mxu0 0.0
        %1504 = vmatprep.subr.mxu0 0.0
        %1505 = vmatpush1.xpose.msra.mxu0 0.0
        %1506 = vmatprep.subr.mxu0 0.0
        %1507 = vmatpush1.xpose.msra.mxu0 0.0
        %1508 = vmatprep.subr.mxu0 0.0
        %1509 = vmatpush1.xpose.msra.mxu0 %v1480
        %1510 = vmatprep.subr.mxu0 0.0
        %1511 = vmatpush1.xpose.msra.mxu0 %v1478
        %1512 = vmatprep.subr.mxu0 0.0
        %1513 = vmatpush1.xpose.msra.mxu0 %v1476
        %1514 = vmatprep.subr.mxu0 0.0
        %1515 = vmatpush2.xpose.msra.mxu0 0.0
        %1516 = vmatprep.subr.mxu0 0.0
        %1517 = vmatpush2.xpose.msra.mxu0 0.0
        %1518 = vmatprep.subr.mxu0 0.0
        %1519 = vmatpush2.xpose.msra.mxu0 0.0
        %1520 = vmatprep.subr.mxu0 0.0
        %1521 = vmatpush2.xpose.msra.mxu0 0.0
        %1522 = vmatprep.subr.mxu0 0.0
        %1523 = vmatpush2.xpose.msra.mxu0 0.0
        %1524 = vmatprep.subr.mxu0 0.0
        %1525 = vmatpush2.xpose.msra.mxu0 0.0
        %1526 = vmatprep.subr.mxu0 0.0
        %1527 = vmatpush2.xpose.msra.mxu0 0.0
        %1528 = vmatprep.subr.mxu0 0.0
        %1529 = vmatpush2.xpose.msra.mxu0 0.0
        %1530 = vmatprep.subr.mxu0 0.0
        %1531 = vmatpush2.xpose.msra.mxu0 0.0
        %1532 = vmatprep.subr.mxu0 0.0
        %1533 = vmatpush2.xpose.msra.mxu0 0.0
        %1534 = vmatprep.subr.mxu0 0.0
        %1535 = vmatpush2.xpose.msra.mxu0 0.0
        %1536 = vmatprep.subr.mxu0 0.0
        %1537 = vmatpush2.xpose.msra.mxu0 0.0
        %1538 = vmatprep.subr.mxu0 0.0
        %1539 = vmatpush2.xpose.msra.mxu0 0.0
        %1540 = vmatprep.subr.mxu0 0.0
        %1541 = vmatpush2.xpose.msra.mxu0 0.0
        %1542 = vmatprep.subr.mxu0 0.0
        %1543 = vmatpush2.xpose.msra.mxu0 0.0
        %1544 = vmatprep.subr.mxu0 0.0
        %1545 = vmatpush2.xpose.msra.mxu0 0.0
        %1546 = vmatprep.mubr.f32.mxu0 0.0
        %1547 = vmatmul.mubr.f32.gmra.mxu0 %v1468
        %v1548 = vpop.f32.mrf.mxu0
        %v1549 = vadd.f32 0.0, %v1548
        %v1550 = vpop.f32.mrf.mxu0
        %1551 = vmatprep.mubr.f32.mxu0 0.0
        %1552 = vmatmul.mubr.f32.gmra.mxu0 %v1471
        %v1553 = vpop.f32.mrf.mxu0
        %v1554 = vadd.f32 0.0, %v1553
        %v1555 = vpop.f32.mrf.mxu0
        %1556 = vmatprep.mubr.f32.mxu0 0.0
        %1557 = vmatmul.mubr.f32.gmra.mxu0 %v1474
        %v1558 = vpop.f32.mrf.mxu0
        %v1559 = vadd.f32 0.0, %v1558
        %v1560 = vpop.f32.mrf.mxu0
        %1561 = vdwg.mxu0
        %vm1562 = vcmask 138240
        %v1563 = vsel %vm1562, %v1549, -inf
        %1564 = vmax.xlane.f32.xlu0 %v1563
        %v1565 = vpop.xlane.xlu0 %1564
        %v1566 = vsel %vm1562, %v1554, -inf
        %1567 = vmax.xlane.f32.xlu0 %v1566
        %v1568 = vpop.xlane.xlu0 %1567
        %vm1569 = vcmask 131072
        %v1570 = vsel %vm1569, %v1559, -inf
        %1571 = vmax.xlane.f32.xlu0 %v1570
        %v1572 = vpop.xlane.xlu0 %1571
        %v1573 = vsub.f32 %v1549, %v1565
        %v1574 = vsub.f32 %v1554, %v1568
        %v1575 = vsub.f32 %v1559, %v1572
        %v1576 = vmul.f32 %v1573, 1.442695
        %v1577 = vpow.pop %v1576
        %v1578 = vmul.f32 %v1574, 1.442695
        %v1579 = vpow.pop %v1578
        %v1580 = vmul.f32 %v1575, 1.442695
        %v1581 = vpow.pop %v1580
        %v1582 = vsel %vm1562, %v1577, 0.0
        %1583 = vadd.xlane.f32.xlu0 %v1582
        %v1584 = vpop.xlane.xlu0 %1583
        %v1585 = vsel %vm1562, %v1579, 0.0
        %1586 = vadd.xlane.f32.xlu0 %v1585
        %v1587 = vpop.xlane.xlu0 %1586
        %v1588 = vsel %vm1569, %v1581, 0.0
        %1589 = vadd.xlane.f32.xlu0 %v1588
        %v1590 = vpop.xlane.xlu0 %1589
        %v1591 = vrcp.pop %v1584
        %v1592 = vrcp.pop %v1587
        %v1593 = vrcp.pop %v1590
        %v1594 = vmul.f32 %v1577, %v1591
        %v1595 = vmul.f32 %v1579, %v1592
        %v1596 = vmul.f32 %v1581, %v1593
        %1597 = vrot.lane.b32.xlu0 %v1451, 64
        %v1598 = vpop.permute.xlu0 %1597
        %1599 = vrot.lane.b32.xlu0 %v1452, 64
        %v1600 = vpop.permute.xlu0 %1599
        %1601 = vrot.lane.b32.xlu0 %v1453, 64
        %v1602 = vpop.permute.xlu0 %1601
        %v1606 = vsel %vm1562, %v1594, 0
        %v1609 = vsel %vm1562, %v1595, 0
        %v1612 = vsel %vm1562, %v1596, 0
        %v1614 = vsel %vm1192, %v1602, 0
        %1616 = vmatprep.subr.mxu0 0.0
        %1617 = vmatpush1.msra.mxu0 0.0
        %1618 = vmatprep.subr.mxu0 0.0
        %1619 = vmatpush1.msra.mxu0 0.0
        %1620 = vmatprep.subr.mxu0 0.0
        %1621 = vmatpush1.msra.mxu0 0.0
        %1622 = vmatprep.subr.mxu0 0.0
        %1623 = vmatpush1.msra.mxu0 0.0
        %1624 = vmatprep.subr.mxu0 0.0
        %1625 = vmatpush1.msra.mxu0 0.0
        %1626 = vmatprep.subr.mxu0 0.0
        %1627 = vmatpush1.msra.mxu0 0.0
        %1628 = vmatprep.subr.mxu0 0.0
        %1629 = vmatpush1.msra.mxu0 0.0
        %1630 = vmatprep.subr.mxu0 0.0
        %1631 = vmatpush1.msra.mxu0 0.0
        %1632 = vmatprep.subr.mxu0 0.0
        %1633 = vmatpush1.msra.mxu0 0.0
        %1634 = vmatprep.subr.mxu0 0.0
        %1635 = vmatpush1.msra.mxu0 0.0
        %1636 = vmatprep.subr.mxu0 0.0
        %1637 = vmatpush1.msra.mxu0 0.0
        %1638 = vmatprep.subr.mxu0 0.0
        %1639 = vmatpush1.msra.mxu0 0.0
        %1640 = vmatprep.subr.mxu0 0.0
        %1641 = vmatpush1.msra.mxu0 0.0
        %1642 = vmatprep.subr.mxu0 0.0
        %1643 = vmatpush1.msra.mxu0 %v1614
        %1644 = vmatprep.subr.mxu0 0.0
        %1645 = vmatpush1.msra.mxu0 %v1600
        %1646 = vmatprep.subr.mxu0 0.0
        %1647 = vmatpush1.msra.mxu0 %v1598
        %1648 = vmatprep.subr.mxu0 0.0
        %1649 = vmatpush2.msra.mxu0 0.0
        %1650 = vmatprep.subr.mxu0 0.0
        %1651 = vmatpush2.msra.mxu0 0.0
        %1652 = vmatprep.subr.mxu0 0.0
        %1653 = vmatpush2.msra.mxu0 0.0
        %1654 = vmatprep.subr.mxu0 0.0
        %1655 = vmatpush2.msra.mxu0 0.0
        %1656 = vmatprep.subr.mxu0 0.0
        %1657 = vmatpush2.msra.mxu0 0.0
        %1658 = vmatprep.subr.mxu0 0.0
        %1659 = vmatpush2.msra.mxu0 0.0
        %1660 = vmatprep.subr.mxu0 0.0
        %1661 = vmatpush2.msra.mxu0 0.0
        %1662 = vmatprep.subr.mxu0 0.0
        %1663 = vmatpush2.msra.mxu0 0.0
        %1664 = vmatprep.subr.mxu0 0.0
        %1665 = vmatpush2.msra.mxu0 0.0
        %1666 = vmatprep.subr.mxu0 0.0
        %1667 = vmatpush2.msra.mxu0 0.0
        %1668 = vmatprep.subr.mxu0 0.0
        %1669 = vmatpush2.msra.mxu0 0.0
        %1670 = vmatprep.subr.mxu0 0.0
        %1671 = vmatpush2.msra.mxu0 0.0
        %1672 = vmatprep.subr.mxu0 0.0
        %1673 = vmatpush2.msra.mxu0 0.0
        %1674 = vmatprep.subr.mxu0 0.0
        %1675 = vmatpush2.msra.mxu0 0.0
        %1676 = vmatprep.subr.mxu0 0.0
        %1677 = vmatpush2.msra.mxu0 0.0
        %1678 = vmatprep.subr.mxu0 0.0
        %1679 = vmatpush2.msra.mxu0 0.0
        %1680 = vmatprep.mubr.f32.mxu0 0.0
        %1681 = vmatmul.mubr.f32.gmra.mxu0 %v1606
        %v1682 = vpop.f32.mrf.mxu0
        %v1683 = vadd.f32 0.0, %v1682
        %v1684 = vpop.f32.mrf.mxu0
        %1685 = vmatprep.mubr.f32.mxu0 0.0
        %1686 = vmatmul.mubr.f32.gmra.mxu0 %v1609
        %v1687 = vpop.f32.mrf.mxu0
        %v1688 = vadd.f32 0.0, %v1687
        %v1689 = vpop.f32.mrf.mxu0
        %1690 = vmatprep.mubr.f32.mxu0 0.0
        %1691 = vmatmul.mubr.f32.gmra.mxu0 %v1612
        %v1692 = vpop.f32.mrf.mxu0
        %v1693 = vadd.f32 0.0, %v1692
        %v1694 = vpop.f32.mrf.mxu0
        %1695 = vdwg.mxu0
        %1696 = vrot.lane.b32.xlu0 %v1454, 120
        %v1697 = vpop.permute.xlu0 %1696
        %1698 = vrot.lane.b32.xlu0 %v1455, 120
        %v1699 = vpop.permute.xlu0 %1698
        %1700 = vrot.lane.b32.xlu0 %v1456, 120
        %v1701 = vpop.permute.xlu0 %1700
        %1702 = vrot.lane.b32.xlu0 %v1451, 88
        %v1703 = vpop.permute.xlu0 %1702
        %1704 = vrot.lane.b32.xlu0 %v1452, 88
        %v1705 = vpop.permute.xlu0 %1704
        %1706 = vrot.lane.b32.xlu0 %v1453, 88
        %v1707 = vpop.permute.xlu0 %1706
        %v1708 = vsel %vm1466, %v1697, 0
        %v1710 = vsel %vm1466, %v1699, 0
        %v1712 = vsel %vm1466, %v1701, 0
        %v1714 = vsel %vm1466, %v1703, 0
        %v1716 = vsel %vm1466, %v1705, 0
        %v1718 = vsel %vm1466, %v1707, 0
        %1720 = vmatprep.subr.mxu0 0.0
        %1721 = vmatpush1.xpose.msra.mxu0 0.0
        %1722 = vmatprep.subr.mxu0 0.0
        %1723 = vmatpush1.xpose.msra.mxu0 0.0
        %1724 = vmatprep.subr.mxu0 0.0
        %1725 = vmatpush1.xpose.msra.mxu0 0.0
        %1726 = vmatprep.subr.mxu0 0.0
        %1727 = vmatpush1.xpose.msra.mxu0 0.0
        %1728 = vmatprep.subr.mxu0 0.0
        %1729 = vmatpush1.xpose.msra.mxu0 0.0
        %1730 = vmatprep.subr.mxu0 0.0
        %1731 = vmatpush1.xpose.msra.mxu0 0.0
        %1732 = vmatprep.subr.mxu0 0.0
        %1733 = vmatpush1.xpose.msra.mxu0 0.0
        %1734 = vmatprep.subr.mxu0 0.0
        %1735 = vmatpush1.xpose.msra.mxu0 0.0
        %1736 = vmatprep.subr.mxu0 0.0
        %1737 = vmatpush1.xpose.msra.mxu0 0.0
        %1738 = vmatprep.subr.mxu0 0.0
        %1739 = vmatpush1.xpose.msra.mxu0 0.0
        %1740 = vmatprep.subr.mxu0 0.0
        %1741 = vmatpush1.xpose.msra.mxu0 0.0
        %1742 = vmatprep.subr.mxu0 0.0
        %1743 = vmatpush1.xpose.msra.mxu0 0.0
        %1744 = vmatprep.subr.mxu0 0.0
        %1745 = vmatpush1.xpose.msra.mxu0 0.0
        %1746 = vmatprep.subr.mxu0 0.0
        %1747 = vmatpush1.xpose.msra.mxu0 %v1718
        %1748 = vmatprep.subr.mxu0 0.0
        %1749 = vmatpush1.xpose.msra.mxu0 %v1716
        %1750 = vmatprep.subr.mxu0 0.0
        %1751 = vmatpush1.xpose.msra.mxu0 %v1714
        %1752 = vmatprep.subr.mxu0 0.0
        %1753 = vmatpush2.xpose.msra.mxu0 0.0
        %1754 = vmatprep.subr.mxu0 0.0
        %1755 = vmatpush2.xpose.msra.mxu0 0.0
        %1756 = vmatprep.subr.mxu0 0.0
        %1757 = vmatpush2.xpose.msra.mxu0 0.0
        %1758 = vmatprep.subr.mxu0 0.0
        %1759 = vmatpush2.xpose.msra.mxu0 0.0
        %1760 = vmatprep.subr.mxu0 0.0
        %1761 = vmatpush2.xpose.msra.mxu0 0.0
        %1762 = vmatprep.subr.mxu0 0.0
        %1763 = vmatpush2.xpose.msra.mxu0 0.0
        %1764 = vmatprep.subr.mxu0 0.0
        %1765 = vmatpush2.xpose.msra.mxu0 0.0
        %1766 = vmatprep.subr.mxu0 0.0
        %1767 = vmatpush2.xpose.msra.mxu0 0.0
        %1768 = vmatprep.subr.mxu0 0.0
        %1769 = vmatpush2.xpose.msra.mxu0 0.0
        %1770 = vmatprep.subr.mxu0 0.0
        %1771 = vmatpush2.xpose.msra.mxu0 0.0
        %1772 = vmatprep.subr.mxu0 0.0
        %1773 = vmatpush2.xpose.msra.mxu0 0.0
        %1774 = vmatprep.subr.mxu0 0.0
        %1775 = vmatpush2.xpose.msra.mxu0 0.0
        %1776 = vmatprep.subr.mxu0 0.0
        %1777 = vmatpush2.xpose.msra.mxu0 0.0
        %1778 = vmatprep.subr.mxu0 0.0
        %1779 = vmatpush2.xpose.msra.mxu0 0.0
        %1780 = vmatprep.subr.mxu0 0.0
        %1781 = vmatpush2.xpose.msra.mxu0 0.0
        %1782 = vmatprep.subr.mxu0 0.0
        %1783 = vmatpush2.xpose.msra.mxu0 0.0
        %1784 = vmatprep.mubr.f32.mxu0 0.0
        %1785 = vmatmul.mubr.f32.gmra.mxu0 %v1708
        %v1786 = vpop.f32.mrf.mxu0
        %v1787 = vadd.f32 0.0, %v1786
        %v1788 = vpop.f32.mrf.mxu0
        %1789 = vmatprep.mubr.f32.mxu0 0.0
        %1790 = vmatmul.mubr.f32.gmra.mxu0 %v1710
        %v1791 = vpop.f32.mrf.mxu0
        %v1792 = vadd.f32 0.0, %v1791
        %v1793 = vpop.f32.mrf.mxu0
        %1794 = vmatprep.mubr.f32.mxu0 0.0
        %1795 = vmatmul.mubr.f32.gmra.mxu0 %v1712
        %v1796 = vpop.f32.mrf.mxu0
        %v1797 = vadd.f32 0.0, %v1796
        %v1798 = vpop.f32.mrf.mxu0
        %1799 = vdwg.mxu0
        %v1800 = vsel %vm1562, %v1787, -inf
        %1801 = vmax.xlane.f32.xlu0 %v1800
        %v1802 = vpop.xlane.xlu0 %1801
        %v1803 = vsel %vm1562, %v1792, -inf
        %1804 = vmax.xlane.f32.xlu0 %v1803
        %v1805 = vpop.xlane.xlu0 %1804
        %v1806 = vsel %vm1569, %v1797, -inf
        %1807 = vmax.xlane.f32.xlu0 %v1806
        %v1808 = vpop.xlane.xlu0 %1807
        %v1809 = vsub.f32 %v1787, %v1802
        %v1810 = vsub.f32 %v1792, %v1805
        %v1811 = vsub.f32 %v1797, %v1808
        %v1812 = vmul.f32 %v1809, 1.442695
        %v1813 = vpow.pop %v1812
        %v1814 = vmul.f32 %v1810, 1.442695
        %v1815 = vpow.pop %v1814
        %v1816 = vmul.f32 %v1811, 1.442695
        %v1817 = vpow.pop %v1816
        %v1818 = vsel %vm1562, %v1813, 0.0
        %1819 = vadd.xlane.f32.xlu0 %v1818
        %v1820 = vpop.xlane.xlu0 %1819
        %v1821 = vsel %vm1562, %v1815, 0.0
        %1822 = vadd.xlane.f32.xlu0 %v1821
        %v1823 = vpop.xlane.xlu0 %1822
        %v1824 = vsel %vm1569, %v1817, 0.0
        %1825 = vadd.xlane.f32.xlu0 %v1824
        %v1826 = vpop.xlane.xlu0 %1825
        %v1827 = vrcp.pop %v1820
        %v1828 = vrcp.pop %v1823
        %v1829 = vrcp.pop %v1826
        %v1830 = vmul.f32 %v1813, %v1827
        %v1831 = vmul.f32 %v1815, %v1828
        %v1832 = vmul.f32 %v1817, %v1829
        %1833 = vrot.lane.b32.xlu0 %v1451, 56
        %v1834 = vpop.permute.xlu0 %1833
        %1835 = vrot.lane.b32.xlu0 %v1452, 56
        %v1836 = vpop.permute.xlu0 %1835
        %1837 = vrot.lane.b32.xlu0 %v1453, 56
        %v1838 = vpop.permute.xlu0 %1837
        %v1842 = vsel %vm1562, %v1830, 0
        %v1845 = vsel %vm1562, %v1831, 0
        %v1848 = vsel %vm1562, %v1832, 0
        %v1850 = vsel %vm1192, %v1838, 0
        %1852 = vmatprep.subr.mxu0 0.0
        %1853 = vmatpush1.msra.mxu0 0.0
        %1854 = vmatprep.subr.mxu0 0.0
        %1855 = vmatpush1.msra.mxu0 0.0
        %1856 = vmatprep.subr.mxu0 0.0
        %1857 = vmatpush1.msra.mxu0 0.0
        %1858 = vmatprep.subr.mxu0 0.0
        %1859 = vmatpush1.msra.mxu0 0.0
        %1860 = vmatprep.subr.mxu0 0.0
        %1861 = vmatpush1.msra.mxu0 0.0
        %1862 = vmatprep.subr.mxu0 0.0
        %1863 = vmatpush1.msra.mxu0 0.0
        %1864 = vmatprep.subr.mxu0 0.0
        %1865 = vmatpush1.msra.mxu0 0.0
        %1866 = vmatprep.subr.mxu0 0.0
        %1867 = vmatpush1.msra.mxu0 0.0
        %1868 = vmatprep.subr.mxu0 0.0
        %1869 = vmatpush1.msra.mxu0 0.0
        %1870 = vmatprep.subr.mxu0 0.0
        %1871 = vmatpush1.msra.mxu0 0.0
        %1872 = vmatprep.subr.mxu0 0.0
        %1873 = vmatpush1.msra.mxu0 0.0
        %1874 = vmatprep.subr.mxu0 0.0
        %1875 = vmatpush1.msra.mxu0 0.0
        %1876 = vmatprep.subr.mxu0 0.0
        %1877 = vmatpush1.msra.mxu0 0.0
        %1878 = vmatprep.subr.mxu0 0.0
        %1879 = vmatpush1.msra.mxu0 %v1850
        %1880 = vmatprep.subr.mxu0 0.0
        %1881 = vmatpush1.msra.mxu0 %v1836
        %1882 = vmatprep.subr.mxu0 0.0
        %1883 = vmatpush1.msra.mxu0 %v1834
        %1884 = vmatprep.subr.mxu0 0.0
        %1885 = vmatpush2.msra.mxu0 0.0
        %1886 = vmatprep.subr.mxu0 0.0
        %1887 = vmatpush2.msra.mxu0 0.0
        %1888 = vmatprep.subr.mxu0 0.0
        %1889 = vmatpush2.msra.mxu0 0.0
        %1890 = vmatprep.subr.mxu0 0.0
        %1891 = vmatpush2.msra.mxu0 0.0
        %1892 = vmatprep.subr.mxu0 0.0
        %1893 = vmatpush2.msra.mxu0 0.0
        %1894 = vmatprep.subr.mxu0 0.0
        %1895 = vmatpush2.msra.mxu0 0.0
        %1896 = vmatprep.subr.mxu0 0.0
        %1897 = vmatpush2.msra.mxu0 0.0
        %1898 = vmatprep.subr.mxu0 0.0
        %1899 = vmatpush2.msra.mxu0 0.0
        %1900 = vmatprep.subr.mxu0 0.0
        %1901 = vmatpush2.msra.mxu0 0.0
        %1902 = vmatprep.subr.mxu0 0.0
        %1903 = vmatpush2.msra.mxu0 0.0
        %1904 = vmatprep.subr.mxu0 0.0
        %1905 = vmatpush2.msra.mxu0 0.0
        %1906 = vmatprep.subr.mxu0 0.0
        %1907 = vmatpush2.msra.mxu0 0.0
        %1908 = vmatprep.subr.mxu0 0.0
        %1909 = vmatpush2.msra.mxu0 0.0
        %1910 = vmatprep.subr.mxu0 0.0
        %1911 = vmatpush2.msra.mxu0 0.0
        %1912 = vmatprep.subr.mxu0 0.0
        %1913 = vmatpush2.msra.mxu0 0.0
        %1914 = vmatprep.subr.mxu0 0.0
        %1915 = vmatpush2.msra.mxu0 0.0
        %1916 = vmatprep.mubr.f32.mxu0 0.0
        %1917 = vmatmul.mubr.f32.gmra.mxu0 %v1842
        %v1918 = vpop.f32.mrf.mxu0
        %v1919 = vadd.f32 0.0, %v1918
        %v1920 = vpop.f32.mrf.mxu0
        %1921 = vmatprep.mubr.f32.mxu0 0.0
        %1922 = vmatmul.mubr.f32.gmra.mxu0 %v1845
        %v1923 = vpop.f32.mrf.mxu0
        %v1924 = vadd.f32 0.0, %v1923
        %v1925 = vpop.f32.mrf.mxu0
        %1926 = vmatprep.mubr.f32.mxu0 0.0
        %1927 = vmatmul.mubr.f32.gmra.mxu0 %v1848
        %v1928 = vpop.f32.mrf.mxu0
        %v1929 = vadd.f32 0.0, %v1928
        %v1930 = vpop.f32.mrf.mxu0
        %1931 = vdwg.mxu0
        %1932 = vrot.lane.b32.xlu0 %v1454, 112
        %v1933 = vpop.permute.xlu0 %1932
        %1934 = vrot.lane.b32.xlu0 %v1455, 112
        %v1935 = vpop.permute.xlu0 %1934
        %1936 = vrot.lane.b32.xlu0 %v1456, 112
        %v1937 = vpop.permute.xlu0 %1936
        %1938 = vrot.lane.b32.xlu0 %v1451, 80
        %v1939 = vpop.permute.xlu0 %1938
        %1940 = vrot.lane.b32.xlu0 %v1452, 80
        %v1941 = vpop.permute.xlu0 %1940
        %1942 = vrot.lane.b32.xlu0 %v1453, 80
        %v1943 = vpop.permute.xlu0 %1942
        %v1944 = vsel %vm1466, %v1933, 0
        %v1946 = vsel %vm1466, %v1935, 0
        %v1948 = vsel %vm1466, %v1937, 0
        %v1950 = vsel %vm1466, %v1939, 0
        %v1952 = vsel %vm1466, %v1941, 0
        %v1954 = vsel %vm1466, %v1943, 0
        %1956 = vmatprep.subr.mxu0 0.0
        %1957 = vmatpush1.xpose.msra.mxu0 0.0
        %1958 = vmatprep.subr.mxu0 0.0
        %1959 = vmatpush1.xpose.msra.mxu0 0.0
        %1960 = vmatprep.subr.mxu0 0.0
        %1961 = vmatpush1.xpose.msra.mxu0 0.0
        %1962 = vmatprep.subr.mxu0 0.0
        %1963 = vmatpush1.xpose.msra.mxu0 0.0
        %1964 = vmatprep.subr.mxu0 0.0
        %1965 = vmatpush1.xpose.msra.mxu0 0.0
        %1966 = vmatprep.subr.mxu0 0.0
        %1967 = vmatpush1.xpose.msra.mxu0 0.0
        %1968 = vmatprep.subr.mxu0 0.0
        %1969 = vmatpush1.xpose.msra.mxu0 0.0
        %1970 = vmatprep.subr.mxu0 0.0
        %1971 = vmatpush1.xpose.msra.mxu0 0.0
        %1972 = vmatprep.subr.mxu0 0.0
        %1973 = vmatpush1.xpose.msra.mxu0 0.0
        %1974 = vmatprep.subr.mxu0 0.0
        %1975 = vmatpush1.xpose.msra.mxu0 0.0
        %1976 = vmatprep.subr.mxu0 0.0
        %1977 = vmatpush1.xpose.msra.mxu0 0.0
        %1978 = vmatprep.subr.mxu0 0.0
        %1979 = vmatpush1.xpose.msra.mxu0 0.0
        %1980 = vmatprep.subr.mxu0 0.0
        %1981 = vmatpush1.xpose.msra.mxu0 0.0
        %1982 = vmatprep.subr.mxu0 0.0
        %1983 = vmatpush1.xpose.msra.mxu0 %v1954
        %1984 = vmatprep.subr.mxu0 0.0
        %1985 = vmatpush1.xpose.msra.mxu0 %v1952
        %1986 = vmatprep.subr.mxu0 0.0
        %1987 = vmatpush1.xpose.msra.mxu0 %v1950
        %1988 = vmatprep.subr.mxu0 0.0
        %1989 = vmatpush2.xpose.msra.mxu0 0.0
        %1990 = vmatprep.subr.mxu0 0.0
        %1991 = vmatpush2.xpose.msra.mxu0 0.0
        %1992 = vmatprep.subr.mxu0 0.0
        %1993 = vmatpush2.xpose.msra.mxu0 0.0
        %1994 = vmatprep.subr.mxu0 0.0
        %1995 = vmatpush2.xpose.msra.mxu0 0.0
        %1996 = vmatprep.subr.mxu0 0.0
        %1997 = vmatpush2.xpose.msra.mxu0 0.0
        %1998 = vmatprep.subr.mxu0 0.0
        %1999 = vmatpush2.xpose.msra.mxu0 0.0
        %2000 = vmatprep.subr.mxu0 0.0
        %2001 = vmatpush2.xpose.msra.mxu0 0.0
        %2002 = vmatprep.subr.mxu0 0.0
        %2003 = vmatpush2.xpose.msra.mxu0 0.0
        %2004 = vmatprep.subr.mxu0 0.0
        %2005 = vmatpush2.xpose.msra.mxu0 0.0
        %2006 = vmatprep.subr.mxu0 0.0
        %2007 = vmatpush2.xpose.msra.mxu0 0.0
        %2008 = vmatprep.subr.mxu0 0.0
        %2009 = vmatpush2.xpose.msra.mxu0 0.0
        %2010 = vmatprep.subr.mxu0 0.0
        %2011 = vmatpush2.xpose.msra.mxu0 0.0
        %2012 = vmatprep.subr.mxu0 0.0
        %2013 = vmatpush2.xpose.msra.mxu0 0.0
        %2014 = vmatprep.subr.mxu0 0.0
        %2015 = vmatpush2.xpose.msra.mxu0 0.0
        %2016 = vmatprep.subr.mxu0 0.0
        %2017 = vmatpush2.xpose.msra.mxu0 0.0
        %2018 = vmatprep.subr.mxu0 0.0
        %2019 = vmatpush2.xpose.msra.mxu0 0.0
        %2020 = vmatprep.mubr.f32.mxu0 0.0
        %2021 = vmatmul.mubr.f32.gmra.mxu0 %v1944
        %v2022 = vpop.f32.mrf.mxu0
        %v2023 = vadd.f32 0.0, %v2022
        %v2024 = vpop.f32.mrf.mxu0
        %2025 = vmatprep.mubr.f32.mxu0 0.0
        %2026 = vmatmul.mubr.f32.gmra.mxu0 %v1946
        %v2027 = vpop.f32.mrf.mxu0
        %v2028 = vadd.f32 0.0, %v2027
        %v2029 = vpop.f32.mrf.mxu0
        %2030 = vmatprep.mubr.f32.mxu0 0.0
        %2031 = vmatmul.mubr.f32.gmra.mxu0 %v1948
        %v2032 = vpop.f32.mrf.mxu0
        %v2033 = vadd.f32 0.0, %v2032
        %v2034 = vpop.f32.mrf.mxu0
        %2035 = vdwg.mxu0
        %v2036 = vsel %vm1562, %v2023, -inf
        %2037 = vmax.xlane.f32.xlu0 %v2036
        %v2038 = vpop.xlane.xlu0 %2037
        %v2039 = vsel %vm1562, %v2028, -inf
        %2040 = vmax.xlane.f32.xlu0 %v2039
        %v2041 = vpop.xlane.xlu0 %2040
        %v2042 = vsel %vm1569, %v2033, -inf
        %2043 = vmax.xlane.f32.xlu0 %v2042
        %v2044 = vpop.xlane.xlu0 %2043
        %v2045 = vsub.f32 %v2023, %v2038
        %v2046 = vsub.f32 %v2028, %v2041
        %v2047 = vsub.f32 %v2033, %v2044
        %v2048 = vmul.f32 %v2045, 1.442695
        %v2049 = vpow.pop %v2048
        %v2050 = vmul.f32 %v2046, 1.442695
        %v2051 = vpow.pop %v2050
        %v2052 = vmul.f32 %v2047, 1.442695
        %v2053 = vpow.pop %v2052
        %v2054 = vsel %vm1562, %v2049, 0.0
        %2055 = vadd.xlane.f32.xlu0 %v2054
        %v2056 = vpop.xlane.xlu0 %2055
        %v2057 = vsel %vm1562, %v2051, 0.0
        %2058 = vadd.xlane.f32.xlu0 %v2057
        %v2059 = vpop.xlane.xlu0 %2058
        %v2060 = vsel %vm1569, %v2053, 0.0
        %2061 = vadd.xlane.f32.xlu0 %v2060
        %v2062 = vpop.xlane.xlu0 %2061
        %v2063 = vrcp.pop %v2056
        %v2064 = vrcp.pop %v2059
        %v2065 = vrcp.pop %v2062
        %v2066 = vmul.f32 %v2049, %v2063
        %v2067 = vmul.f32 %v2051, %v2064
        %v2068 = vmul.f32 %v2053, %v2065
        %2069 = vrot.lane.b32.xlu0 %v1451, 48
        %v2070 = vpop.permute.xlu0 %2069
        %2071 = vrot.lane.b32.xlu0 %v1452, 48
        %v2072 = vpop.permute.xlu0 %2071
        %2073 = vrot.lane.b32.xlu0 %v1453, 48
        %v2074 = vpop.permute.xlu0 %2073
        %v2078 = vsel %vm1562, %v2066, 0
        %v2081 = vsel %vm1562, %v2067, 0
        %v2084 = vsel %vm1562, %v2068, 0
        %v2086 = vsel %vm1192, %v2074, 0
        %2088 = vmatprep.subr.mxu0 0.0
        %2089 = vmatpush1.msra.mxu0 0.0
        %2090 = vmatprep.subr.mxu0 0.0
        %2091 = vmatpush1.msra.mxu0 0.0
        %2092 = vmatprep.subr.mxu0 0.0
        %2093 = vmatpush1.msra.mxu0 0.0
        %2094 = vmatprep.subr.mxu0 0.0
        %2095 = vmatpush1.msra.mxu0 0.0
        %2096 = vmatprep.subr.mxu0 0.0
        %2097 = vmatpush1.msra.mxu0 0.0
        %2098 = vmatprep.subr.mxu0 0.0
        %2099 = vmatpush1.msra.mxu0 0.0
        %2100 = vmatprep.subr.mxu0 0.0
        %2101 = vmatpush1.msra.mxu0 0.0
        %2102 = vmatprep.subr.mxu0 0.0
        %2103 = vmatpush1.msra.mxu0 0.0
        %2104 = vmatprep.subr.mxu0 0.0
        %2105 = vmatpush1.msra.mxu0 0.0
        %2106 = vmatprep.subr.mxu0 0.0
        %2107 = vmatpush1.msra.mxu0 0.0
        %2108 = vmatprep.subr.mxu0 0.0
        %2109 = vmatpush1.msra.mxu0 0.0
        %2110 = vmatprep.subr.mxu0 0.0
        %2111 = vmatpush1.msra.mxu0 0.0
        %2112 = vmatprep.subr.mxu0 0.0
        %2113 = vmatpush1.msra.mxu0 0.0
        %2114 = vmatprep.subr.mxu0 0.0
        %2115 = vmatpush1.msra.mxu0 %v2086
        %2116 = vmatprep.subr.mxu0 0.0
        %2117 = vmatpush1.msra.mxu0 %v2072
        %2118 = vmatprep.subr.mxu0 0.0
        %2119 = vmatpush1.msra.mxu0 %v2070
        %2120 = vmatprep.subr.mxu0 0.0
        %2121 = vmatpush2.msra.mxu0 0.0
        %2122 = vmatprep.subr.mxu0 0.0
        %2123 = vmatpush2.msra.mxu0 0.0
        %2124 = vmatprep.subr.mxu0 0.0
        %2125 = vmatpush2.msra.mxu0 0.0
        %2126 = vmatprep.subr.mxu0 0.0
        %2127 = vmatpush2.msra.mxu0 0.0
        %2128 = vmatprep.subr.mxu0 0.0
        %2129 = vmatpush2.msra.mxu0 0.0
        %2130 = vmatprep.subr.mxu0 0.0
        %2131 = vmatpush2.msra.mxu0 0.0
        %2132 = vmatprep.subr.mxu0 0.0
        %2133 = vmatpush2.msra.mxu0 0.0
        %2134 = vmatprep.subr.mxu0 0.0
        %2135 = vmatpush2.msra.mxu0 0.0
        %2136 = vmatprep.subr.mxu0 0.0
        %2137 = vmatpush2.msra.mxu0 0.0
        %2138 = vmatprep.subr.mxu0 0.0
        %2139 = vmatpush2.msra.mxu0 0.0
        %2140 = vmatprep.subr.mxu0 0.0
        %2141 = vmatpush2.msra.mxu0 0.0
        %2142 = vmatprep.subr.mxu0 0.0
        %2143 = vmatpush2.msra.mxu0 0.0
        %2144 = vmatprep.subr.mxu0 0.0
        %2145 = vmatpush2.msra.mxu0 0.0
        %2146 = vmatprep.subr.mxu0 0.0
        %2147 = vmatpush2.msra.mxu0 0.0
        %2148 = vmatprep.subr.mxu0 0.0
        %2149 = vmatpush2.msra.mxu0 0.0
        %2150 = vmatprep.subr.mxu0 0.0
        %2151 = vmatpush2.msra.mxu0 0.0
        %2152 = vmatprep.mubr.f32.mxu0 0.0
        %2153 = vmatmul.mubr.f32.gmra.mxu0 %v2078
        %v2154 = vpop.f32.mrf.mxu0
        %v2155 = vadd.f32 0.0, %v2154
        %v2156 = vpop.f32.mrf.mxu0
        %2157 = vmatprep.mubr.f32.mxu0 0.0
        %2158 = vmatmul.mubr.f32.gmra.mxu0 %v2081
        %v2159 = vpop.f32.mrf.mxu0
        %v2160 = vadd.f32 0.0, %v2159
        %v2161 = vpop.f32.mrf.mxu0
        %2162 = vmatprep.mubr.f32.mxu0 0.0
        %2163 = vmatmul.mubr.f32.gmra.mxu0 %v2084
        %v2164 = vpop.f32.mrf.mxu0
        %v2165 = vadd.f32 0.0, %v2164
        %v2166 = vpop.f32.mrf.mxu0
        %2167 = vdwg.mxu0
        %2168 = vrot.lane.b32.xlu0 %v1454, 104
        %v2169 = vpop.permute.xlu0 %2168
        %2170 = vrot.lane.b32.xlu0 %v1455, 104
        %v2171 = vpop.permute.xlu0 %2170
        %2172 = vrot.lane.b32.xlu0 %v1456, 104
        %v2173 = vpop.permute.xlu0 %2172
        %2174 = vrot.lane.b32.xlu0 %v1451, 72
        %v2175 = vpop.permute.xlu0 %2174
        %2176 = vrot.lane.b32.xlu0 %v1452, 72
        %v2177 = vpop.permute.xlu0 %2176
        %2178 = vrot.lane.b32.xlu0 %v1453, 72
        %v2179 = vpop.permute.xlu0 %2178
        %v2180 = vsel %vm1466, %v2169, 0
        %v2182 = vsel %vm1466, %v2171, 0
        %v2184 = vsel %vm1466, %v2173, 0
        %v2186 = vsel %vm1466, %v2175, 0
        %v2188 = vsel %vm1466, %v2177, 0
        %v2190 = vsel %vm1466, %v2179, 0
        %2192 = vmatprep.subr.mxu0 0.0
        %2193 = vmatpush1.xpose.msra.mxu0 0.0
        %2194 = vmatprep.subr.mxu0 0.0
        %2195 = vmatpush1.xpose.msra.mxu0 0.0
        %2196 = vmatprep.subr.mxu0 0.0
        %2197 = vmatpush1.xpose.msra.mxu0 0.0
        %2198 = vmatprep.subr.mxu0 0.0
        %2199 = vmatpush1.xpose.msra.mxu0 0.0
        %2200 = vmatprep.subr.mxu0 0.0
        %2201 = vmatpush1.xpose.msra.mxu0 0.0
        %2202 = vmatprep.subr.mxu0 0.0
        %2203 = vmatpush1.xpose.msra.mxu0 0.0
        %2204 = vmatprep.subr.mxu0 0.0
        %2205 = vmatpush1.xpose.msra.mxu0 0.0
        %2206 = vmatprep.subr.mxu0 0.0
        %2207 = vmatpush1.xpose.msra.mxu0 0.0
        %2208 = vmatprep.subr.mxu0 0.0
        %2209 = vmatpush1.xpose.msra.mxu0 0.0
        %2210 = vmatprep.subr.mxu0 0.0
        %2211 = vmatpush1.xpose.msra.mxu0 0.0
        %2212 = vmatprep.subr.mxu0 0.0
        %2213 = vmatpush1.xpose.msra.mxu0 0.0
        %2214 = vmatprep.subr.mxu0 0.0
        %2215 = vmatpush1.xpose.msra.mxu0 0.0
        %2216 = vmatprep.subr.mxu0 0.0
        %2217 = vmatpush1.xpose.msra.mxu0 0.0
        %2218 = vmatprep.subr.mxu0 0.0
        %2219 = vmatpush1.xpose.msra.mxu0 %v2190
        %2220 = vmatprep.subr.mxu0 0.0
        %2221 = vmatpush1.xpose.msra.mxu0 %v2188
        %2222 = vmatprep.subr.mxu0 0.0
        %2223 = vmatpush1.xpose.msra.mxu0 %v2186
        %2224 = vmatprep.subr.mxu0 0.0
        %2225 = vmatpush2.xpose.msra.mxu0 0.0
        %2226 = vmatprep.subr.mxu0 0.0
        %2227 = vmatpush2.xpose.msra.mxu0 0.0
        %2228 = vmatprep.subr.mxu0 0.0
        %2229 = vmatpush2.xpose.msra.mxu0 0.0
        %2230 = vmatprep.subr.mxu0 0.0
        %2231 = vmatpush2.xpose.msra.mxu0 0.0
        %2232 = vmatprep.subr.mxu0 0.0
        %2233 = vmatpush2.xpose.msra.mxu0 0.0
        %2234 = vmatprep.subr.mxu0 0.0
        %2235 = vmatpush2.xpose.msra.mxu0 0.0
        %2236 = vmatprep.subr.mxu0 0.0
        %2237 = vmatpush2.xpose.msra.mxu0 0.0
        %2238 = vmatprep.subr.mxu0 0.0
        %2239 = vmatpush2.xpose.msra.mxu0 0.0
        %2240 = vmatprep.subr.mxu0 0.0
        %2241 = vmatpush2.xpose.msra.mxu0 0.0
        %2242 = vmatprep.subr.mxu0 0.0
        %2243 = vmatpush2.xpose.msra.mxu0 0.0
        %2244 = vmatprep.subr.mxu0 0.0
        %2245 = vmatpush2.xpose.msra.mxu0 0.0
        %2246 = vmatprep.subr.mxu0 0.0
        %2247 = vmatpush2.xpose.msra.mxu0 0.0
        %2248 = vmatprep.subr.mxu0 0.0
        %2249 = vmatpush2.xpose.msra.mxu0 0.0
        %2250 = vmatprep.subr.mxu0 0.0
        %2251 = vmatpush2.xpose.msra.mxu0 0.0
        %2252 = vmatprep.subr.mxu0 0.0
        %2253 = vmatpush2.xpose.msra.mxu0 0.0
        %2254 = vmatprep.subr.mxu0 0.0
        %2255 = vmatpush2.xpose.msra.mxu0 0.0
        %2256 = vmatprep.mubr.f32.mxu0 0.0
        %2257 = vmatmul.mubr.f32.gmra.mxu0 %v2180
        %v2258 = vpop.f32.mrf.mxu0
        %v2259 = vadd.f32 0.0, %v2258
        %v2260 = vpop.f32.mrf.mxu0
        %2261 = vmatprep.mubr.f32.mxu0 0.0
        %2262 = vmatmul.mubr.f32.gmra.mxu0 %v2182
        %v2263 = vpop.f32.mrf.mxu0
        %v2264 = vadd.f32 0.0, %v2263
        %v2265 = vpop.f32.mrf.mxu0
        %2266 = vmatprep.mubr.f32.mxu0 0.0
        %2267 = vmatmul.mubr.f32.gmra.mxu0 %v2184
        %v2268 = vpop.f32.mrf.mxu0
        %v2269 = vadd.f32 0.0, %v2268
        %v2270 = vpop.f32.mrf.mxu0
        %2271 = vdwg.mxu0
        %v2272 = vsel %vm1562, %v2259, -inf
        %2273 = vmax.xlane.f32.xlu0 %v2272
        %v2274 = vpop.xlane.xlu0 %2273
        %v2275 = vsel %vm1562, %v2264, -inf
        %2276 = vmax.xlane.f32.xlu0 %v2275
        %v2277 = vpop.xlane.xlu0 %2276
        %v2278 = vsel %vm1569, %v2269, -inf
        %2279 = vmax.xlane.f32.xlu0 %v2278
        %v2280 = vpop.xlane.xlu0 %2279
        %v2281 = vsub.f32 %v2259, %v2274
        %v2282 = vsub.f32 %v2264, %v2277
        %v2283 = vsub.f32 %v2269, %v2280
        %v2284 = vmul.f32 %v2281, 1.442695
        %v2285 = vpow.pop %v2284
        %v2286 = vmul.f32 %v2282, 1.442695
        %v2287 = vpow.pop %v2286
        %v2288 = vmul.f32 %v2283, 1.442695
        %v2289 = vpow.pop %v2288
        %v2290 = vsel %vm1562, %v2285, 0.0
        %2291 = vadd.xlane.f32.xlu0 %v2290
        %v2292 = vpop.xlane.xlu0 %2291
        %v2293 = vsel %vm1562, %v2287, 0.0
        %2294 = vadd.xlane.f32.xlu0 %v2293
        %v2295 = vpop.xlane.xlu0 %2294
        %v2296 = vsel %vm1569, %v2289, 0.0
        %2297 = vadd.xlane.f32.xlu0 %v2296
        %v2298 = vpop.xlane.xlu0 %2297
        %v2299 = vrcp.pop %v2292
        %v2300 = vrcp.pop %v2295
        %v2301 = vrcp.pop %v2298
        %v2302 = vmul.f32 %v2285, %v2299
        %v2303 = vmul.f32 %v2287, %v2300
        %v2304 = vmul.f32 %v2289, %v2301
        %2305 = vrot.lane.b32.xlu0 %v1451, 40
        %v2306 = vpop.permute.xlu0 %2305
        %2307 = vrot.lane.b32.xlu0 %v1452, 40
        %v2308 = vpop.permute.xlu0 %2307
        %2309 = vrot.lane.b32.xlu0 %v1453, 40
        %v2310 = vpop.permute.xlu0 %2309
        %v2314 = vsel %vm1562, %v2302, 0
        %v2317 = vsel %vm1562, %v2303, 0
        %v2320 = vsel %vm1562, %v2304, 0
        %v2322 = vsel %vm1192, %v2310, 0
        %2324 = vmatprep.subr.mxu0 0.0
        %2325 = vmatpush1.msra.mxu0 0.0
        %2326 = vmatprep.subr.mxu0 0.0
        %2327 = vmatpush1.msra.mxu0 0.0
        %2328 = vmatprep.subr.mxu0 0.0
        %2329 = vmatpush1.msra.mxu0 0.0
        %2330 = vmatprep.subr.mxu0 0.0
        %2331 = vmatpush1.msra.mxu0 0.0
        %2332 = vmatprep.subr.mxu0 0.0
        %2333 = vmatpush1.msra.mxu0 0.0
        %2334 = vmatprep.subr.mxu0 0.0
        %2335 = vmatpush1.msra.mxu0 0.0
        %2336 = vmatprep.subr.mxu0 0.0
        %2337 = vmatpush1.msra.mxu0 0.0
        %2338 = vmatprep.subr.mxu0 0.0
        %2339 = vmatpush1.msra.mxu0 0.0
        %2340 = vmatprep.subr.mxu0 0.0
        %2341 = vmatpush1.msra.mxu0 0.0
        %2342 = vmatprep.subr.mxu0 0.0
        %2343 = vmatpush1.msra.mxu0 0.0
        %2344 = vmatprep.subr.mxu0 0.0
        %2345 = vmatpush1.msra.mxu0 0.0
        %2346 = vmatprep.subr.mxu0 0.0
        %2347 = vmatpush1.msra.mxu0 0.0
        %2348 = vmatprep.subr.mxu0 0.0
        %2349 = vmatpush1.msra.mxu0 0.0
        %2350 = vmatprep.subr.mxu0 0.0
        %2351 = vmatpush1.msra.mxu0 %v2322
        %2352 = vmatprep.subr.mxu0 0.0
        %2353 = vmatpush1.msra.mxu0 %v2308
        %2354 = vmatprep.subr.mxu0 0.0
        %2355 = vmatpush1.msra.mxu0 %v2306
        %2356 = vmatprep.subr.mxu0 0.0
        %2357 = vmatpush2.msra.mxu0 0.0
        %2358 = vmatprep.subr.mxu0 0.0
        %2359 = vmatpush2.msra.mxu0 0.0
        %2360 = vmatprep.subr.mxu0 0.0
        %2361 = vmatpush2.msra.mxu0 0.0
        %2362 = vmatprep.subr.mxu0 0.0
        %2363 = vmatpush2.msra.mxu0 0.0
        %2364 = vmatprep.subr.mxu0 0.0
        %2365 = vmatpush2.msra.mxu0 0.0
        %2366 = vmatprep.subr.mxu0 0.0
        %2367 = vmatpush2.msra.mxu0 0.0
        %2368 = vmatprep.subr.mxu0 0.0
        %2369 = vmatpush2.msra.mxu0 0.0
        %2370 = vmatprep.subr.mxu0 0.0
        %2371 = vmatpush2.msra.mxu0 0.0
        %2372 = vmatprep.subr.mxu0 0.0
        %2373 = vmatpush2.msra.mxu0 0.0
        %2374 = vmatprep.subr.mxu0 0.0
        %2375 = vmatpush2.msra.mxu0 0.0
        %2376 = vmatprep.subr.mxu0 0.0
        %2377 = vmatpush2.msra.mxu0 0.0
        %2378 = vmatprep.subr.mxu0 0.0
        %2379 = vmatpush2.msra.mxu0 0.0
        %2380 = vmatprep.subr.mxu0 0.0
        %2381 = vmatpush2.msra.mxu0 0.0
        %2382 = vmatprep.subr.mxu0 0.0
        %2383 = vmatpush2.msra.mxu0 0.0
        %2384 = vmatprep.subr.mxu0 0.0
        %2385 = vmatpush2.msra.mxu0 0.0
        %2386 = vmatprep.subr.mxu0 0.0
        %2387 = vmatpush2.msra.mxu0 0.0
        %2388 = vmatprep.mubr.f32.mxu0 0.0
        %2389 = vmatmul.mubr.f32.gmra.mxu0 %v2314
        %v2390 = vpop.f32.mrf.mxu0
        %v2391 = vadd.f32 0.0, %v2390
        %v2392 = vpop.f32.mrf.mxu0
        %2393 = vmatprep.mubr.f32.mxu0 0.0
        %2394 = vmatmul.mubr.f32.gmra.mxu0 %v2317
        %v2395 = vpop.f32.mrf.mxu0
        %v2396 = vadd.f32 0.0, %v2395
        %v2397 = vpop.f32.mrf.mxu0
        %2398 = vmatprep.mubr.f32.mxu0 0.0
        %2399 = vmatmul.mubr.f32.gmra.mxu0 %v2320
        %v2400 = vpop.f32.mrf.mxu0
        %v2401 = vadd.f32 0.0, %v2400
        %v2402 = vpop.f32.mrf.mxu0
        %2403 = vdwg.mxu0
        %2407 = vrot.lane.b32.xlu0 %v1919, 8
        %v2408 = vpop.permute.xlu0 %2407
        %2409 = vrot.lane.b32.xlu0 %v1924, 8
        %v2410 = vpop.permute.xlu0 %2409
        %2411 = vrot.lane.b32.xlu0 %v1929, 8
        %v2412 = vpop.permute.xlu0 %2411
        %2419 = vrot.lane.b32.xlu0 %v2155, 16
        %v2420 = vpop.permute.xlu0 %2419
        %2421 = vrot.lane.b32.xlu0 %v2160, 16
        %v2422 = vpop.permute.xlu0 %2421
        %2423 = vrot.lane.b32.xlu0 %v2165, 16
        %v2424 = vpop.permute.xlu0 %2423
        %2431 = vrot.lane.b32.xlu0 %v2391, 24
        %v2432 = vpop.permute.xlu0 %2431
        %2433 = vrot.lane.b32.xlu0 %v2396, 24
        %v2434 = vpop.permute.xlu0 %2433
        %2435 = vrot.lane.b32.xlu0 %v2401, 24
        %v2436 = vpop.permute.xlu0 %2435
        %v2440 = vsel %vm1466, %v1683, %v2408
        %v2441 = vsel %vm1466, %v1688, %v2410
        %v2442 = vsel %vm1466, %v1693, %v2412
        %v2443 = vsel %vm1396, %v2440, %v2420
        %v2444 = vsel %vm1396, %v2441, %v2422
        %v2445 = vsel %vm1396, %v2442, %v2424
        %vm2446 = vcmask 195584
        %v2447 = vsel %vm2446, %v2443, %v2432
        %v2448 = vsel %vm2446, %v2444, %v2434
        %v2449 = vsel %vm2446, %v2445, %v2436
        %v2450 = vld [vmem:[%s23] sm:$0xff]
        %v2451 = vld [vmem:[%s23 + $0x8] sm:$0xff]
        %v2452 = vld [vmem:[%s23 + $0x10] sm:$0xff]
        %v2453 = vld [vmem:[%s23 + $0x18] sm:$0xff]
        %v2454 = vpack.c.bf16 %v2448, %v2447
        %v2455 = vpack.c.bf16 %v2449, %v2449
        %v2456 = vpack.c.bf16 %v2451, %v2450
        %v2457 = vpack.c.bf16 %v2453, %v2452
        %v2459 = vsel %vm1206, %v2454, 0
        %v2462 = vsel %vm1206, %v2455, 0
        %2464 = vmatprep.subr.bf16.mxu0 0
        %2465 = vmatpush1.bf16.msra.mxu0 0
        %2466 = vmatprep.subr.bf16.mxu0 0
        %2467 = vmatpush1.bf16.msra.mxu0 0
        %2468 = vmatprep.subr.bf16.mxu0 0
        %2469 = vmatpush1.bf16.msra.mxu0 0
        %2470 = vmatprep.subr.bf16.mxu0 0
        %2471 = vmatpush1.bf16.msra.mxu0 0
        %2472 = vmatprep.subr.bf16.mxu0 0
        %2473 = vmatpush1.bf16.msra.mxu0 0
        %2474 = vmatprep.subr.bf16.mxu0 0
        %2475 = vmatpush1.bf16.msra.mxu0 0
        %2476 = vmatprep.subr.bf16.mxu0 0
        %2477 = vmatpush1.bf16.msra.mxu0 %v2457
        %2478 = vmatprep.subr.bf16.mxu0 0
        %2479 = vmatpush1.bf16.msra.mxu0 %v2456
        %2480 = vmatprep.subr.bf16.mxu0 0
        %2481 = vmatpush2.bf16.msra.mxu0 0
        %2482 = vmatprep.subr.bf16.mxu0 0
        %2483 = vmatpush2.bf16.msra.mxu0 0
        %2484 = vmatprep.subr.bf16.mxu0 0
        %2485 = vmatpush2.bf16.msra.mxu0 0
        %2486 = vmatprep.subr.bf16.mxu0 0
        %2487 = vmatpush2.bf16.msra.mxu0 0
        %2488 = vmatprep.subr.bf16.mxu0 0
        %2489 = vmatpush2.bf16.msra.mxu0 0
        %2490 = vmatprep.subr.bf16.mxu0 0
        %2491 = vmatpush2.bf16.msra.mxu0 0
        %2492 = vmatprep.subr.bf16.mxu0 0
        %2493 = vmatpush2.bf16.msra.mxu0 0
        %2494 = vmatprep.subr.bf16.mxu0 0
        %2495 = vmatpush2.bf16.msra.mxu0 0
        %2496 = vmatprep.mubr.bf16.mxu0 0
        %2497 = vmatmul.mubr.bf16.gmra.mxu0 %v2459
        %v2498 = vpop.f32.mrf.mxu0
        %v2499 = vadd.f32 0.0, %v2498
        %v2500 = vpop.f32.mrf.mxu0
        %v2501 = vpop.f32.mrf.mxu0
        %v2502 = vadd.f32 0.0, %v2501
        %v2503 = vpop.f32.mrf.mxu0
        %2504 = vmatprep.mubr.bf16.mxu0 0
        %2505 = vmatmul.mubr.bf16.gmra.mxu0 %v2462
        %v2506 = vpop.f32.mrf.mxu0
        %v2507 = vadd.f32 0.0, %v2506
        %v2508 = vpop.f32.mrf.mxu0
        %v2509 = vpop.f32.mrf.mxu0
        %v2510 = vpop.f32.mrf.mxu0
        %2511 = vdwg.mxu0
        %v2512 = vadd.f32 %v1203, %v2499
        %v2513 = vadd.f32 %v1204, %v2502
        %v2514 = vadd.f32 %v1205, %v2507
        %v2515 = vld [vmem:[%s25] sm:$0x1]
        %v2517 = vlaneseq
        %v2518 = vshrl.u32 %v2517, 7
        %v2519 = vsub.s32 0, %v2518
        %v2520 = vrot.slane %v2515, %v2519
        %v2522 = vadd.f32 %v2512, %v2520
        %v2523 = vadd.f32 %v2513, %v2520
        %v2524 = vadd.f32 %v2514, %v2520
        %v2525 = vsel %vm1206, %v2522, 0.0
        %2526 = vadd.xlane.f32.xlu0 %v2525
        %v2527 = vpop.xlane.xlu0 %2526
        %v2528 = vsel %vm1206, %v2523, 0.0
        %2529 = vadd.xlane.f32.xlu0 %v2528
        %v2530 = vpop.xlane.xlu0 %2529
        %v2531 = vsel %vm1213, %v2524, 0.0
        %2532 = vadd.xlane.f32.xlu0 %v2531
        %v2533 = vpop.xlane.xlu0 %2532
        %v2534 = vmul.f32 %v2527, %v1217
        %v2535 = vmul.f32 %v2530, %v1217
        %v2536 = vmul.f32 %v2533, %v1217
        %v2537 = vsub.f32 %v2522, %v2534
        %v2538 = vsub.f32 %v2523, %v2535
        %v2539 = vsub.f32 %v2524, %v2536
        %v2540 = vmul.f32 %v2537, %v2537
        %v2541 = vmul.f32 %v2538, %v2538
        %v2542 = vmul.f32 %v2539, %v2539
        %v2543 = vsel %vm1206, %v2540, 0.0
        %2544 = vadd.xlane.f32.xlu0 %v2543
        %v2545 = vpop.xlane.xlu0 %2544
        %v2546 = vsel %vm1206, %v2541, 0.0
        %2547 = vadd.xlane.f32.xlu0 %v2546
        %v2548 = vpop.xlane.xlu0 %2547
        %v2549 = vsel %vm1213, %v2542, 0.0
        %2550 = vadd.xlane.f32.xlu0 %v2549
        %v2551 = vpop.xlane.xlu0 %2550
        %v2552 = vmul.f32 %v2545, %v1217
        %v2553 = vmul.f32 %v2548, %v1217
        %v2554 = vmul.f32 %v2551, %v1217
        %v2555 = vadd.f32 %v2552, 1e-06
        %v2556 = vadd.f32 %v2553, 1e-06
        %v2557 = vadd.f32 %v2554, 1e-06
        %v2558 = vrsqrt.pop %v2555
        %v2559 = vrsqrt.pop %v2556
        %v2560 = vrsqrt.pop %v2557
        %v2561 = vmul.f32 %v2537, %v2558
        %v2562 = vmul.f32 %v2538, %v2559
        %v2563 = vmul.f32 %v2539, %v2560
        %v2564 = vld [vmem:[%s27] sm:$0x1]
        %v2566 = vlaneseq
        %v2567 = vshrl.u32 %v2566, 7
        %v2568 = vsub.s32 0, %v2567
        %v2569 = vrot.slane %v2564, %v2568
        %v2571 = vmul.f32 %v2561, %v2569
        %v2572 = vmul.f32 %v2562, %v2569
        %v2573 = vmul.f32 %v2563, %v2569
        %v2574 = vld [vmem:[%s29] sm:$0x1]
        %v2576 = vlaneseq
        %v2577 = vshrl.u32 %v2576, 7
        %v2578 = vsub.s32 0, %v2577
        %v2579 = vrot.slane %v2574, %v2578
        %v2581 = vadd.f32 %v2571, %v2579
        %v2582 = vadd.f32 %v2572, %v2579
        %v2583 = vadd.f32 %v2573, %v2579
        %v2584 = vld [vmem:[%s31] sm:$0xff]
        %v2585 = vld [vmem:[%s31 + $0x8] sm:$0xff]
        %v2586 = vld [vmem:[%s31 + $0x10] sm:$0xff]
        %v2587 = vld [vmem:[%s31 + $0x18] sm:$0xff]
        %v2588 = vpack.c.bf16 %v2582, %v2581
        %v2589 = vpack.c.bf16 %v2583, %v2583
        %v2590 = vpack.c.bf16 %v2585, %v2584
        %v2591 = vpack.c.bf16 %v2587, %v2586
        %v2592 = vld [vmem:[%s33] sm:$0x1]
        %v2594 = vlaneseq
        %v2595 = vshrl.u32 %v2594, 7
        %v2596 = vsub.s32 0, %v2595
        %v2597 = vrot.slane %v2592, %v2596
        %v2600 = vsel %vm1206, %v2588, 0
        %v2603 = vsel %vm1206, %v2589, 0
        %2605 = vmatprep.subr.bf16.mxu0 0
        %2606 = vmatpush1.bf16.msra.mxu0 0
        %2607 = vmatprep.subr.bf16.mxu0 0
        %2608 = vmatpush1.bf16.msra.mxu0 0
        %2609 = vmatprep.subr.bf16.mxu0 0
        %2610 = vmatpush1.bf16.msra.mxu0 0
        %2611 = vmatprep.subr.bf16.mxu0 0
        %2612 = vmatpush1.bf16.msra.mxu0 0
        %2613 = vmatprep.subr.bf16.mxu0 0
        %2614 = vmatpush1.bf16.msra.mxu0 0
        %2615 = vmatprep.subr.bf16.mxu0 0
        %2616 = vmatpush1.bf16.msra.mxu0 0
        %2617 = vmatprep.subr.bf16.mxu0 0
        %2618 = vmatpush1.bf16.msra.mxu0 %v2591
        %2619 = vmatprep.subr.bf16.mxu0 0
        %2620 = vmatpush1.bf16.msra.mxu0 %v2590
        %2621 = vmatprep.subr.bf16.mxu0 0
        %2622 = vmatpush2.bf16.msra.mxu0 0
        %2623 = vmatprep.subr.bf16.mxu0 0
        %2624 = vmatpush2.bf16.msra.mxu0 0
        %2625 = vmatprep.subr.bf16.mxu0 0
        %2626 = vmatpush2.bf16.msra.mxu0 0
        %2627 = vmatprep.subr.bf16.mxu0 0
        %2628 = vmatpush2.bf16.msra.mxu0 0
        %2629 = vmatprep.subr.bf16.mxu0 0
        %2630 = vmatpush2.bf16.msra.mxu0 0
        %2631 = vmatprep.subr.bf16.mxu0 0
        %2632 = vmatpush2.bf16.msra.mxu0 0
        %2633 = vmatprep.subr.bf16.mxu0 0
        %2634 = vmatpush2.bf16.msra.mxu0 0
        %2635 = vmatprep.subr.bf16.mxu0 0
        %2636 = vmatpush2.bf16.msra.mxu0 0
        %2637 = vmatprep.mubr.bf16.mxu0 0
        %2638 = vmatmul.mubr.bf16.gmra.mxu0 %v2600
        %v2639 = vpop.f32.mrf.mxu0
        %v2640 = vadd.f32 %v2597, %v2639
        %v2641 = vpop.f32.mrf.mxu0
        %v2642 = vpop.f32.mrf.mxu0
        %v2643 = vadd.f32 %v2597, %v2642
        %v2644 = vpop.f32.mrf.mxu0
        %2645 = vmatprep.mubr.bf16.mxu0 0
        %2646 = vmatmul.mubr.bf16.gmra.mxu0 %v2603
        %v2647 = vpop.f32.mrf.mxu0
        %v2648 = vadd.f32 %v2597, %v2647
        %v2649 = vpop.f32.mrf.mxu0
        %v2650 = vpop.f32.mrf.mxu0
        %v2651 = vpop.f32.mrf.mxu0
        %2652 = vdwg.mxu0
        %v2653 = vmul.f32 %v2640, %v2640
        %v2654 = vmul.f32 %v2643, %v2643
        %v2655 = vmul.f32 %v2648, %v2648
        %v2656 = vmul.f32 %v2640, %v2653
        %v2657 = vmul.f32 %v2643, %v2654
        %v2658 = vmul.f32 %v2648, %v2655
        %v2659 = vmul.f32 %v2656, 0.044715
        %v2660 = vmul.f32 %v2657, 0.044715
        %v2661 = vmul.f32 %v2658, 0.044715
        %v2662 = vadd.f32 %v2640, %v2659
        %v2663 = vadd.f32 %v2643, %v2660
        %v2664 = vadd.f32 %v2648, %v2661
        %v2665 = vmul.f32 %v2662, 0.7978846
        %v2666 = vmul.f32 %v2663, 0.7978846
        %v2667 = vmul.f32 %v2664, 0.7978846
        %v2668 = vtanh.pop %v2665
        %v2669 = vtanh.pop %v2666
        %v2670 = vtanh.pop %v2667
        %v2671 = vadd.f32 %v2668, 1.0
        %v2672 = vadd.f32 %v2669, 1.0
        %v2673 = vadd.f32 %v2670, 1.0
        %v2674 = vmul.f32 %v2671, 0.5
        %v2675 = vmul.f32 %v2672, 0.5
        %v2676 = vmul.f32 %v2673, 0.5
        %v2677 = vmul.f32 %v2640, %v2674
        %v2678 = vmul.f32 %v2643, %v2675
        %v2679 = vmul.f32 %v2648, %v2676
        %v2680 = vld [vmem:[%s35] sm:$0xff]
        %v2681 = vld [vmem:[%s35 + $0x8] sm:$0xff]
        %v2682 = vld [vmem:[%s35 + $0x10] sm:$0xff]
        %v2683 = vld [vmem:[%s35 + $0x18] sm:$0xff]
        %v2684 = vld [vmem:[%s35 + $0x20] sm:$0xff]
        %v2685 = vld [vmem:[%s35 + $0x28] sm:$0xff]
        %v2686 = vld [vmem:[%s35 + $0x30] sm:$0xff]
        %v2687 = vld [vmem:[%s35 + $0x38] sm:$0xff]
        %v2688 = vld [vmem:[%s35 + $0x40] sm:$0xff]
        %v2689 = vld [vmem:[%s35 + $0x48] sm:$0xff]
        %v2690 = vld [vmem:[%s35 + $0x50] sm:$0xff]
        %v2691 = vld [vmem:[%s35 + $0x58] sm:$0xff]
        %v2692 = vld [vmem:[%s35 + $0x60] sm:$0xff]
        %v2693 = vld [vmem:[%s35 + $0x68] sm:$0xff]
        %v2694 = vld [vmem:[%s35 + $0x70] sm:$0xff]
        %v2695 = vld [vmem:[%s35 + $0x78] sm:$0xff]
        %v2696 = vpack.c.bf16 %v2678, %v2677
        %v2697 = vpack.c.bf16 %v2679, %v2679
        %v2698 = vpack.c.bf16 %v2681, %v2680
        %v2699 = vpack.c.bf16 %v2683, %v2682
        %v2700 = vpack.c.bf16 %v2685, %v2684
        %v2701 = vpack.c.bf16 %v2687, %v2686
        %v2702 = vpack.c.bf16 %v2689, %v2688
        %v2703 = vpack.c.bf16 %v2691, %v2690
        %v2704 = vpack.c.bf16 %v2693, %v2692
        %v2705 = vpack.c.bf16 %v2695, %v2694
        %2706 = vmatprep.subr.bf16.mxu0 0
        %2707 = vmatpush1.bf16.msra.mxu0 %v2705
        %2708 = vmatprep.subr.bf16.mxu0 0
        %2709 = vmatpush1.bf16.msra.mxu0 %v2704
        %2710 = vmatprep.subr.bf16.mxu0 0
        %2711 = vmatpush1.bf16.msra.mxu0 %v2703
        %2712 = vmatprep.subr.bf16.mxu0 0
        %2713 = vmatpush1.bf16.msra.mxu0 %v2702
        %2714 = vmatprep.subr.bf16.mxu0 0
        %2715 = vmatpush1.bf16.msra.mxu0 %v2701
        %2716 = vmatprep.subr.bf16.mxu0 0
        %2717 = vmatpush1.bf16.msra.mxu0 %v2700
        %2718 = vmatprep.subr.bf16.mxu0 0
        %2719 = vmatpush1.bf16.msra.mxu0 %v2699
        %2720 = vmatprep.subr.bf16.mxu0 0
        %2721 = vmatpush1.bf16.msra.mxu0 %v2698
        %2722 = vmatprep.subr.bf16.mxu0 0
        %2723 = vmatpush2.bf16.msra.mxu0 0
        %2724 = vmatprep.subr.bf16.mxu0 0
        %2725 = vmatpush2.bf16.msra.mxu0 0
        %2726 = vmatprep.subr.bf16.mxu0 0
        %2727 = vmatpush2.bf16.msra.mxu0 0
        %2728 = vmatprep.subr.bf16.mxu0 0
        %2729 = vmatpush2.bf16.msra.mxu0 0
        %2730 = vmatprep.subr.bf16.mxu0 0
        %2731 = vmatpush2.bf16.msra.mxu0 0
        %2732 = vmatprep.subr.bf16.mxu0 0
        %2733 = vmatpush2.bf16.msra.mxu0 0
        %2734 = vmatprep.subr.bf16.mxu0 0
        %2735 = vmatpush2.bf16.msra.mxu0 0
        %2736 = vmatprep.subr.bf16.mxu0 0
        %2737 = vmatpush2.bf16.msra.mxu0 0
        %2738 = vmatprep.mubr.bf16.mxu0 0
        %2739 = vmatmul.mubr.bf16.gmra.mxu0 %v2696
        %v2740 = vpop.f32.mrf.mxu0
        %v2741 = vadd.f32 0.0, %v2740
        %v2742 = vpop.f32.mrf.mxu0
        %v2743 = vpop.f32.mrf.mxu0
        %v2744 = vadd.f32 0.0, %v2743
        %v2745 = vpop.f32.mrf.mxu0
        %2746 = vmatprep.mubr.bf16.mxu0 0
        %2747 = vmatmul.mubr.bf16.gmra.mxu0 %v2697
        %v2748 = vpop.f32.mrf.mxu0
        %v2749 = vadd.f32 0.0, %v2748
        %v2750 = vpop.f32.mrf.mxu0
        %v2751 = vpop.f32.mrf.mxu0
        %v2752 = vpop.f32.mrf.mxu0
        %2753 = vdwg.mxu0
        %v2754 = vadd.f32 %v2522, %v2741
        %v2755 = vadd.f32 %v2523, %v2744
        %v2756 = vadd.f32 %v2524, %v2749
        %v2757 = vld [vmem:[%s37] sm:$0x1]
        %v2759 = vlaneseq
        %v2760 = vshrl.u32 %v2759, 7
        %v2761 = vsub.s32 0, %v2760
        %v2762 = vrot.slane %v2757, %v2761
        %v2764 = vadd.f32 %v2754, %v2762
        %v2765 = vadd.f32 %v2755, %v2762
        %v2766 = vadd.f32 %v2756, %v2762
        %v2767 = vsel %vm1206, %v2764, 0.0
        %2768 = vadd.xlane.f32.xlu0 %v2767
        %v2769 = vpop.xlane.xlu0 %2768
        %v2770 = vsel %vm1206, %v2765, 0.0
        %2771 = vadd.xlane.f32.xlu0 %v2770
        %v2772 = vpop.xlane.xlu0 %2771
        %v2773 = vsel %vm1213, %v2766, 0.0
        %2774 = vadd.xlane.f32.xlu0 %v2773
        %v2775 = vpop.xlane.xlu0 %2774
        %v2776 = vmul.f32 %v2769, %v1217
        %v2777 = vmul.f32 %v2772, %v1217
        %v2778 = vmul.f32 %v2775, %v1217
        %v2779 = vsub.f32 %v2764, %v2776
        %v2780 = vsub.f32 %v2765, %v2777
        %v2781 = vsub.f32 %v2766, %v2778
        %v2782 = vmul.f32 %v2779, %v2779
        %v2783 = vmul.f32 %v2780, %v2780
        %v2784 = vmul.f32 %v2781, %v2781
        %v2785 = vsel %vm1206, %v2782, 0.0
        %2786 = vadd.xlane.f32.xlu0 %v2785
        %v2787 = vpop.xlane.xlu0 %2786
        %v2788 = vsel %vm1206, %v2783, 0.0
        %2789 = vadd.xlane.f32.xlu0 %v2788
        %v2790 = vpop.xlane.xlu0 %2789
        %v2791 = vsel %vm1213, %v2784, 0.0
        %2792 = vadd.xlane.f32.xlu0 %v2791
        %v2793 = vpop.xlane.xlu0 %2792
        %v2794 = vmul.f32 %v2787, %v1217
        %v2795 = vmul.f32 %v2790, %v1217
        %v2796 = vmul.f32 %v2793, %v1217
        %v2797 = vadd.f32 %v2794, 1e-06
        %v2798 = vadd.f32 %v2795, 1e-06
        %v2799 = vadd.f32 %v2796, 1e-06
        %v2800 = vrsqrt.pop %v2797
        %v2801 = vrsqrt.pop %v2798
        %v2802 = vrsqrt.pop %v2799
        %v2803 = vmul.f32 %v2779, %v2800
        %v2804 = vmul.f32 %v2780, %v2801
        %v2805 = vmul.f32 %v2781, %v2802
        %v2806 = vld [vmem:[%s39] sm:$0x1]
        %v2808 = vlaneseq
        %v2809 = vshrl.u32 %v2808, 7
        %v2810 = vsub.s32 0, %v2809
        %v2811 = vrot.slane %v2806, %v2810
        %v2813 = vmul.f32 %v2803, %v2811
        %v2814 = vmul.f32 %v2804, %v2811
        %v2815 = vmul.f32 %v2805, %v2811
        %v2816 = vld [vmem:[%s41] sm:$0x1]
        %v2818 = vlaneseq
        %v2819 = vshrl.u32 %v2818, 7
        %v2820 = vsub.s32 0, %v2819
        %v2821 = vrot.slane %v2816, %v2820
        %v2823 = vadd.f32 %v2813, %v2821
        %v2824 = vadd.f32 %v2814, %v2821
        %v2825 = vadd.f32 %v2815, %v2821
        %v2826 = vld [vmem:[%s43] sm:$0xff]
        %v2827 = vld [vmem:[%s43 + $0x8] sm:$0xff]
        %v2828 = vld [vmem:[%s43 + $0x10] sm:$0xff]
        %v2829 = vld [vmem:[%s43 + $0x18] sm:$0xff]
        %v2830 = vpack.c.bf16 %v2824, %v2823
        %v2831 = vpack.c.bf16 %v2825, %v2825
        %v2832 = vpack.c.bf16 %v2827, %v2826
        %v2833 = vpack.c.bf16 %v2829, %v2828
        %v2834 = vld [vmem:[%s45] sm:$0x1]
        %v2836 = vlaneseq
        %v2837 = vshrl.u32 %v2836, 7
        %v2838 = vsub.s32 0, %v2837
        %v2839 = vrot.slane %v2834, %v2838
        %v2842 = vsel %vm1206, %v2830, 0
        %v2845 = vsel %vm1206, %v2831, 0
        %2847 = vmatprep.subr.bf16.mxu0 0
        %2848 = vmatpush1.bf16.msra.mxu0 0
        %2849 = vmatprep.subr.bf16.mxu0 0
        %2850 = vmatpush1.bf16.msra.mxu0 0
        %2851 = vmatprep.subr.bf16.mxu0 0
        %2852 = vmatpush1.bf16.msra.mxu0 0
        %2853 = vmatprep.subr.bf16.mxu0 0
        %2854 = vmatpush1.bf16.msra.mxu0 0
        %2855 = vmatprep.subr.bf16.mxu0 0
        %2856 = vmatpush1.bf16.msra.mxu0 0
        %2857 = vmatprep.subr.bf16.mxu0 0
        %2858 = vmatpush1.bf16.msra.mxu0 0
        %2859 = vmatprep.subr.bf16.mxu0 0
        %2860 = vmatpush1.bf16.msra.mxu0 %v2833
        %2861 = vmatprep.subr.bf16.mxu0 0
        %2862 = vmatpush1.bf16.msra.mxu0 %v2832
        %2863 = vmatprep.subr.bf16.mxu0 0
        %2864 = vmatpush2.bf16.msra.mxu0 0
        %2865 = vmatprep.subr.bf16.mxu0 0
        %2866 = vmatpush2.bf16.msra.mxu0 0
        %2867 = vmatprep.subr.bf16.mxu0 0
        %2868 = vmatpush2.bf16.msra.mxu0 0
        %2869 = vmatprep.subr.bf16.mxu0 0
        %2870 = vmatpush2.bf16.msra.mxu0 0
        %2871 = vmatprep.subr.bf16.mxu0 0
        %2872 = vmatpush2.bf16.msra.mxu0 0
        %2873 = vmatprep.subr.bf16.mxu0 0
        %2874 = vmatpush2.bf16.msra.mxu0 0
        %2875 = vmatprep.subr.bf16.mxu0 0
        %2876 = vmatpush2.bf16.msra.mxu0 0
        %2877 = vmatprep.subr.bf16.mxu0 0
        %2878 = vmatpush2.bf16.msra.mxu0 0
        %2879 = vmatprep.mubr.bf16.mxu0 0
        %2880 = vmatmul.mubr.bf16.gmra.mxu0 %v2842
        %v2881 = vpop.f32.mrf.mxu0
        %v2882 = vadd.f32 %v2839, %v2881
        %v2883 = vpop.f32.mrf.mxu0
        %v2884 = vpop.f32.mrf.mxu0
        %v2885 = vadd.f32 %v2839, %v2884
        %v2886 = vpop.f32.mrf.mxu0
        %2887 = vmatprep.mubr.bf16.mxu0 0
        %2888 = vmatmul.mubr.bf16.gmra.mxu0 %v2845
        %v2889 = vpop.f32.mrf.mxu0
        %v2890 = vadd.f32 %v2839, %v2889
        %v2891 = vpop.f32.mrf.mxu0
        %v2892 = vpop.f32.mrf.mxu0
        %v2893 = vpop.f32.mrf.mxu0
        %2894 = vdwg.mxu0
        %v2895 = vld [vmem:[%s47] sm:$0xff]
        %v2896 = vld [vmem:[%s47 + $0x8] sm:$0xff]
        %v2897 = vld [vmem:[%s47 + $0x10] sm:$0xff]
        %v2898 = vld [vmem:[%s47 + $0x18] sm:$0xff]
        %v2899 = vpack.c.bf16 %v2896, %v2895
        %v2900 = vpack.c.bf16 %v2898, %v2897
        %2901 = vmatprep.subr.bf16.mxu0 0
        %2902 = vmatpush1.bf16.msra.mxu0 0
        %2903 = vmatprep.subr.bf16.mxu0 0
        %2904 = vmatpush1.bf16.msra.mxu0 0
        %2905 = vmatprep.subr.bf16.mxu0 0
        %2906 = vmatpush1.bf16.msra.mxu0 0
        %2907 = vmatprep.subr.bf16.mxu0 0
        %2908 = vmatpush1.bf16.msra.mxu0 0
        %2909 = vmatprep.subr.bf16.mxu0 0
        %2910 = vmatpush1.bf16.msra.mxu0 0
        %2911 = vmatprep.subr.bf16.mxu0 0
        %2912 = vmatpush1.bf16.msra.mxu0 0
        %2913 = vmatprep.subr.bf16.mxu0 0
        %2914 = vmatpush1.bf16.msra.mxu0 %v2900
        %2915 = vmatprep.subr.bf16.mxu0 0
        %2916 = vmatpush1.bf16.msra.mxu0 %v2899
        %2917 = vmatprep.subr.bf16.mxu0 0
        %2918 = vmatpush2.bf16.msra.mxu0 0
        %2919 = vmatprep.subr.bf16.mxu0 0
        %2920 = vmatpush2.bf16.msra.mxu0 0
        %2921 = vmatprep.subr.bf16.mxu0 0
        %2922 = vmatpush2.bf16.msra.mxu0 0
        %2923 = vmatprep.subr.bf16.mxu0 0
        %2924 = vmatpush2.bf16.msra.mxu0 0
        %2925 = vmatprep.subr.bf16.mxu0 0
        %2926 = vmatpush2.bf16.msra.mxu0 0
        %2927 = vmatprep.subr.bf16.mxu0 0
        %2928 = vmatpush2.bf16.msra.mxu0 0
        %2929 = vmatprep.subr.bf16.mxu0 0
        %2930 = vmatpush2.bf16.msra.mxu0 0
        %2931 = vmatprep.subr.bf16.mxu0 0
        %2932 = vmatpush2.bf16.msra.mxu0 0
        %2933 = vmatprep.mubr.bf16.mxu0 0
        %2934 = vmatmul.mubr.bf16.gmra.mxu0 %v2842
        %v2935 = vpop.f32.mrf.mxu0
        %v2936 = vadd.f32 0.0, %v2935
        %v2937 = vpop.f32.mrf.mxu0
        %v2938 = vpop.f32.mrf.mxu0
        %v2939 = vadd.f32 0.0, %v2938
        %v2940 = vpop.f32.mrf.mxu0
        %2941 = vmatprep.mubr.bf16.mxu0 0
        %2942 = vmatmul.mubr.bf16.gmra.mxu0 %v2845
        %v2943 = vpop.f32.mrf.mxu0
        %v2944 = vadd.f32 0.0, %v2943
        %v2945 = vpop.f32.mrf.mxu0
        %v2946 = vpop.f32.mrf.mxu0
        %v2947 = vpop.f32.mrf.mxu0
        %2948 = vdwg.mxu0
        %v2949 = vld [vmem:[%s49] sm:$0xff]
        %v2950 = vld [vmem:[%s49 + $0x8] sm:$0xff]
        %v2951 = vpack.c.bf16 %v2939, %v2936
        %v2952 = vpack.c.bf16 %v2944, %v2944
        %v2953 = vpack.c.bf16 %v2950, %v2949
        %v2955 = vsel %vm1396, %v2951, 0
        %v2958 = vsel %vm1396, %v2952, 0
        %2960 = vmatprep.subr.bf16.mxu0 0
        %2961 = vmatpush1.bf16.msra.mxu0 0
        %2962 = vmatprep.subr.bf16.mxu0 0
        %2963 = vmatpush1.bf16.msra.mxu0 0
        %2964 = vmatprep.subr.bf16.mxu0 0
        %2965 = vmatpush1.bf16.msra.mxu0 0
        %2966 = vmatprep.subr.bf16.mxu0 0
        %2967 = vmatpush1.bf16.msra.mxu0 0
        %2968 = vmatprep.subr.bf16.mxu0 0
        %2969 = vmatpush1.bf16.msra.mxu0 0
        %2970 = vmatprep.subr.bf16.mxu0 0
        %2971 = vmatpush1.bf16.msra.mxu0 0
        %2972 = vmatprep.subr.bf16.mxu0 0
        %2973 = vmatpush1.bf16.msra.mxu0 0
        %2974 = vmatprep.subr.bf16.mxu0 0
        %2975 = vmatpush1.bf16.msra.mxu0 %v2953
        %2976 = vmatprep.subr.bf16.mxu0 0
        %2977 = vmatpush2.bf16.msra.mxu0 0
        %2978 = vmatprep.subr.bf16.mxu0 0
        %2979 = vmatpush2.bf16.msra.mxu0 0
        %2980 = vmatprep.subr.bf16.mxu0 0
        %2981 = vmatpush2.bf16.msra.mxu0 0
        %2982 = vmatprep.subr.bf16.mxu0 0
        %2983 = vmatpush2.bf16.msra.mxu0 0
        %2984 = vmatprep.subr.bf16.mxu0 0
        %2985 = vmatpush2.bf16.msra.mxu0 0
        %2986 = vmatprep.subr.bf16.mxu0 0
        %2987 = vmatpush2.bf16.msra.mxu0 0
        %2988 = vmatprep.subr.bf16.mxu0 0
        %2989 = vmatpush2.bf16.msra.mxu0 0
        %2990 = vmatprep.subr.bf16.mxu0 0
        %2991 = vmatpush2.bf16.msra.mxu0 0
        %2992 = vmatprep.mubr.bf16.mxu0 0
        %2993 = vmatmul.mubr.bf16.gmra.mxu0 %v2955
        %v2994 = vpop.f32.mrf.mxu0
        %v2995 = vadd.f32 0.0, %v2994
        %v2996 = vpop.f32.mrf.mxu0
        %v2997 = vpop.f32.mrf.mxu0
        %v2998 = vadd.f32 0.0, %v2997
        %v2999 = vpop.f32.mrf.mxu0
        %3000 = vmatprep.mubr.bf16.mxu0 0
        %3001 = vmatmul.mubr.bf16.gmra.mxu0 %v2958
        %v3002 = vpop.f32.mrf.mxu0
        %v3003 = vadd.f32 0.0, %v3002
        %v3004 = vpop.f32.mrf.mxu0
        %v3005 = vpop.f32.mrf.mxu0
        %v3006 = vpop.f32.mrf.mxu0
        %3007 = vdwg.mxu0
        %v3008 = vadd.f32 %v2882, %v2995
        %v3009 = vadd.f32 %v2885, %v2998
        %v3010 = vadd.f32 %v2890, %v3003
        %v3011 = vmul.f32 %v3008, 0.35355338
        %v3012 = vmul.f32 %v3009, 0.35355338
        %v3013 = vmul.f32 %v3010, 0.35355338
        %3017 = vrot.lane.b32.xlu0 %v3008, 96
        %v3018 = vpop.permute.xlu0 %3017
        %3019 = vrot.lane.b32.xlu0 %v3009, 96
        %v3020 = vpop.permute.xlu0 %3019
        %3021 = vrot.lane.b32.xlu0 %v3010, 96
        %v3022 = vpop.permute.xlu0 %3021
        %v3024 = vsel %vm1466, %v3011, 0
        %v3027 = vsel %vm1466, %v3012, 0
        %v3030 = vsel %vm1466, %v3013, 0
        %v3032 = vsel %vm1466, %v3018, 0
        %v3034 = vsel %vm1466, %v3020, 0
        %v3036 = vsel %vm1466, %v3022, 0
        %3038 = vmatprep.subr.mxu0 0.0
        %3039 = vmatpush1.xpose.msra.mxu0 0.0
        %3040 = vmatprep.subr.mxu0 0.0
        %3041 = vmatpush1.xpose.msra.mxu0 0.0
        %3042 = vmatprep.subr.mxu0 0.0
        %3043 = vmatpush1.xpose.msra.mxu0 0.0
        %3044 = vmatprep.subr.mxu0 0.0
        %3045 = vmatpush1.xpose.msra.mxu0 0.0
        %3046 = vmatprep.subr.mxu0 0.0
        %3047 = vmatpush1.xpose.msra.mxu0 0.0
        %3048 = vmatprep.subr.mxu0 0.0
        %3049 = vmatpush1.xpose.msra.mxu0 0.0
        %3050 = vmatprep.subr.mxu0 0.0
        %3051 = vmatpush1.xpose.msra.mxu0 0.0
        %3052 = vmatprep.subr.mxu0 0.0
        %3053 = vmatpush1.xpose.msra.mxu0 0.0
        %3054 = vmatprep.subr.mxu0 0.0
        %3055 = vmatpush1.xpose.msra.mxu0 0.0
        %3056 = vmatprep.subr.mxu0 0.0
        %3057 = vmatpush1.xpose.msra.mxu0 0.0
        %3058 = vmatprep.subr.mxu0 0.0
        %3059 = vmatpush1.xpose.msra.mxu0 0.0
        %3060 = vmatprep.subr.mxu0 0.0
        %3061 = vmatpush1.xpose.msra.mxu0 0.0
        %3062 = vmatprep.subr.mxu0 0.0
        %3063 = vmatpush1.xpose.msra.mxu0 0.0
        %3064 = vmatprep.subr.mxu0 0.0
        %3065 = vmatpush1.xpose.msra.mxu0 %v3036
        %3066 = vmatprep.subr.mxu0 0.0
        %3067 = vmatpush1.xpose.msra.mxu0 %v3034
        %3068 = vmatprep.subr.mxu0 0.0
        %3069 = vmatpush1.xpose.msra.mxu0 %v3032
        %3070 = vmatprep.subr.mxu0 0.0
        %3071 = vmatpush2.xpose.msra.mxu0 0.0
        %3072 = vmatprep.subr.mxu0 0.0
        %3073 = vmatpush2.xpose.msra.mxu0 0.0
        %3074 = vmatprep.subr.mxu0 0.0
        %3075 = vmatpush2.xpose.msra.mxu0 0.0
        %3076 = vmatprep.subr.mxu0 0.0
        %3077 = vmatpush2.xpose.msra.mxu0 0.0
        %3078 = vmatprep.subr.mxu0 0.0
        %3079 = vmatpush2.xpose.msra.mxu0 0.0
        %3080 = vmatprep.subr.mxu0 0.0
        %3081 = vmatpush2.xpose.msra.mxu0 0.0
        %3082 = vmatprep.subr.mxu0 0.0
        %3083 = vmatpush2.xpose.msra.mxu0 0.0
        %3084 = vmatprep.subr.mxu0 0.0
        %3085 = vmatpush2.xpose.msra.mxu0 0.0
        %3086 = vmatprep.subr.mxu0 0.0
        %3087 = vmatpush2.xpose.msra.mxu0 0.0
        %3088 = vmatprep.subr.mxu0 0.0
        %3089 = vmatpush2.xpose.msra.mxu0 0.0
        %3090 = vmatprep.subr.mxu0 0.0
        %3091 = vmatpush2.xpose.msra.mxu0 0.0
        %3092 = vmatprep.subr.mxu0 0.0
        %3093 = vmatpush2.xpose.msra.mxu0 0.0
        %3094 = vmatprep.subr.mxu0 0.0
        %3095 = vmatpush2.xpose.msra.mxu0 0.0
        %3096 = vmatprep.subr.mxu0 0.0
        %3097 = vmatpush2.xpose.msra.mxu0 0.0
        %3098 = vmatprep.subr.mxu0 0.0
        %3099 = vmatpush2.xpose.msra.mxu0 0.0
        %3100 = vmatprep.subr.mxu0 0.0
        %3101 = vmatpush2.xpose.msra.mxu0 0.0
        %3102 = vmatprep.mubr.f32.mxu0 0.0
        %3103 = vmatmul.mubr.f32.gmra.mxu0 %v3024
        %v3104 = vpop.f32.mrf.mxu0
        %v3105 = vadd.f32 0.0, %v3104
        %v3106 = vpop.f32.mrf.mxu0
        %3107 = vmatprep.mubr.f32.mxu0 0.0
        %3108 = vmatmul.mubr.f32.gmra.mxu0 %v3027
        %v3109 = vpop.f32.mrf.mxu0
        %v3110 = vadd.f32 0.0, %v3109
        %v3111 = vpop.f32.mrf.mxu0
        %3112 = vmatprep.mubr.f32.mxu0 0.0
        %3113 = vmatmul.mubr.f32.gmra.mxu0 %v3030
        %v3114 = vpop.f32.mrf.mxu0
        %v3115 = vadd.f32 0.0, %v3114
        %v3116 = vpop.f32.mrf.mxu0
        %3117 = vdwg.mxu0
        %v3118 = vsel %vm1562, %v3105, -inf
        %3119 = vmax.xlane.f32.xlu0 %v3118
        %v3120 = vpop.xlane.xlu0 %3119
        %v3121 = vsel %vm1562, %v3110, -inf
        %3122 = vmax.xlane.f32.xlu0 %v3121
        %v3123 = vpop.xlane.xlu0 %3122
        %v3124 = vsel %vm1569, %v3115, -inf
        %3125 = vmax.xlane.f32.xlu0 %v3124
        %v3126 = vpop.xlane.xlu0 %3125
        %v3127 = vsub.f32 %v3105, %v3120
        %v3128 = vsub.f32 %v3110, %v3123
        %v3129 = vsub.f32 %v3115, %v3126
        %v3130 = vmul.f32 %v3127, 1.442695
        %v3131 = vpow.pop %v3130
        %v3132 = vmul.f32 %v3128, 1.442695
        %v3133 = vpow.pop %v3132
        %v3134 = vmul.f32 %v3129, 1.442695
        %v3135 = vpow.pop %v3134
        %v3136 = vsel %vm1562, %v3131, 0.0
        %3137 = vadd.xlane.f32.xlu0 %v3136
        %v3138 = vpop.xlane.xlu0 %3137
        %v3139 = vsel %vm1562, %v3133, 0.0
        %3140 = vadd.xlane.f32.xlu0 %v3139
        %v3141 = vpop.xlane.xlu0 %3140
        %v3142 = vsel %vm1569, %v3135, 0.0
        %3143 = vadd.xlane.f32.xlu0 %v3142
        %v3144 = vpop.xlane.xlu0 %3143
        %v3145 = vrcp.pop %v3138
        %v3146 = vrcp.pop %v3141
        %v3147 = vrcp.pop %v3144
        %v3148 = vmul.f32 %v3131, %v3145
        %v3149 = vmul.f32 %v3133, %v3146
        %v3150 = vmul.f32 %v3135, %v3147
        %3151 = vrot.lane.b32.xlu0 %v3008, 64
        %v3152 = vpop.permute.xlu0 %3151
        %3153 = vrot.lane.b32.xlu0 %v3009, 64
        %v3154 = vpop.permute.xlu0 %3153
        %3155 = vrot.lane.b32.xlu0 %v3010, 64
        %v3156 = vpop.permute.xlu0 %3155
        %v3160 = vsel %vm1562, %v3148, 0
        %v3163 = vsel %vm1562, %v3149, 0
        %v3166 = vsel %vm1562, %v3150, 0
        %v3168 = vsel %vm1192, %v3156, 0
        %3170 = vmatprep.subr.mxu0 0.0
        %3171 = vmatpush1.msra.mxu0 0.0
        %3172 = vmatprep.subr.mxu0 0.0
        %3173 = vmatpush1.msra.mxu0 0.0
        %3174 = vmatprep.subr.mxu0 0.0
        %3175 = vmatpush1.msra.mxu0 0.0
        %3176 = vmatprep.subr.mxu0 0.0
        %3177 = vmatpush1.msra.mxu0 0.0
        %3178 = vmatprep.subr.mxu0 0.0
        %3179 = vmatpush1.msra.mxu0 0.0
        %3180 = vmatprep.subr.mxu0 0.0
        %3181 = vmatpush1.msra.mxu0 0.0
        %3182 = vmatprep.subr.mxu0 0.0
        %3183 = vmatpush1.msra.mxu0 0.0
        %3184 = vmatprep.subr.mxu0 0.0
        %3185 = vmatpush1.msra.mxu0 0.0
        %3186 = vmatprep.subr.mxu0 0.0
        %3187 = vmatpush1.msra.mxu0 0.0
        %3188 = vmatprep.subr.mxu0 0.0
        %3189 = vmatpush1.msra.mxu0 0.0
        %3190 = vmatprep.subr.mxu0 0.0
        %3191 = vmatpush1.msra.mxu0 0.0
        %3192 = vmatprep.subr.mxu0 0.0
        %3193 = vmatpush1.msra.mxu0 0.0
        %3194 = vmatprep.subr.mxu0 0.0
        %3195 = vmatpush1.msra.mxu0 0.0
        %3196 = vmatprep.subr.mxu0 0.0
        %3197 = vmatpush1.msra.mxu0 %v3168
        %3198 = vmatprep.subr.mxu0 0.0
        %3199 = vmatpush1.msra.mxu0 %v3154
        %3200 = vmatprep.subr.mxu0 0.0
        %3201 = vmatpush1.msra.mxu0 %v3152
        %3202 = vmatprep.subr.mxu0 0.0
        %3203 = vmatpush2.msra.mxu0 0.0
        %3204 = vmatprep.subr.mxu0 0.0
        %3205 = vmatpush2.msra.mxu0 0.0
        %3206 = vmatprep.subr.mxu0 0.0
        %3207 = vmatpush2.msra.mxu0 0.0
        %3208 = vmatprep.subr.mxu0 0.0
        %3209 = vmatpush2.msra.mxu0 0.0
        %3210 = vmatprep.subr.mxu0 0.0
        %3211 = vmatpush2.msra.mxu0 0.0
        %3212 = vmatprep.subr.mxu0 0.0
        %3213 = vmatpush2.msra.mxu0 0.0
        %3214 = vmatprep.subr.mxu0 0.0
        %3215 = vmatpush2.msra.mxu0 0.0
        %3216 = vmatprep.subr.mxu0 0.0
        %3217 = vmatpush2.msra.mxu0 0.0
        %3218 = vmatprep.subr.mxu0 0.0
        %3219 = vmatpush2.msra.mxu0 0.0
        %3220 = vmatprep.subr.mxu0 0.0
        %3221 = vmatpush2.msra.mxu0 0.0
        %3222 = vmatprep.subr.mxu0 0.0
        %3223 = vmatpush2.msra.mxu0 0.0
        %3224 = vmatprep.subr.mxu0 0.0
        %3225 = vmatpush2.msra.mxu0 0.0
        %3226 = vmatprep.subr.mxu0 0.0
        %3227 = vmatpush2.msra.mxu0 0.0
        %3228 = vmatprep.subr.mxu0 0.0
        %3229 = vmatpush2.msra.mxu0 0.0
        %3230 = vmatprep.subr.mxu0 0.0
        %3231 = vmatpush2.msra.mxu0 0.0
        %3232 = vmatprep.subr.mxu0 0.0
        %3233 = vmatpush2.msra.mxu0 0.0
        %3234 = vmatprep.mubr.f32.mxu0 0.0
        %3235 = vmatmul.mubr.f32.gmra.mxu0 %v3160
        %v3236 = vpop.f32.mrf.mxu0
        %v3237 = vadd.f32 0.0, %v3236
        %v3238 = vpop.f32.mrf.mxu0
        %3239 = vmatprep.mubr.f32.mxu0 0.0
        %3240 = vmatmul.mubr.f32.gmra.mxu0 %v3163
        %v3241 = vpop.f32.mrf.mxu0
        %v3242 = vadd.f32 0.0, %v3241
        %v3243 = vpop.f32.mrf.mxu0
        %3244 = vmatprep.mubr.f32.mxu0 0.0
        %3245 = vmatmul.mubr.f32.gmra.mxu0 %v3166
        %v3246 = vpop.f32.mrf.mxu0
        %v3247 = vadd.f32 0.0, %v3246
        %v3248 = vpop.f32.mrf.mxu0
        %3249 = vdwg.mxu0
        %3250 = vrot.lane.b32.xlu0 %v3011, 120
        %v3251 = vpop.permute.xlu0 %3250
        %3252 = vrot.lane.b32.xlu0 %v3012, 120
        %v3253 = vpop.permute.xlu0 %3252
        %3254 = vrot.lane.b32.xlu0 %v3013, 120
        %v3255 = vpop.permute.xlu0 %3254
        %3256 = vrot.lane.b32.xlu0 %v3008, 88
        %v3257 = vpop.permute.xlu0 %3256
        %3258 = vrot.lane.b32.xlu0 %v3009, 88
        %v3259 = vpop.permute.xlu0 %3258
        %3260 = vrot.lane.b32.xlu0 %v3010, 88
        %v3261 = vpop.permute.xlu0 %3260
        %v3262 = vsel %vm1466, %v3251, 0
        %v3264 = vsel %vm1466, %v3253, 0
        %v3266 = vsel %vm1466, %v3255, 0
        %v3268 = vsel %vm1466, %v3257, 0
        %v3270 = vsel %vm1466, %v3259, 0
        %v3272 = vsel %vm1466, %v3261, 0
        %3274 = vmatprep.subr.mxu0 0.0
        %3275 = vmatpush1.xpose.msra.mxu0 0.0
        %3276 = vmatprep.subr.mxu0 0.0
        %3277 = vmatpush1.xpose.msra.mxu0 0.0
        %3278 = vmatprep.subr.mxu0 0.0
        %3279 = vmatpush1.xpose.msra.mxu0 0.0
        %3280 = vmatprep.subr.mxu0 0.0
        %3281 = vmatpush1.xpose.msra.mxu0 0.0
        %3282 = vmatprep.subr.mxu0 0.0
        %3283 = vmatpush1.xpose.msra.mxu0 0.0
        %3284 = vmatprep.subr.mxu0 0.0
        %3285 = vmatpush1.xpose.msra.mxu0 0.0
        %3286 = vmatprep.subr.mxu0 0.0
        %3287 = vmatpush1.xpose.msra.mxu0 0.0
        %3288 = vmatprep.subr.mxu0 0.0
        %3289 = vmatpush1.xpose.msra.mxu0 0.0
        %3290 = vmatprep.subr.mxu0 0.0
        %3291 = vmatpush1.xpose.msra.mxu0 0.0
        %3292 = vmatprep.subr.mxu0 0.0
        %3293 = vmatpush1.xpose.msra.mxu0 0.0
        %3294 = vmatprep.subr.mxu0 0.0
        %3295 = vmatpush1.xpose.msra.mxu0 0.0
        %3296 = vmatprep.subr.mxu0 0.0
        %3297 = vmatpush1.xpose.msra.mxu0 0.0
        %3298 = vmatprep.subr.mxu0 0.0
        %3299 = vmatpush1.xpose.msra.mxu0 0.0
        %3300 = vmatprep.subr.mxu0 0.0
        %3301 = vmatpush1.xpose.msra.mxu0 %v3272
        %3302 = vmatprep.subr.mxu0 0.0
        %3303 = vmatpush1.xpose.msra.mxu0 %v3270
        %3304 = vmatprep.subr.mxu0 0.0
        %3305 = vmatpush1.xpose.msra.mxu0 %v3268
        %3306 = vmatprep.subr.mxu0 0.0
        %3307 = vmatpush2.xpose.msra.mxu0 0.0
        %3308 = vmatprep.subr.mxu0 0.0
        %3309 = vmatpush2.xpose.msra.mxu0 0.0
        %3310 = vmatprep.subr.mxu0 0.0
        %3311 = vmatpush2.xpose.msra.mxu0 0.0
        %3312 = vmatprep.subr.mxu0 0.0
        %3313 = vmatpush2.xpose.msra.mxu0 0.0
        %3314 = vmatprep.subr.mxu0 0.0
        %3315 = vmatpush2.xpose.msra.mxu0 0.0
        %3316 = vmatprep.subr.mxu0 0.0
        %3317 = vmatpush2.xpose.msra.mxu0 0.0
        %3318 = vmatprep.subr.mxu0 0.0
        %3319 = vmatpush2.xpose.msra.mxu0 0.0
        %3320 = vmatprep.subr.mxu0 0.0
        %3321 = vmatpush2.xpose.msra.mxu0 0.0
        %3322 = vmatprep.subr.mxu0 0.0
        %3323 = vmatpush2.xpose.msra.mxu0 0.0
        %3324 = vmatprep.subr.mxu0 0.0
        %3325 = vmatpush2.xpose.msra.mxu0 0.0
        %3326 = vmatprep.subr.mxu0 0.0
        %3327 = vmatpush2.xpose.msra.mxu0 0.0
        %3328 = vmatprep.subr.mxu0 0.0
        %3329 = vmatpush2.xpose.msra.mxu0 0.0
        %3330 = vmatprep.subr.mxu0 0.0
        %3331 = vmatpush2.xpose.msra.mxu0 0.0
        %3332 = vmatprep.subr.mxu0 0.0
        %3333 = vmatpush2.xpose.msra.mxu0 0.0
        %3334 = vmatprep.subr.mxu0 0.0
        %3335 = vmatpush2.xpose.msra.mxu0 0.0
        %3336 = vmatprep.subr.mxu0 0.0
        %3337 = vmatpush2.xpose.msra.mxu0 0.0
        %3338 = vmatprep.mubr.f32.mxu0 0.0
        %3339 = vmatmul.mubr.f32.gmra.mxu0 %v3262
        %v3340 = vpop.f32.mrf.mxu0
        %v3341 = vadd.f32 0.0, %v3340
        %v3342 = vpop.f32.mrf.mxu0
        %3343 = vmatprep.mubr.f32.mxu0 0.0
        %3344 = vmatmul.mubr.f32.gmra.mxu0 %v3264
        %v3345 = vpop.f32.mrf.mxu0
        %v3346 = vadd.f32 0.0, %v3345
        %v3347 = vpop.f32.mrf.mxu0
        %3348 = vmatprep.mubr.f32.mxu0 0.0
        %3349 = vmatmul.mubr.f32.gmra.mxu0 %v3266
        %v3350 = vpop.f32.mrf.mxu0
        %v3351 = vadd.f32 0.0, %v3350
        %v3352 = vpop.f32.mrf.mxu0
        %3353 = vdwg.mxu0
        %v3354 = vsel %vm1562, %v3341, -inf
        %3355 = vmax.xlane.f32.xlu0 %v3354
        %v3356 = vpop.xlane.xlu0 %3355
        %v3357 = vsel %vm1562, %v3346, -inf
        %3358 = vmax.xlane.f32.xlu0 %v3357
        %v3359 = vpop.xlane.xlu0 %3358
        %v3360 = vsel %vm1569, %v3351, -inf
        %3361 = vmax.xlane.f32.xlu0 %v3360
        %v3362 = vpop.xlane.xlu0 %3361
        %v3363 = vsub.f32 %v3341, %v3356
        %v3364 = vsub.f32 %v3346, %v3359
        %v3365 = vsub.f32 %v3351, %v3362
        %v3366 = vmul.f32 %v3363, 1.442695
        %v3367 = vpow.pop %v3366
        %v3368 = vmul.f32 %v3364, 1.442695
        %v3369 = vpow.pop %v3368
        %v3370 = vmul.f32 %v3365, 1.442695
        %v3371 = vpow.pop %v3370
        %v3372 = vsel %vm1562, %v3367, 0.0
        %3373 = vadd.xlane.f32.xlu0 %v3372
        %v3374 = vpop.xlane.xlu0 %3373
        %v3375 = vsel %vm1562, %v3369, 0.0
        %3376 = vadd.xlane.f32.xlu0 %v3375
        %v3377 = vpop.xlane.xlu0 %3376
        %v3378 = vsel %vm1569, %v3371, 0.0
        %3379 = vadd.xlane.f32.xlu0 %v3378
        %v3380 = vpop.xlane.xlu0 %3379
        %v3381 = vrcp.pop %v3374
        %v3382 = vrcp.pop %v3377
        %v3383 = vrcp.pop %v3380
        %v3384 = vmul.f32 %v3367, %v3381
        %v3385 = vmul.f32 %v3369, %v3382
        %v3386 = vmul.f32 %v3371, %v3383
        %3387 = vrot.lane.b32.xlu0 %v3008, 56
        %v3388 = vpop.permute.xlu0 %3387
        %3389 = vrot.lane.b32.xlu0 %v3009, 56
        %v3390 = vpop.permute.xlu0 %3389
        %3391 = vrot.lane.b32.xlu0 %v3010, 56
        %v3392 = vpop.permute.xlu0 %3391
        %v3396 = vsel %vm1562, %v3384, 0
        %v3399 = vsel %vm1562, %v3385, 0
        %v3402 = vsel %vm1562, %v3386, 0
        %v3404 = vsel %vm1192, %v3392, 0
        %3406 = vmatprep.subr.mxu0 0.0
        %3407 = vmatpush1.msra.mxu0 0.0
        %3408 = vmatprep.subr.mxu0 0.0
        %3409 = vmatpush1.msra.mxu0 0.0
        %3410 = vmatprep.subr.mxu0 0.0
        %3411 = vmatpush1.msra.mxu0 0.0
        %3412 = vmatprep.subr.mxu0 0.0
        %3413 = vmatpush1.msra.mxu0 0.0
        %3414 = vmatprep.subr.mxu0 0.0
        %3415 = vmatpush1.msra.mxu0 0.0
        %3416 = vmatprep.subr.mxu0 0.0
        %3417 = vmatpush1.msra.mxu0 0.0
        %3418 = vmatprep.subr.mxu0 0.0
        %3419 = vmatpush1.msra.mxu0 0.0
        %3420 = vmatprep.subr.mxu0 0.0
        %3421 = vmatpush1.msra.mxu0 0.0
        %3422 = vmatprep.subr.mxu0 0.0
        %3423 = vmatpush1.msra.mxu0 0.0
        %3424 = vmatprep.subr.mxu0 0.0
        %3425 = vmatpush1.msra.mxu0 0.0
        %3426 = vmatprep.subr.mxu0 0.0
        %3427 = vmatpush1.msra.mxu0 0.0
        %3428 = vmatprep.subr.mxu0 0.0
        %3429 = vmatpush1.msra.mxu0 0.0
        %3430 = vmatprep.subr.mxu0 0.0
        %3431 = vmatpush1.msra.mxu0 0.0
        %3432 = vmatprep.subr.mxu0 0.0
        %3433 = vmatpush1.msra.mxu0 %v3404
        %3434 = vmatprep.subr.mxu0 0.0
        %3435 = vmatpush1.msra.mxu0 %v3390
        %3436 = vmatprep.subr.mxu0 0.0
        %3437 = vmatpush1.msra.mxu0 %v3388
        %3438 = vmatprep.subr.mxu0 0.0
        %3439 = vmatpush2.msra.mxu0 0.0
        %3440 = vmatprep.subr.mxu0 0.0
        %3441 = vmatpush2.msra.mxu0 0.0
        %3442 = vmatprep.subr.mxu0 0.0
        %3443 = vmatpush2.msra.mxu0 0.0
        %3444 = vmatprep.subr.mxu0 0.0
        %3445 = vmatpush2.msra.mxu0 0.0
        %3446 = vmatprep.subr.mxu0 0.0
        %3447 = vmatpush2.msra.mxu0 0.0
        %3448 = vmatprep.subr.mxu0 0.0
        %3449 = vmatpush2.msra.mxu0 0.0
        %3450 = vmatprep.subr.mxu0 0.0
        %3451 = vmatpush2.msra.mxu0 0.0
        %3452 = vmatprep.subr.mxu0 0.0
        %3453 = vmatpush2.msra.mxu0 0.0
        %3454 = vmatprep.subr.mxu0 0.0
        %3455 = vmatpush2.msra.mxu0 0.0
        %3456 = vmatprep.subr.mxu0 0.0
        %3457 = vmatpush2.msra.mxu0 0.0
        %3458 = vmatprep.subr.mxu0 0.0
        %3459 = vmatpush2.msra.mxu0 0.0
        %3460 = vmatprep.subr.mxu0 0.0
        %3461 = vmatpush2.msra.mxu0 0.0
        %3462 = vmatprep.subr.mxu0 0.0
        %3463 = vmatpush2.msra.mxu0 0.0
        %3464 = vmatprep.subr.mxu0 0.0
        %3465 = vmatpush2.msra.mxu0 0.0
        %3466 = vmatprep.subr.mxu0 0.0
        %3467 = vmatpush2.msra.mxu0 0.0
        %3468 = vmatprep.subr.mxu0 0.0
        %3469 = vmatpush2.msra.mxu0 0.0
        %3470 = vmatprep.mubr.f32.mxu0 0.0
        %3471 = vmatmul.mubr.f32.gmra.mxu0 %v3396
        %v3472 = vpop.f32.mrf.mxu0
        %v3473 = vadd.f32 0.0, %v3472
        %v3474 = vpop.f32.mrf.mxu0
        %3475 = vmatprep.mubr.f32.mxu0 0.0
        %3476 = vmatmul.mubr.f32.gmra.mxu0 %v3399
        %v3477 = vpop.f32.mrf.mxu0
        %v3478 = vadd.f32 0.0, %v3477
        %v3479 = vpop.f32.mrf.mxu0
        %3480 = vmatprep.mubr.f32.mxu0 0.0
        %3481 = vmatmul.mubr.f32.gmra.mxu0 %v3402
        %v3482 = vpop.f32.mrf.mxu0
        %v3483 = vadd.f32 0.0, %v3482
        %v3484 = vpop.f32.mrf.mxu0
        %3485 = vdwg.mxu0
        %3486 = vrot.lane.b32.xlu0 %v3011, 112
        %v3487 = vpop.permute.xlu0 %3486
        %3488 = vrot.lane.b32.xlu0 %v3012, 112
        %v3489 = vpop.permute.xlu0 %3488
        %3490 = vrot.lane.b32.xlu0 %v3013, 112
        %v3491 = vpop.permute.xlu0 %3490
        %3492 = vrot.lane.b32.xlu0 %v3008, 80
        %v3493 = vpop.permute.xlu0 %3492
        %3494 = vrot.lane.b32.xlu0 %v3009, 80
        %v3495 = vpop.permute.xlu0 %3494
        %3496 = vrot.lane.b32.xlu0 %v3010, 80
        %v3497 = vpop.permute.xlu0 %3496
        %v3498 = vsel %vm1466, %v3487, 0
        %v3500 = vsel %vm1466, %v3489, 0
        %v3502 = vsel %vm1466, %v3491, 0
        %v3504 = vsel %vm1466, %v3493, 0
        %v3506 = vsel %vm1466, %v3495, 0
        %v3508 = vsel %vm1466, %v3497, 0
        %3510 = vmatprep.subr.mxu0 0.0
        %3511 = vmatpush1.xpose.msra.mxu0 0.0
        %3512 = vmatprep.subr.mxu0 0.0
        %3513 = vmatpush1.xpose.msra.mxu0 0.0
        %3514 = vmatprep.subr.mxu0 0.0
        %3515 = vmatpush1.xpose.msra.mxu0 0.0
        %3516 = vmatprep.subr.mxu0 0.0
        %3517 = vmatpush1.xpose.msra.mxu0 0.0
        %3518 = vmatprep.subr.mxu0 0.0
        %3519 = vmatpush1.xpose.msra.mxu0 0.0
        %3520 = vmatprep.subr.mxu0 0.0
        %3521 = vmatpush1.xpose.msra.mxu0 0.0
        %3522 = vmatprep.subr.mxu0 0.0
        %3523 = vmatpush1.xpose.msra.mxu0 0.0
        %3524 = vmatprep.subr.mxu0 0.0
        %3525 = vmatpush1.xpose.msra.mxu0 0.0
        %3526 = vmatprep.subr.mxu0 0.0
        %3527 = vmatpush1.xpose.msra.mxu0 0.0
        %3528 = vmatprep.subr.mxu0 0.0
        %3529 = vmatpush1.xpose.msra.mxu0 0.0
        %3530 = vmatprep.subr.mxu0 0.0
        %3531 = vmatpush1.xpose.msra.mxu0 0.0
        %3532 = vmatprep.subr.mxu0 0.0
        %3533 = vmatpush1.xpose.msra.mxu0 0.0
        %3534 = vmatprep.subr.mxu0 0.0
        %3535 = vmatpush1.xpose.msra.mxu0 0.0
        %3536 = vmatprep.subr.mxu0 0.0
        %3537 = vmatpush1.xpose.msra.mxu0 %v3508
        %3538 = vmatprep.subr.mxu0 0.0
        %3539 = vmatpush1.xpose.msra.mxu0 %v3506
        %3540 = vmatprep.subr.mxu0 0.0
        %3541 = vmatpush1.xpose.msra.mxu0 %v3504
        %3542 = vmatprep.subr.mxu0 0.0
        %3543 = vmatpush2.xpose.msra.mxu0 0.0
        %3544 = vmatprep.subr.mxu0 0.0
        %3545 = vmatpush2.xpose.msra.mxu0 0.0
        %3546 = vmatprep.subr.mxu0 0.0
        %3547 = vmatpush2.xpose.msra.mxu0 0.0
        %3548 = vmatprep.subr.mxu0 0.0
        %3549 = vmatpush2.xpose.msra.mxu0 0.0
        %3550 = vmatprep.subr.mxu0 0.0
        %3551 = vmatpush2.xpose.msra.mxu0 0.0
        %3552 = vmatprep.subr.mxu0 0.0
        %3553 = vmatpush2.xpose.msra.mxu0 0.0
        %3554 = vmatprep.subr.mxu0 0.0
        %3555 = vmatpush2.xpose.msra.mxu0 0.0
        %3556 = vmatprep.subr.mxu0 0.0
        %3557 = vmatpush2.xpose.msra.mxu0 0.0
        %3558 = vmatprep.subr.mxu0 0.0
        %3559 = vmatpush2.xpose.msra.mxu0 0.0
        %3560 = vmatprep.subr.mxu0 0.0
        %3561 = vmatpush2.xpose.msra.mxu0 0.0
        %3562 = vmatprep.subr.mxu0 0.0
        %3563 = vmatpush2.xpose.msra.mxu0 0.0
        %3564 = vmatprep.subr.mxu0 0.0
        %3565 = vmatpush2.xpose.msra.mxu0 0.0
        %3566 = vmatprep.subr.mxu0 0.0
        %3567 = vmatpush2.xpose.msra.mxu0 0.0
        %3568 = vmatprep.subr.mxu0 0.0
        %3569 = vmatpush2.xpose.msra.mxu0 0.0
        %3570 = vmatprep.subr.mxu0 0.0
        %3571 = vmatpush2.xpose.msra.mxu0 0.0
        %3572 = vmatprep.subr.mxu0 0.0
        %3573 = vmatpush2.xpose.msra.mxu0 0.0
        %3574 = vmatprep.mubr.f32.mxu0 0.0
        %3575 = vmatmul.mubr.f32.gmra.mxu0 %v3498
        %v3576 = vpop.f32.mrf.mxu0
        %v3577 = vadd.f32 0.0, %v3576
        %v3578 = vpop.f32.mrf.mxu0
        %3579 = vmatprep.mubr.f32.mxu0 0.0
        %3580 = vmatmul.mubr.f32.gmra.mxu0 %v3500
        %v3581 = vpop.f32.mrf.mxu0
        %v3582 = vadd.f32 0.0, %v3581
        %v3583 = vpop.f32.mrf.mxu0
        %3584 = vmatprep.mubr.f32.mxu0 0.0
        %3585 = vmatmul.mubr.f32.gmra.mxu0 %v3502
        %v3586 = vpop.f32.mrf.mxu0
        %v3587 = vadd.f32 0.0, %v3586
        %v3588 = vpop.f32.mrf.mxu0
        %3589 = vdwg.mxu0
        %v3590 = vsel %vm1562, %v3577, -inf
        %3591 = vmax.xlane.f32.xlu0 %v3590
        %v3592 = vpop.xlane.xlu0 %3591
        %v3593 = vsel %vm1562, %v3582, -inf
        %3594 = vmax.xlane.f32.xlu0 %v3593
        %v3595 = vpop.xlane.xlu0 %3594
        %v3596 = vsel %vm1569, %v3587, -inf
        %3597 = vmax.xlane.f32.xlu0 %v3596
        %v3598 = vpop.xlane.xlu0 %3597
        %v3599 = vsub.f32 %v3577, %v3592
        %v3600 = vsub.f32 %v3582, %v3595
        %v3601 = vsub.f32 %v3587, %v3598
        %v3602 = vmul.f32 %v3599, 1.442695
        %v3603 = vpow.pop %v3602
        %v3604 = vmul.f32 %v3600, 1.442695
        %v3605 = vpow.pop %v3604
        %v3606 = vmul.f32 %v3601, 1.442695
        %v3607 = vpow.pop %v3606
        %v3608 = vsel %vm1562, %v3603, 0.0
        %3609 = vadd.xlane.f32.xlu0 %v3608
        %v3610 = vpop.xlane.xlu0 %3609
        %v3611 = vsel %vm1562, %v3605, 0.0
        %3612 = vadd.xlane.f32.xlu0 %v3611
        %v3613 = vpop.xlane.xlu0 %3612
        %v3614 = vsel %vm1569, %v3607, 0.0
        %3615 = vadd.xlane.f32.xlu0 %v3614
        %v3616 = vpop.xlane.xlu0 %3615
        %v3617 = vrcp.pop %v3610
        %v3618 = vrcp.pop %v3613
        %v3619 = vrcp.pop %v3616
        %v3620 = vmul.f32 %v3603, %v3617
        %v3621 = vmul.f32 %v3605, %v3618
        %v3622 = vmul.f32 %v3607, %v3619
        %3623 = vrot.lane.b32.xlu0 %v3008, 48
        %v3624 = vpop.permute.xlu0 %3623
        %3625 = vrot.lane.b32.xlu0 %v3009, 48
        %v3626 = vpop.permute.xlu0 %3625
        %3627 = vrot.lane.b32.xlu0 %v3010, 48
        %v3628 = vpop.permute.xlu0 %3627
        %v3632 = vsel %vm1562, %v3620, 0
        %v3635 = vsel %vm1562, %v3621, 0
        %v3638 = vsel %vm1562, %v3622, 0
        %v3640 = vsel %vm1192, %v3628, 0
        %3642 = vmatprep.subr.mxu0 0.0
        %3643 = vmatpush1.msra.mxu0 0.0
        %3644 = vmatprep.subr.mxu0 0.0
        %3645 = vmatpush1.msra.mxu0 0.0
        %3646 = vmatprep.subr.mxu0 0.0
        %3647 = vmatpush1.msra.mxu0 0.0
        %3648 = vmatprep.subr.mxu0 0.0
        %3649 = vmatpush1.msra.mxu0 0.0
        %3650 = vmatprep.subr.mxu0 0.0
        %3651 = vmatpush1.msra.mxu0 0.0
        %3652 = vmatprep.subr.mxu0 0.0
        %3653 = vmatpush1.msra.mxu0 0.0
        %3654 = vmatprep.subr.mxu0 0.0
        %3655 = vmatpush1.msra.mxu0 0.0
        %3656 = vmatprep.subr.mxu0 0.0
        %3657 = vmatpush1.msra.mxu0 0.0
        %3658 = vmatprep.subr.mxu0 0.0
        %3659 = vmatpush1.msra.mxu0 0.0
        %3660 = vmatprep.subr.mxu0 0.0
        %3661 = vmatpush1.msra.mxu0 0.0
        %3662 = vmatprep.subr.mxu0 0.0
        %3663 = vmatpush1.msra.mxu0 0.0
        %3664 = vmatprep.subr.mxu0 0.0
        %3665 = vmatpush1.msra.mxu0 0.0
        %3666 = vmatprep.subr.mxu0 0.0
        %3667 = vmatpush1.msra.mxu0 0.0
        %3668 = vmatprep.subr.mxu0 0.0
        %3669 = vmatpush1.msra.mxu0 %v3640
        %3670 = vmatprep.subr.mxu0 0.0
        %3671 = vmatpush1.msra.mxu0 %v3626
        %3672 = vmatprep.subr.mxu0 0.0
        %3673 = vmatpush1.msra.mxu0 %v3624
        %3674 = vmatprep.subr.mxu0 0.0
        %3675 = vmatpush2.msra.mxu0 0.0
        %3676 = vmatprep.subr.mxu0 0.0
        %3677 = vmatpush2.msra.mxu0 0.0
        %3678 = vmatprep.subr.mxu0 0.0
        %3679 = vmatpush2.msra.mxu0 0.0
        %3680 = vmatprep.subr.mxu0 0.0
        %3681 = vmatpush2.msra.mxu0 0.0
        %3682 = vmatprep.subr.mxu0 0.0
        %3683 = vmatpush2.msra.mxu0 0.0
        %3684 = vmatprep.subr.mxu0 0.0
        %3685 = vmatpush2.msra.mxu0 0.0
        %3686 = vmatprep.subr.mxu0 0.0
        %3687 = vmatpush2.msra.mxu0 0.0
        %3688 = vmatprep.subr.mxu0 0.0
        %3689 = vmatpush2.msra.mxu0 0.0
        %3690 = vmatprep.subr.mxu0 0.0
        %3691 = vmatpush2.msra.mxu0 0.0
        %3692 = vmatprep.subr.mxu0 0.0
        %3693 = vmatpush2.msra.mxu0 0.0
        %3694 = vmatprep.subr.mxu0 0.0
        %3695 = vmatpush2.msra.mxu0 0.0
        %3696 = vmatprep.subr.mxu0 0.0
        %3697 = vmatpush2.msra.mxu0 0.0
        %3698 = vmatprep.subr.mxu0 0.0
        %3699 = vmatpush2.msra.mxu0 0.0
        %3700 = vmatprep.subr.mxu0 0.0
        %3701 = vmatpush2.msra.mxu0 0.0
        %3702 = vmatprep.subr.mxu0 0.0
        %3703 = vmatpush2.msra.mxu0 0.0
        %3704 = vmatprep.subr.mxu0 0.0
        %3705 = vmatpush2.msra.mxu0 0.0
        %3706 = vmatprep.mubr.f32.mxu0 0.0
        %3707 = vmatmul.mubr.f32.gmra.mxu0 %v3632
        %v3708 = vpop.f32.mrf.mxu0
        %v3709 = vadd.f32 0.0, %v3708
        %v3710 = vpop.f32.mrf.mxu0
        %3711 = vmatprep.mubr.f32.mxu0 0.0
        %3712 = vmatmul.mubr.f32.gmra.mxu0 %v3635
        %v3713 = vpop.f32.mrf.mxu0
        %v3714 = vadd.f32 0.0, %v3713
        %v3715 = vpop.f32.mrf.mxu0
        %3716 = vmatprep.mubr.f32.mxu0 0.0
        %3717 = vmatmul.mubr.f32.gmra.mxu0 %v3638
        %v3718 = vpop.f32.mrf.mxu0
        %v3719 = vadd.f32 0.0, %v3718
        %v3720 = vpop.f32.mrf.mxu0
        %3721 = vdwg.mxu0
        %3722 = vrot.lane.b32.xlu0 %v3011, 104
        %v3723 = vpop.permute.xlu0 %3722
        %3724 = vrot.lane.b32.xlu0 %v3012, 104
        %v3725 = vpop.permute.xlu0 %3724
        %3726 = vrot.lane.b32.xlu0 %v3013, 104
        %v3727 = vpop.permute.xlu0 %3726
        %3728 = vrot.lane.b32.xlu0 %v3008, 72
        %v3729 = vpop.permute.xlu0 %3728
        %3730 = vrot.lane.b32.xlu0 %v3009, 72
        %v3731 = vpop.permute.xlu0 %3730
        %3732 = vrot.lane.b32.xlu0 %v3010, 72
        %v3733 = vpop.permute.xlu0 %3732
        %v3734 = vsel %vm1466, %v3723, 0
        %v3736 = vsel %vm1466, %v3725, 0
        %v3738 = vsel %vm1466, %v3727, 0
        %v3740 = vsel %vm1466, %v3729, 0
        %v3742 = vsel %vm1466, %v3731, 0
        %v3744 = vsel %vm1466, %v3733, 0
        %3746 = vmatprep.subr.mxu0 0.0
        %3747 = vmatpush1.xpose.msra.mxu0 0.0
        %3748 = vmatprep.subr.mxu0 0.0
        %3749 = vmatpush1.xpose.msra.mxu0 0.0
        %3750 = vmatprep.subr.mxu0 0.0
        %3751 = vmatpush1.xpose.msra.mxu0 0.0
        %3752 = vmatprep.subr.mxu0 0.0
        %3753 = vmatpush1.xpose.msra.mxu0 0.0
        %3754 = vmatprep.subr.mxu0 0.0
        %3755 = vmatpush1.xpose.msra.mxu0 0.0
        %3756 = vmatprep.subr.mxu0 0.0
        %3757 = vmatpush1.xpose.msra.mxu0 0.0
        %3758 = vmatprep.subr.mxu0 0.0
        %3759 = vmatpush1.xpose.msra.mxu0 0.0
        %3760 = vmatprep.subr.mxu0 0.0
        %3761 = vmatpush1.xpose.msra.mxu0 0.0
        %3762 = vmatprep.subr.mxu0 0.0
        %3763 = vmatpush1.xpose.msra.mxu0 0.0
        %3764 = vmatprep.subr.mxu0 0.0
        %3765 = vmatpush1.xpose.msra.mxu0 0.0
        %3766 = vmatprep.subr.mxu0 0.0
        %3767 = vmatpush1.xpose.msra.mxu0 0.0
        %3768 = vmatprep.subr.mxu0 0.0
        %3769 = vmatpush1.xpose.msra.mxu0 0.0
        %3770 = vmatprep.subr.mxu0 0.0
        %3771 = vmatpush1.xpose.msra.mxu0 0.0
        %3772 = vmatprep.subr.mxu0 0.0
        %3773 = vmatpush1.xpose.msra.mxu0 %v3744
        %3774 = vmatprep.subr.mxu0 0.0
        %3775 = vmatpush1.xpose.msra.mxu0 %v3742
        %3776 = vmatprep.subr.mxu0 0.0
        %3777 = vmatpush1.xpose.msra.mxu0 %v3740
        %3778 = vmatprep.subr.mxu0 0.0
        %3779 = vmatpush2.xpose.msra.mxu0 0.0
        %3780 = vmatprep.subr.mxu0 0.0
        %3781 = vmatpush2.xpose.msra.mxu0 0.0
        %3782 = vmatprep.subr.mxu0 0.0
        %3783 = vmatpush2.xpose.msra.mxu0 0.0
        %3784 = vmatprep.subr.mxu0 0.0
        %3785 = vmatpush2.xpose.msra.mxu0 0.0
        %3786 = vmatprep.subr.mxu0 0.0
        %3787 = vmatpush2.xpose.msra.mxu0 0.0
        %3788 = vmatprep.subr.mxu0 0.0
        %3789 = vmatpush2.xpose.msra.mxu0 0.0
        %3790 = vmatprep.subr.mxu0 0.0
        %3791 = vmatpush2.xpose.msra.mxu0 0.0
        %3792 = vmatprep.subr.mxu0 0.0
        %3793 = vmatpush2.xpose.msra.mxu0 0.0
        %3794 = vmatprep.subr.mxu0 0.0
        %3795 = vmatpush2.xpose.msra.mxu0 0.0
        %3796 = vmatprep.subr.mxu0 0.0
        %3797 = vmatpush2.xpose.msra.mxu0 0.0
        %3798 = vmatprep.subr.mxu0 0.0
        %3799 = vmatpush2.xpose.msra.mxu0 0.0
        %3800 = vmatprep.subr.mxu0 0.0
        %3801 = vmatpush2.xpose.msra.mxu0 0.0
        %3802 = vmatprep.subr.mxu0 0.0
        %3803 = vmatpush2.xpose.msra.mxu0 0.0
        %3804 = vmatprep.subr.mxu0 0.0
        %3805 = vmatpush2.xpose.msra.mxu0 0.0
        %3806 = vmatprep.subr.mxu0 0.0
        %3807 = vmatpush2.xpose.msra.mxu0 0.0
        %3808 = vmatprep.subr.mxu0 0.0
        %3809 = vmatpush2.xpose.msra.mxu0 0.0
        %3810 = vmatprep.mubr.f32.mxu0 0.0
        %3811 = vmatmul.mubr.f32.gmra.mxu0 %v3734
        %v3812 = vpop.f32.mrf.mxu0
        %v3813 = vadd.f32 0.0, %v3812
        %v3814 = vpop.f32.mrf.mxu0
        %3815 = vmatprep.mubr.f32.mxu0 0.0
        %3816 = vmatmul.mubr.f32.gmra.mxu0 %v3736
        %v3817 = vpop.f32.mrf.mxu0
        %v3818 = vadd.f32 0.0, %v3817
        %v3819 = vpop.f32.mrf.mxu0
        %3820 = vmatprep.mubr.f32.mxu0 0.0
        %3821 = vmatmul.mubr.f32.gmra.mxu0 %v3738
        %v3822 = vpop.f32.mrf.mxu0
        %v3823 = vadd.f32 0.0, %v3822
        %v3824 = vpop.f32.mrf.mxu0
        %3825 = vdwg.mxu0
        %v3826 = vsel %vm1562, %v3813, -inf
        %3827 = vmax.xlane.f32.xlu0 %v3826
        %v3828 = vpop.xlane.xlu0 %3827
        %v3829 = vsel %vm1562, %v3818, -inf
        %3830 = vmax.xlane.f32.xlu0 %v3829
        %v3831 = vpop.xlane.xlu0 %3830
        %v3832 = vsel %vm1569, %v3823, -inf
        %3833 = vmax.xlane.f32.xlu0 %v3832
        %v3834 = vpop.xlane.xlu0 %3833
        %v3835 = vsub.f32 %v3813, %v3828
        %v3836 = vsub.f32 %v3818, %v3831
        %v3837 = vsub.f32 %v3823, %v3834
        %v3838 = vmul.f32 %v3835, 1.442695
        %v3839 = vpow.pop %v3838
        %v3840 = vmul.f32 %v3836, 1.442695
        %v3841 = vpow.pop %v3840
        %v3842 = vmul.f32 %v3837, 1.442695
        %v3843 = vpow.pop %v3842
        %v3844 = vsel %vm1562, %v3839, 0.0
        %3845 = vadd.xlane.f32.xlu0 %v3844
        %v3846 = vpop.xlane.xlu0 %3845
        %v3847 = vsel %vm1562, %v3841, 0.0
        %3848 = vadd.xlane.f32.xlu0 %v3847
        %v3849 = vpop.xlane.xlu0 %3848
        %v3850 = vsel %vm1569, %v3843, 0.0
        %3851 = vadd.xlane.f32.xlu0 %v3850
        %v3852 = vpop.xlane.xlu0 %3851
        %v3853 = vrcp.pop %v3846
        %v3854 = vrcp.pop %v3849
        %v3855 = vrcp.pop %v3852
        %v3856 = vmul.f32 %v3839, %v3853
        %v3857 = vmul.f32 %v3841, %v3854
        %v3858 = vmul.f32 %v3843, %v3855
        %3859 = vrot.lane.b32.xlu0 %v3008, 40
        %v3860 = vpop.permute.xlu0 %3859
        %3861 = vrot.lane.b32.xlu0 %v3009, 40
        %v3862 = vpop.permute.xlu0 %3861
        %3863 = vrot.lane.b32.xlu0 %v3010, 40
        %v3864 = vpop.permute.xlu0 %3863
        %v3868 = vsel %vm1562, %v3856, 0
        %v3871 = vsel %vm1562, %v3857, 0
        %v3874 = vsel %vm1562, %v3858, 0
        %v3876 = vsel %vm1192, %v3864, 0
        %3878 = vmatprep.subr.mxu0 0.0
        %3879 = vmatpush1.msra.mxu0 0.0
        %3880 = vmatprep.subr.mxu0 0.0
        %3881 = vmatpush1.msra.mxu0 0.0
        %3882 = vmatprep.subr.mxu0 0.0
        %3883 = vmatpush1.msra.mxu0 0.0
        %3884 = vmatprep.subr.mxu0 0.0
        %3885 = vmatpush1.msra.mxu0 0.0
        %3886 = vmatprep.subr.mxu0 0.0
        %3887 = vmatpush1.msra.mxu0 0.0
        %3888 = vmatprep.subr.mxu0 0.0
        %3889 = vmatpush1.msra.mxu0 0.0
        %3890 = vmatprep.subr.mxu0 0.0
        %3891 = vmatpush1.msra.mxu0 0.0
        %3892 = vmatprep.subr.mxu0 0.0
        %3893 = vmatpush1.msra.mxu0 0.0
        %3894 = vmatprep.subr.mxu0 0.0
        %3895 = vmatpush1.msra.mxu0 0.0
        %3896 = vmatprep.subr.mxu0 0.0
        %3897 = vmatpush1.msra.mxu0 0.0
        %3898 = vmatprep.subr.mxu0 0.0
        %3899 = vmatpush1.msra.mxu0 0.0
        %3900 = vmatprep.subr.mxu0 0.0
        %3901 = vmatpush1.msra.mxu0 0.0
        %3902 = vmatprep.subr.mxu0 0.0
        %3903 = vmatpush1.msra.mxu0 0.0
        %3904 = vmatprep.subr.mxu0 0.0
        %3905 = vmatpush1.msra.mxu0 %v3876
        %3906 = vmatprep.subr.mxu0 0.0
        %3907 = vmatpush1.msra.mxu0 %v3862
        %3908 = vmatprep.subr.mxu0 0.0
        %3909 = vmatpush1.msra.mxu0 %v3860
        %3910 = vmatprep.subr.mxu0 0.0
        %3911 = vmatpush2.msra.mxu0 0.0
        %3912 = vmatprep.subr.mxu0 0.0
        %3913 = vmatpush2.msra.mxu0 0.0
        %3914 = vmatprep.subr.mxu0 0.0
        %3915 = vmatpush2.msra.mxu0 0.0
        %3916 = vmatprep.subr.mxu0 0.0
        %3917 = vmatpush2.msra.mxu0 0.0
        %3918 = vmatprep.subr.mxu0 0.0
        %3919 = vmatpush2.msra.mxu0 0.0
        %3920 = vmatprep.subr.mxu0 0.0
        %3921 = vmatpush2.msra.mxu0 0.0
        %3922 = vmatprep.subr.mxu0 0.0
        %3923 = vmatpush2.msra.mxu0 0.0
        %3924 = vmatprep.subr.mxu0 0.0
        %3925 = vmatpush2.msra.mxu0 0.0
        %3926 = vmatprep.subr.mxu0 0.0
        %3927 = vmatpush2.msra.mxu0 0.0
        %3928 = vmatprep.subr.mxu0 0.0
        %3929 = vmatpush2.msra.mxu0 0.0
        %3930 = vmatprep.subr.mxu0 0.0
        %3931 = vmatpush2.msra.mxu0 0.0
        %3932 = vmatprep.subr.mxu0 0.0
        %3933 = vmatpush2.msra.mxu0 0.0
        %3934 = vmatprep.subr.mxu0 0.0
        %3935 = vmatpush2.msra.mxu0 0.0
        %3936 = vmatprep.subr.mxu0 0.0
        %3937 = vmatpush2.msra.mxu0 0.0
        %3938 = vmatprep.subr.mxu0 0.0
        %3939 = vmatpush2.msra.mxu0 0.0
        %3940 = vmatprep.subr.mxu0 0.0
        %3941 = vmatpush2.msra.mxu0 0.0
        %3942 = vmatprep.mubr.f32.mxu0 0.0
        %3943 = vmatmul.mubr.f32.gmra.mxu0 %v3868
        %v3944 = vpop.f32.mrf.mxu0
        %v3945 = vadd.f32 0.0, %v3944
        %v3946 = vpop.f32.mrf.mxu0
        %3947 = vmatprep.mubr.f32.mxu0 0.0
        %3948 = vmatmul.mubr.f32.gmra.mxu0 %v3871
        %v3949 = vpop.f32.mrf.mxu0
        %v3950 = vadd.f32 0.0, %v3949
        %v3951 = vpop.f32.mrf.mxu0
        %3952 = vmatprep.mubr.f32.mxu0 0.0
        %3953 = vmatmul.mubr.f32.gmra.mxu0 %v3874
        %v3954 = vpop.f32.mrf.mxu0
        %v3955 = vadd.f32 0.0, %v3954
        %v3956 = vpop.f32.mrf.mxu0
        %3957 = vdwg.mxu0
        %3961 = vrot.lane.b32.xlu0 %v3473, 8
        %v3962 = vpop.permute.xlu0 %3961
        %3963 = vrot.lane.b32.xlu0 %v3478, 8
        %v3964 = vpop.permute.xlu0 %3963
        %3965 = vrot.lane.b32.xlu0 %v3483, 8
        %v3966 = vpop.permute.xlu0 %3965
        %3973 = vrot.lane.b32.xlu0 %v3709, 16
        %v3974 = vpop.permute.xlu0 %3973
        %3975 = vrot.lane.b32.xlu0 %v3714, 16
        %v3976 = vpop.permute.xlu0 %3975
        %3977 = vrot.lane.b32.xlu0 %v3719, 16
        %v3978 = vpop.permute.xlu0 %3977
        %3985 = vrot.lane.b32.xlu0 %v3945, 24
        %v3986 = vpop.permute.xlu0 %3985
        %3987 = vrot.lane.b32.xlu0 %v3950, 24
        %v3988 = vpop.permute.xlu0 %3987
        %3989 = vrot.lane.b32.xlu0 %v3955, 24
        %v3990 = vpop.permute.xlu0 %3989
        %v3994 = vsel %vm1466, %v3237, %v3962
        %v3995 = vsel %vm1466, %v3242, %v3964
        %v3996 = vsel %vm1466, %v3247, %v3966
        %v3997 = vsel %vm1396, %v3994, %v3974
        %v3998 = vsel %vm1396, %v3995, %v3976
        %v3999 = vsel %vm1396, %v3996, %v3978
        %v4000 = vsel %vm2446, %v3997, %v3986
        %v4001 = vsel %vm2446, %v3998, %v3988
        %v4002 = vsel %vm2446, %v3999, %v3990
        %v4003 = vld [vmem:[%s51] sm:$0xff]
        %v4004 = vld [vmem:[%s51 + $0x8] sm:$0xff]
        %v4005 = vld [vmem:[%s51 + $0x10] sm:$0xff]
        %v4006 = vld [vmem:[%s51 + $0x18] sm:$0xff]
        %v4007 = vpack.c.bf16 %v4001, %v4000
        %v4008 = vpack.c.bf16 %v4002, %v4002
        %v4009 = vpack.c.bf16 %v4004, %v4003
        %v4010 = vpack.c.bf16 %v4006, %v4005
        %v4012 = vsel %vm1206, %v4007, 0
        %v4015 = vsel %vm1206, %v4008, 0
        %4017 = vmatprep.subr.bf16.mxu0 0
        %4018 = vmatpush1.bf16.msra.mxu0 0
        %4019 = vmatprep.subr.bf16.mxu0 0
        %4020 = vmatpush1.bf16.msra.mxu0 0
        %4021 = vmatprep.subr.bf16.mxu0 0
        %4022 = vmatpush1.bf16.msra.mxu0 0
        %4023 = vmatprep.subr.bf16.mxu0 0
        %4024 = vmatpush1.bf16.msra.mxu0 0
        %4025 = vmatprep.subr.bf16.mxu0 0
        %4026 = vmatpush1.bf16.msra.mxu0 0
        %4027 = vmatprep.subr.bf16.mxu0 0
        %4028 = vmatpush1.bf16.msra.mxu0 0
        %4029 = vmatprep.subr.bf16.mxu0 0
        %4030 = vmatpush1.bf16.msra.mxu0 %v4010
        %4031 = vmatprep.subr.bf16.mxu0 0
        %4032 = vmatpush1.bf16.msra.mxu0 %v4009
        %4033 = vmatprep.subr.bf16.mxu0 0
        %4034 = vmatpush2.bf16.msra.mxu0 0
        %4035 = vmatprep.subr.bf16.mxu0 0
        %4036 = vmatpush2.bf16.msra.mxu0 0
        %4037 = vmatprep.subr.bf16.mxu0 0
        %4038 = vmatpush2.bf16.msra.mxu0 0
        %4039 = vmatprep.subr.bf16.mxu0 0
        %4040 = vmatpush2.bf16.msra.mxu0 0
        %4041 = vmatprep.subr.bf16.mxu0 0
        %4042 = vmatpush2.bf16.msra.mxu0 0
        %4043 = vmatprep.subr.bf16.mxu0 0
        %4044 = vmatpush2.bf16.msra.mxu0 0
        %4045 = vmatprep.subr.bf16.mxu0 0
        %4046 = vmatpush2.bf16.msra.mxu0 0
        %4047 = vmatprep.subr.bf16.mxu0 0
        %4048 = vmatpush2.bf16.msra.mxu0 0
        %4049 = vmatprep.mubr.bf16.mxu0 0
        %4050 = vmatmul.mubr.bf16.gmra.mxu0 %v4012
        %v4051 = vpop.f32.mrf.mxu0
        %v4052 = vadd.f32 0.0, %v4051
        %v4053 = vpop.f32.mrf.mxu0
        %v4054 = vpop.f32.mrf.mxu0
        %v4055 = vadd.f32 0.0, %v4054
        %v4056 = vpop.f32.mrf.mxu0
        %4057 = vmatprep.mubr.bf16.mxu0 0
        %4058 = vmatmul.mubr.bf16.gmra.mxu0 %v4015
        %v4059 = vpop.f32.mrf.mxu0
        %v4060 = vadd.f32 0.0, %v4059
        %v4061 = vpop.f32.mrf.mxu0
        %v4062 = vpop.f32.mrf.mxu0
        %v4063 = vpop.f32.mrf.mxu0
        %4064 = vdwg.mxu0
        %v4065 = vadd.f32 %v2764, %v4052
        %v4066 = vadd.f32 %v2765, %v4055
        %v4067 = vadd.f32 %v2766, %v4060
        %v4068 = vld [vmem:[%s53] sm:$0x1]
        %v4070 = vlaneseq
        %v4071 = vshrl.u32 %v4070, 7
        %v4072 = vsub.s32 0, %v4071
        %v4073 = vrot.slane %v4068, %v4072
        %v4075 = vadd.f32 %v4065, %v4073
        %v4076 = vadd.f32 %v4066, %v4073
        %v4077 = vadd.f32 %v4067, %v4073
        %v4078 = vsel %vm1206, %v4075, 0.0
        %4079 = vadd.xlane.f32.xlu0 %v4078
        %v4080 = vpop.xlane.xlu0 %4079
        %v4081 = vsel %vm1206, %v4076, 0.0
        %4082 = vadd.xlane.f32.xlu0 %v4081
        %v4083 = vpop.xlane.xlu0 %4082
        %v4084 = vsel %vm1213, %v4077, 0.0
        %4085 = vadd.xlane.f32.xlu0 %v4084
        %v4086 = vpop.xlane.xlu0 %4085
        %v4087 = vmul.f32 %v4080, %v1217
        %v4088 = vmul.f32 %v4083, %v1217
        %v4089 = vmul.f32 %v4086, %v1217
        %v4090 = vsub.f32 %v4075, %v4087
        %v4091 = vsub.f32 %v4076, %v4088
        %v4092 = vsub.f32 %v4077, %v4089
        %v4093 = vmul.f32 %v4090, %v4090
        %v4094 = vmul.f32 %v4091, %v4091
        %v4095 = vmul.f32 %v4092, %v4092
        %v4096 = vsel %vm1206, %v4093, 0.0
        %4097 = vadd.xlane.f32.xlu0 %v4096
        %v4098 = vpop.xlane.xlu0 %4097
        %v4099 = vsel %vm1206, %v4094, 0.0
        %4100 = vadd.xlane.f32.xlu0 %v4099
        %v4101 = vpop.xlane.xlu0 %4100
        %v4102 = vsel %vm1213, %v4095, 0.0
        %4103 = vadd.xlane.f32.xlu0 %v4102
        %v4104 = vpop.xlane.xlu0 %4103
        %v4105 = vmul.f32 %v4098, %v1217
        %v4106 = vmul.f32 %v4101, %v1217
        %v4107 = vmul.f32 %v4104, %v1217
        %v4108 = vadd.f32 %v4105, 1e-06
        %v4109 = vadd.f32 %v4106, 1e-06
        %v4110 = vadd.f32 %v4107, 1e-06
        %v4111 = vrsqrt.pop %v4108
        %v4112 = vrsqrt.pop %v4109
        %v4113 = vrsqrt.pop %v4110
        %v4114 = vmul.f32 %v4090, %v4111
        %v4115 = vmul.f32 %v4091, %v4112
        %v4116 = vmul.f32 %v4092, %v4113
        %v4117 = vld [vmem:[%s55] sm:$0x1]
        %v4119 = vlaneseq
        %v4120 = vshrl.u32 %v4119, 7
        %v4121 = vsub.s32 0, %v4120
        %v4122 = vrot.slane %v4117, %v4121
        %v4124 = vmul.f32 %v4114, %v4122
        %v4125 = vmul.f32 %v4115, %v4122
        %v4126 = vmul.f32 %v4116, %v4122
        %v4127 = vld [vmem:[%s57] sm:$0x1]
        %v4129 = vlaneseq
        %v4130 = vshrl.u32 %v4129, 7
        %v4131 = vsub.s32 0, %v4130
        %v4132 = vrot.slane %v4127, %v4131
        %v4134 = vadd.f32 %v4124, %v4132
        %v4135 = vadd.f32 %v4125, %v4132
        %v4136 = vadd.f32 %v4126, %v4132
        %v4137 = vld [vmem:[%s59] sm:$0xff]
        %v4138 = vld [vmem:[%s59 + $0x8] sm:$0xff]
        %v4139 = vld [vmem:[%s59 + $0x10] sm:$0xff]
        %v4140 = vld [vmem:[%s59 + $0x18] sm:$0xff]
        %v4141 = vpack.c.bf16 %v4135, %v4134
        %v4142 = vpack.c.bf16 %v4136, %v4136
        %v4143 = vpack.c.bf16 %v4138, %v4137
        %v4144 = vpack.c.bf16 %v4140, %v4139
        %v4145 = vld [vmem:[%s61] sm:$0x1]
        %v4147 = vlaneseq
        %v4148 = vshrl.u32 %v4147, 7
        %v4149 = vsub.s32 0, %v4148
        %v4150 = vrot.slane %v4145, %v4149
        %v4153 = vsel %vm1206, %v4141, 0
        %v4156 = vsel %vm1206, %v4142, 0
        %4158 = vmatprep.subr.bf16.mxu0 0
        %4159 = vmatpush1.bf16.msra.mxu0 0
        %4160 = vmatprep.subr.bf16.mxu0 0
        %4161 = vmatpush1.bf16.msra.mxu0 0
        %4162 = vmatprep.subr.bf16.mxu0 0
        %4163 = vmatpush1.bf16.msra.mxu0 0
        %4164 = vmatprep.subr.bf16.mxu0 0
        %4165 = vmatpush1.bf16.msra.mxu0 0
        %4166 = vmatprep.subr.bf16.mxu0 0
        %4167 = vmatpush1.bf16.msra.mxu0 0
        %4168 = vmatprep.subr.bf16.mxu0 0
        %4169 = vmatpush1.bf16.msra.mxu0 0
        %4170 = vmatprep.subr.bf16.mxu0 0
        %4171 = vmatpush1.bf16.msra.mxu0 %v4144
        %4172 = vmatprep.subr.bf16.mxu0 0
        %4173 = vmatpush1.bf16.msra.mxu0 %v4143
        %4174 = vmatprep.subr.bf16.mxu0 0
        %4175 = vmatpush2.bf16.msra.mxu0 0
        %4176 = vmatprep.subr.bf16.mxu0 0
        %4177 = vmatpush2.bf16.msra.mxu0 0
        %4178 = vmatprep.subr.bf16.mxu0 0
        %4179 = vmatpush2.bf16.msra.mxu0 0
        %4180 = vmatprep.subr.bf16.mxu0 0
        %4181 = vmatpush2.bf16.msra.mxu0 0
        %4182 = vmatprep.subr.bf16.mxu0 0
        %4183 = vmatpush2.bf16.msra.mxu0 0
        %4184 = vmatprep.subr.bf16.mxu0 0
        %4185 = vmatpush2.bf16.msra.mxu0 0
        %4186 = vmatprep.subr.bf16.mxu0 0
        %4187 = vmatpush2.bf16.msra.mxu0 0
        %4188 = vmatprep.subr.bf16.mxu0 0
        %4189 = vmatpush2.bf16.msra.mxu0 0
        %4190 = vmatprep.mubr.bf16.mxu0 0
        %4191 = vmatmul.mubr.bf16.gmra.mxu0 %v4153
        %v4192 = vpop.f32.mrf.mxu0
        %v4193 = vadd.f32 %v4150, %v4192
        %v4194 = vpop.f32.mrf.mxu0
        %v4195 = vpop.f32.mrf.mxu0
        %v4196 = vadd.f32 %v4150, %v4195
        %v4197 = vpop.f32.mrf.mxu0
        %4198 = vmatprep.mubr.bf16.mxu0 0
        %4199 = vmatmul.mubr.bf16.gmra.mxu0 %v4156
        %v4200 = vpop.f32.mrf.mxu0
        %v4201 = vadd.f32 %v4150, %v4200
        %v4202 = vpop.f32.mrf.mxu0
        %v4203 = vpop.f32.mrf.mxu0
        %v4204 = vpop.f32.mrf.mxu0
        %4205 = vdwg.mxu0
        %v4206 = vmul.f32 %v4193, %v4193
        %v4207 = vmul.f32 %v4196, %v4196
        %v4208 = vmul.f32 %v4201, %v4201
        %v4209 = vmul.f32 %v4193, %v4206
        %v4210 = vmul.f32 %v4196, %v4207
        %v4211 = vmul.f32 %v4201, %v4208
        %v4212 = vmul.f32 %v4209, 0.044715
        %v4213 = vmul.f32 %v4210, 0.044715
        %v4214 = vmul.f32 %v4211, 0.044715
        %v4215 = vadd.f32 %v4193, %v4212
        %v4216 = vadd.f32 %v4196, %v4213
        %v4217 = vadd.f32 %v4201, %v4214
        %v4218 = vmul.f32 %v4215, 0.7978846
        %v4219 = vmul.f32 %v4216, 0.7978846
        %v4220 = vmul.f32 %v4217, 0.7978846
        %v4221 = vtanh.pop %v4218
        %v4222 = vtanh.pop %v4219
        %v4223 = vtanh.pop %v4220
        %v4224 = vadd.f32 %v4221, 1.0
        %v4225 = vadd.f32 %v4222, 1.0
        %v4226 = vadd.f32 %v4223, 1.0
        %v4227 = vmul.f32 %v4224, 0.5
        %v4228 = vmul.f32 %v4225, 0.5
        %v4229 = vmul.f32 %v4226, 0.5
        %v4230 = vmul.f32 %v4193, %v4227
        %v4231 = vmul.f32 %v4196, %v4228
        %v4232 = vmul.f32 %v4201, %v4229
        %v4233 = vld [vmem:[%s63] sm:$0xff]
        %v4234 = vld [vmem:[%s63 + $0x8] sm:$0xff]
        %v4235 = vld [vmem:[%s63 + $0x10] sm:$0xff]
        %v4236 = vld [vmem:[%s63 + $0x18] sm:$0xff]
        %v4237 = vld [vmem:[%s63 + $0x20] sm:$0xff]
        %v4238 = vld [vmem:[%s63 + $0x28] sm:$0xff]
        %v4239 = vld [vmem:[%s63 + $0x30] sm:$0xff]
        %v4240 = vld [vmem:[%s63 + $0x38] sm:$0xff]
        %v4241 = vld [vmem:[%s63 + $0x40] sm:$0xff]
        %v4242 = vld [vmem:[%s63 + $0x48] sm:$0xff]
        %v4243 = vld [vmem:[%s63 + $0x50] sm:$0xff]
        %v4244 = vld [vmem:[%s63 + $0x58] sm:$0xff]
        %v4245 = vld [vmem:[%s63 + $0x60] sm:$0xff]
        %v4246 = vld [vmem:[%s63 + $0x68] sm:$0xff]
        %v4247 = vld [vmem:[%s63 + $0x70] sm:$0xff]
        %v4248 = vld [vmem:[%s63 + $0x78] sm:$0xff]
        %v4249 = vpack.c.bf16 %v4231, %v4230
        %v4250 = vpack.c.bf16 %v4232, %v4232
        %v4251 = vpack.c.bf16 %v4234, %v4233
        %v4252 = vpack.c.bf16 %v4236, %v4235
        %v4253 = vpack.c.bf16 %v4238, %v4237
        %v4254 = vpack.c.bf16 %v4240, %v4239
        %v4255 = vpack.c.bf16 %v4242, %v4241
        %v4256 = vpack.c.bf16 %v4244, %v4243
        %v4257 = vpack.c.bf16 %v4246, %v4245
        %v4258 = vpack.c.bf16 %v4248, %v4247
        %4259 = vmatprep.subr.bf16.mxu0 0
        %4260 = vmatpush1.bf16.msra.mxu0 %v4258
        %4261 = vmatprep.subr.bf16.mxu0 0
        %4262 = vmatpush1.bf16.msra.mxu0 %v4257
        %4263 = vmatprep.subr.bf16.mxu0 0
        %4264 = vmatpush1.bf16.msra.mxu0 %v4256
        %4265 = vmatprep.subr.bf16.mxu0 0
        %4266 = vmatpush1.bf16.msra.mxu0 %v4255
        %4267 = vmatprep.subr.bf16.mxu0 0
        %4268 = vmatpush1.bf16.msra.mxu0 %v4254
        %4269 = vmatprep.subr.bf16.mxu0 0
        %4270 = vmatpush1.bf16.msra.mxu0 %v4253
        %4271 = vmatprep.subr.bf16.mxu0 0
        %4272 = vmatpush1.bf16.msra.mxu0 %v4252
        %4273 = vmatprep.subr.bf16.mxu0 0
        %4274 = vmatpush1.bf16.msra.mxu0 %v4251
        %4275 = vmatprep.subr.bf16.mxu0 0
        %4276 = vmatpush2.bf16.msra.mxu0 0
        %4277 = vmatprep.subr.bf16.mxu0 0
        %4278 = vmatpush2.bf16.msra.mxu0 0
        %4279 = vmatprep.subr.bf16.mxu0 0
        %4280 = vmatpush2.bf16.msra.mxu0 0
        %4281 = vmatprep.subr.bf16.mxu0 0
        %4282 = vmatpush2.bf16.msra.mxu0 0
        %4283 = vmatprep.subr.bf16.mxu0 0
        %4284 = vmatpush2.bf16.msra.mxu0 0
        %4285 = vmatprep.subr.bf16.mxu0 0
        %4286 = vmatpush2.bf16.msra.mxu0 0
        %4287 = vmatprep.subr.bf16.mxu0 0
        %4288 = vmatpush2.bf16.msra.mxu0 0
        %4289 = vmatprep.subr.bf16.mxu0 0
        %4290 = vmatpush2.bf16.msra.mxu0 0
        %4291 = vmatprep.mubr.bf16.mxu0 0
        %4292 = vmatmul.mubr.bf16.gmra.mxu0 %v4249
        %v4293 = vpop.f32.mrf.mxu0
        %v4294 = vadd.f32 0.0, %v4293
        %v4295 = vpop.f32.mrf.mxu0
        %v4296 = vpop.f32.mrf.mxu0
        %v4297 = vpop.f32.mrf.mxu0
        %4298 = vmatprep.mubr.bf16.mxu0 0
        %4299 = vmatmul.mubr.bf16.gmra.mxu0 %v4250
        %v4300 = vpop.f32.mrf.mxu0
        %v4301 = vpop.f32.mrf.mxu0
        %v4302 = vpop.f32.mrf.mxu0
        %v4303 = vpop.f32.mrf.mxu0
        %4304 = vdwg.mxu0
        %v4305 = vadd.f32 %v4075, %v4294
        %v4306 = vld [vmem:[%s65] sm:$0x1]
        %v4308 = vlaneseq
        %v4309 = vshrl.u32 %v4308, 7
        %v4310 = vsub.s32 0, %v4309
        %v4311 = vrot.slane %v4306, %v4310
        %v4313 = vadd.f32 %v4305, %v4311
        %v4314 = vsel %vm1206, %v4313, 0.0
        %4315 = vadd.xlane.f32.xlu0 %v4314
        %v4316 = vpop.xlane.xlu0 %4315
        %v4317 = vmul.f32 %v4316, %v1217
        %v4318 = vsub.f32 %v4313, %v4317
        %v4319 = vmul.f32 %v4318, %v4318
        %v4320 = vsel %vm1206, %v4319, 0.0
        %4321 = vadd.xlane.f32.xlu0 %v4320
        %v4322 = vpop.xlane.xlu0 %4321
        %v4323 = vmul.f32 %v4322, %v1217
        %v4324 = vadd.f32 %v4323, 1e-06
        %v4325 = vrsqrt.pop %v4324
        %v4326 = vmul.f32 %v4318, %v4325
        %v4327 = vld [vmem:[%s67] sm:$0x1]
        %v4329 = vlaneseq
        %v4330 = vshrl.u32 %v4329, 7
        %v4331 = vsub.s32 0, %v4330
        %v4332 = vrot.slane %v4327, %v4331
        %v4334 = vmul.f32 %v4326, %v4332
        %v4335 = vld [vmem:[%s69] sm:$0x1]
        %v4337 = vlaneseq
        %v4338 = vshrl.u32 %v4337, 7
        %v4339 = vsub.s32 0, %v4338
        %v4340 = vrot.slane %v4335, %v4339
        %v4342 = vadd.f32 %v4334, %v4340
        %v4343 = vld [vmem:[%s71] sm:$0xff]
        %v4344 = vld [vmem:[%s71 + $0x8] sm:$0xff]
        %v4345 = vld [vmem:[%s71 + $0x10] sm:$0xff]
        %v4346 = vld [vmem:[%s71 + $0x18] sm:$0xff]
        %v4347 = vpack.c.bf16 %v4342, %v4342
        %v4348 = vpack.c.bf16 %v4344, %v4343
        %v4349 = vpack.c.bf16 %v4346, %v4345
        %v4350 = vld [vmem:[%s73] sm:$0x1]
        %v4352 = vsel %vm1206, %v4347, 0
        %4354 = vmatprep.subr.bf16.mxu0 0
        %4355 = vmatpush1.bf16.msra.mxu0 0
        %4356 = vmatprep.subr.bf16.mxu0 0
        %4357 = vmatpush1.bf16.msra.mxu0 0
        %4358 = vmatprep.subr.bf16.mxu0 0
        %4359 = vmatpush1.bf16.msra.mxu0 0
        %4360 = vmatprep.subr.bf16.mxu0 0
        %4361 = vmatpush1.bf16.msra.mxu0 0
        %4362 = vmatprep.subr.bf16.mxu0 0
        %4363 = vmatpush1.bf16.msra.mxu0 0
        %4364 = vmatprep.subr.bf16.mxu0 0
        %4365 = vmatpush1.bf16.msra.mxu0 0
        %4366 = vmatprep.subr.bf16.mxu0 0
        %4367 = vmatpush1.bf16.msra.mxu0 %v4349
        %4368 = vmatprep.subr.bf16.mxu0 0
        %4369 = vmatpush1.bf16.msra.mxu0 %v4348
        %4370 = vmatprep.subr.bf16.mxu0 0
        %4371 = vmatpush2.bf16.msra.mxu0 0
        %4372 = vmatprep.subr.bf16.mxu0 0
        %4373 = vmatpush2.bf16.msra.mxu0 0
        %4374 = vmatprep.subr.bf16.mxu0 0
        %4375 = vmatpush2.bf16.msra.mxu0 0
        %4376 = vmatprep.subr.bf16.mxu0 0
        %4377 = vmatpush2.bf16.msra.mxu0 0
        %4378 = vmatprep.subr.bf16.mxu0 0
        %4379 = vmatpush2.bf16.msra.mxu0 0
        %4380 = vmatprep.subr.bf16.mxu0 0
        %4381 = vmatpush2.bf16.msra.mxu0 0
        %4382 = vmatprep.subr.bf16.mxu0 0
        %4383 = vmatpush2.bf16.msra.mxu0 0
        %4384 = vmatprep.subr.bf16.mxu0 0
        %4385 = vmatpush2.bf16.msra.mxu0 0
        %4386 = vmatprep.mubr.bf16.mxu0 0
        %4387 = vmatmul.mubr.bf16.gmra.mxu0 %v4352
        %v4388 = vpop.f32.mrf.mxu0
        %v4389 = vadd.f32 %v4350, %v4388
        %v4390 = vpop.f32.mrf.mxu0
        %v4391 = vpop.f32.mrf.mxu0
        %v4392 = vpop.f32.mrf.mxu0
        %4393 = vdwg.mxu0
        %4394 = vst [vmem:[%s1118] sm:$0x1] %v4389
        %s4395 = sand.u32 %s879, 1
        %s4396 = scalar_lea.sflag [#allocation3], %s4395
        %s4397 = sand.u32 %s879, 1
        %s4398 = scalar_lea.vmem [#allocation2], %s4397
        // Predicated region
        $region169: #{lora_vit_timm_forward.1} parent=167 // pred_check
          %p4399 = pneg %p889
        $region170: #{lora_vit_timm_forward.1} parent=167 // pred_check_branch
          %4401 = sbr.rel (%p4399) target = $region172
        $region171: #{lora_vit_timm_forward.1} parent=167 // pred_region
          %s4403 = ssub.s32 16, 16
          %4404 = vsyncadd %s4396, %s4403
          %s4405 = smul.addr %s89, 16
          %s4406 = scalar_lea.hbm %s75, %s4405
          %s4408 = sshll.u32 %s4398, 4
          %s4409 = int_to_ptr.vmem [resolvable:$true] %s4408
          %4411 = dma.vmem_to_hbm [thread:$0]  %s4409, 16, %s4406, %s4396
        $region172: #{lora_vit_timm_forward.1} parent=167 // pred_fallthru
          _
      $region168: #{lora_vit_timm_forward.1} parent=5 // pred_fallthru
        _
      %p4412 = scmp.le.s32.totalorder 2, %s84
      // Predicated region
      $region173: #{lora_vit_timm_forward.1} parent=5 // pred_check
        %p4413 = pneg %p4412
      $region174: #{lora_vit_timm_forward.1} parent=5 // pred_check_branch
        %4415 = sbr.rel (%p4413) target = $region176
      $region175: #{lora_vit_timm_forward.1} parent=5 // pred_region
        %s4416 = ssub.s32 %s84, 2
        // Predicated region
        $region177: #{lora_vit_timm_forward.1} parent=175 // pred_check
          %p4417 = pneg %p895
        $region178: #{lora_vit_timm_forward.1} parent=175 // pred_check_branch
          %4419 = sbr.rel (%p4417) target = $region180
        $region179: #{lora_vit_timm_forward.1} parent=175 // pred_region
          %s4420 = sand.u32 %s880, 1
          %s4421 = scalar_lea.sflag [#allocation3], %s4420
          %s4422 = sand.u32 %s880, 1
          %s4423 = scalar_lea.vmem [#allocation2], %s4422
          %4424 = dma.done %s4421, 16
        $region180: #{lora_vit_timm_forward.1} parent=175 // pred_fallthru
          _
      $region176: #{lora_vit_timm_forward.1} parent=5 // pred_fallthru
        _
    $region6: #{lora_vit_timm_forward.1} parent=1 // loop_footer
      %s88 = sadd.s32 1, %s84
    $region7: #{lora_vit_timm_forward.1} parent=1 // loop_footer_branch
      %83 = sbr.rel target = $region3
    $region8: #{lora_vit_timm_forward.1} parent=1 // loop_exit
      _
    %4425 = vsyncpa [#allocation3], 1
    %s4426 = scalar_lea.sflag [#allocation3], 1
    %4427 = vsyncpa %s4426, 1

</llo_original>
